<compile_context>
chip_gen: v7x
topology: tpu7x:2x2x1
jax: 0.10.0
libtpu: 0.0.40
codegen_flags: <defaults>
</compile_context>

<pallas_src>
import functools
import math

import jax
import jax.numpy as jnp
from jax.experimental import pallas as pl
from jax.experimental.pallas import tpu as pltpu

# ----- scaled-down BERT config -----
VOCAB = 128
TYPE_VOCAB = 2
MAX_POS = 64
HIDDEN = 128
HEADS = 2
HEAD_DIM = HIDDEN // HEADS
INTERMEDIATE = 256
LAYERS = 2
NUM_LABELS = 2
LABEL_PAD = 128          # classifier output padded to a lane-dense 128-wide slab
LN_EPS = 1e-12


# --------------------------- fused Pallas kernel ---------------------------

def _bert_forward_kernel(emb_ref, mask_ref,
                         wqkv_ref, bqkv_ref, wo_ref, bo_ref,
                         ln1_g_ref, ln1_b_ref,
                         wi_ref, bi_ref, wd_ref, bd_ref,
                         ln2_g_ref, ln2_b_ref,
                         emb_ln_g_ref, emb_ln_b_ref,
                         cls_w_ref, cls_b_ref,
                         logits_ref):
    B, S = mask_ref.shape                      # static shapes
    scale = 1.0 / math.sqrt(HEAD_DIM)

    def layernorm(x, g, b):
        mu = jnp.mean(x, axis=-1, keepdims=True)
        xc = x - mu
        var = jnp.mean(xc * xc, axis=-1, keepdims=True)
        return xc * jax.lax.rsqrt(var + LN_EPS) * g + b

    def gelu(x):
        # exact (erf) GELU, as used by BERT
        return 0.5 * x * (1.0 + jax.lax.erf(x * (1.0 / math.sqrt(2.0))))

    def matmul(x, w, b):
        # bf16 MXU inputs, f32 accumulation, bias folded in
        y = jnp.dot(x.astype(jnp.bfloat16), w,
                    preferred_element_type=jnp.float32)
        return y + b

    # ---- embedding LayerNorm (no residual; no zeros tensor materialized) ----
    x = layernorm(emb_ref[...], emb_ln_g_ref[...], emb_ln_b_ref[...])     # (B*S, H) f32

    # ---- BERT additive mask computed in-kernel from the shared 0/1 mask ----
    mask_add = (1.0 - mask_ref[...]) * -10000.0                           # (B, S)

    for l in range(LAYERS):
        # ---- fused QKV projection: single (H, 3H) matmul ----
        qkv = matmul(x, wqkv_ref[l], bqkv_ref[l])                         # (B*S, 3H) f32
        q = qkv[:, :HIDDEN]
        k = qkv[:, HIDDEN:2 * HIDDEN]
        v = qkv[:, 2 * HIDDEN:]

        # ---- self-attention, per (batch, head), entirely in VMEM/vregs ----
        ctx_rows = []
        for b in range(B):
            r0 = b * S
            mb = mask_add[b:b + 1, :]                                     # (1, S)
            head_outs = []
            for h in range(HEADS):
                c0 = h * HEAD_DIM
                qh = q[r0:r0 + S, c0:c0 + HEAD_DIM].astype(jnp.bfloat16)  # (S, Dh)
                kh = k[r0:r0 + S, c0:c0 + HEAD_DIM].astype(jnp.bfloat16)
                vh = v[r0:r0 + S, c0:c0 + HEAD_DIM].astype(jnp.bfloat16)
                s = jax.lax.dot_general(                                  # q @ k^T
                    qh, kh, (((1,), (1,)), ((), ())),
                    preferred_element_type=jnp.float32) * scale           # (S, S)
                s = s + mb                                                # additive mask
                s = s - jnp.max(s, axis=-1, keepdims=True)                # stable softmax
                p = jnp.exp(s)
                p = p * pl.reciprocal(jnp.sum(p, axis=-1, keepdims=True),
                                      approx=True)
                head_outs.append(jnp.dot(p.astype(jnp.bfloat16), vh,
                                         preferred_element_type=jnp.float32))
            ctx_rows.append(jnp.concatenate(head_outs, axis=-1))          # (S, H)
        ctx = jnp.concatenate(ctx_rows, axis=0)                           # (B*S, H)

        # ---- output projection + residual + LayerNorm (fused) ----
        attn_out = matmul(ctx, wo_ref[l], bo_ref[l])
        x = layernorm(attn_out + x, ln1_g_ref[l], ln1_b_ref[l])

        # ---- feed-forward: GELU(x Wi + bi) Wd + bd, + residual + LayerNorm ----
        hmid = gelu(matmul(x, wi_ref[l], bi_ref[l]))                      # (B*S, I)
        ffn_out = matmul(hmid, wd_ref[l], bd_ref[l])
        x = layernorm(ffn_out + x, ln2_g_ref[l], ln2_b_ref[l])

    # ---- classifier on the [CLS] token of each sequence (fused, lane-dense out) ----
    cls = jnp.concatenate([x[b * S:b * S + 1, :] for b in range(B)], axis=0)   # (B, H)
    logits_ref[...] = matmul(cls, cls_w_ref[...], cls_b_ref[...]).astype(logits_ref.dtype)


# --------------------------- parameters & forward ---------------------------

def init_params(key):
    ks = iter(jax.random.split(key, 8))

    def nrm(shape):
        return jax.random.normal(next(ks), shape, jnp.float32) * 0.02

    params = {
        "word_emb": nrm((VOCAB, HIDDEN)),
        "pos_emb": nrm((MAX_POS, HIDDEN)),
        "type_emb": nrm((TYPE_VOCAB, HIDDEN)),
        "emb_ln_g": jnp.ones((1, HIDDEN), jnp.float32),
        "emb_ln_b": jnp.zeros((1, HIDDEN), jnp.float32),
        # per-layer weights stacked over the layer axis; matmul weights in bf16
        "wqkv": nrm((LAYERS, HIDDEN, 3 * HIDDEN)).astype(jnp.bfloat16),   # Q|K|V fused
        "bqkv": jnp.zeros((LAYERS, 1, 3 * HIDDEN), jnp.float32),
        "wo": nrm((LAYERS, HIDDEN, HIDDEN)).astype(jnp.bfloat16),
        "bo": jnp.zeros((LAYERS, 1, HIDDEN), jnp.float32),
        "ln1_g": jnp.ones((LAYERS, 1, HIDDEN), jnp.float32),
        "ln1_b": jnp.zeros((LAYERS, 1, HIDDEN), jnp.float32),
        "wi": nrm((LAYERS, HIDDEN, INTERMEDIATE)).astype(jnp.bfloat16),
        "bi": jnp.zeros((LAYERS, 1, INTERMEDIATE), jnp.float32),
        "wd": nrm((LAYERS, INTERMEDIATE, HIDDEN)).astype(jnp.bfloat16),
        "bd": jnp.zeros((LAYERS, 1, HIDDEN), jnp.float32),
        "ln2_g": jnp.ones((LAYERS, 1, HIDDEN), jnp.float32),
        "ln2_b": jnp.zeros((LAYERS, 1, HIDDEN), jnp.float32),
    }
    # classifier Linear(HIDDEN, 2), padded to a lane-dense 128-wide output;
    # logits sliced back to 2 columns after the kernel.
    cls_w = nrm((HIDDEN, NUM_LABELS))
    params["cls_w"] = (jnp.zeros((HIDDEN, LABEL_PAD), jnp.float32)
                       .at[:, :NUM_LABELS].set(cls_w)).astype(jnp.bfloat16)
    params["cls_b"] = jnp.zeros((1, LABEL_PAD), jnp.float32)
    return params


def forward(params, input_ids, attention_mask, token_type_ids):
    B, S = input_ids.shape
    # --- embeddings (gathers are plain-JAX glue) ---
    pos_ids = jnp.arange(S)
    emb = (params["word_emb"][input_ids]
           + params["pos_emb"][pos_ids][None, :, :]
           + params["type_emb"][token_type_ids])                          # (B, S, H)
    emb = emb.reshape(B * S, HIDDEN).astype(jnp.float32)
    mask_f = attention_mask.astype(jnp.float32)                           # (B, S) 1/0

    args = (emb, mask_f,
            params["wqkv"], params["bqkv"], params["wo"], params["bo"],
            params["ln1_g"], params["ln1_b"],
            params["wi"], params["bi"], params["wd"], params["bd"],
            params["ln2_g"], params["ln2_b"],
            params["emb_ln_g"], params["emb_ln_b"],
            params["cls_w"], params["cls_b"])

    vmem_spec = pl.BlockSpec(memory_space=pltpu.MemorySpace.VMEM)
    logits_pad = pl.pallas_call(
        _bert_forward_kernel,
        out_shape=jax.ShapeDtypeStruct((B, LABEL_PAD), jnp.float32),
        in_specs=[vmem_spec] * len(args),       # whole model resident in VMEM
        out_specs=vmem_spec,
    )(*args)
    return logits_pad[:, :NUM_LABELS]


if __name__ == "__main__":
    key = jax.random.PRNGKey(0)
    pkey, dkey = jax.random.split(key)
    params = init_params(pkey)

    B, S = 2, 16
    input_ids = jax.random.randint(dkey, (B, S), 0, VOCAB, dtype=jnp.int32)
    attention_mask = jnp.ones((B, S), jnp.int32).at[1, 12:].set(0)   # pad tail of seq 1
    token_type_ids = jnp.zeros((B, S), jnp.int32).at[:, 8:].set(1)   # sentence-pair ids

    logits = jax.jit(forward)(params, input_ids, attention_mask, token_type_ids)
    jax.block_until_ready(logits)
    assert logits.shape == (B, NUM_LABELS) and logits.dtype == jnp.float32
    assert bool(jnp.all(jnp.isfinite(logits)))
    print("KERNEL_OK")
</pallas_src>

<mosaic_0001>
module attributes {stable_mosaic.version = 11 : i64} {
  func.func @_bert_forward_kernel(%arg0: memref<32x128xf32, #tpu.memory_space<vmem>>, %arg1: memref<2x16xf32, #tpu.memory_space<vmem>>, %arg2: memref<2x128x384xbf16, #tpu.memory_space<vmem>>, %arg3: memref<2x1x384xf32, #tpu.memory_space<vmem>>, %arg4: memref<2x128x128xbf16, #tpu.memory_space<vmem>>, %arg5: memref<2x1x128xf32, #tpu.memory_space<vmem>>, %arg6: memref<2x1x128xf32, #tpu.memory_space<vmem>>, %arg7: memref<2x1x128xf32, #tpu.memory_space<vmem>>, %arg8: memref<2x128x256xbf16, #tpu.memory_space<vmem>>, %arg9: memref<2x1x256xf32, #tpu.memory_space<vmem>>, %arg10: memref<2x256x128xbf16, #tpu.memory_space<vmem>>, %arg11: memref<2x1x128xf32, #tpu.memory_space<vmem>>, %arg12: memref<2x1x128xf32, #tpu.memory_space<vmem>>, %arg13: memref<2x1x128xf32, #tpu.memory_space<vmem>>, %arg14: memref<1x128xf32, #tpu.memory_space<vmem>>, %arg15: memref<1x128xf32, #tpu.memory_space<vmem>>, %arg16: memref<128x128xbf16, #tpu.memory_space<vmem>>, %arg17: memref<1x128xf32, #tpu.memory_space<vmem>>, %arg18: memref<2x128xf32, #tpu.memory_space<vmem>>) attributes {dimension_semantics = [], scalar_prefetch = 0 : i64, scratch_operands = 0 : i64, tpu.core_type = #tpu.core_type<tc>} {
    %c0 = arith.constant 0 : index
    %c0_0 = arith.constant 0 : index
    %0 = vector.load %arg0[%c0, %c0_0] : memref<32x128xf32, #tpu.memory_space<vmem>>, vector<32x128xf32>
    %c0_1 = arith.constant 0 : index
    %c0_2 = arith.constant 0 : index
    %1 = vector.load %arg14[%c0_1, %c0_2] : memref<1x128xf32, #tpu.memory_space<vmem>>, vector<1x128xf32>
    %c0_3 = arith.constant 0 : index
    %c0_4 = arith.constant 0 : index
    %2 = vector.load %arg15[%c0_3, %c0_4] : memref<1x128xf32, #tpu.memory_space<vmem>>, vector<1x128xf32>
    %cst = arith.constant dense<0.000000e+00> : vector<32xf32>
    %3 = vector.multi_reduction <add>, %0, %cst [1] : vector<32x128xf32> to vector<32xf32>
    %4 = vector.shape_cast %3 : vector<32xf32> to vector<32x1xf32>
    %cst_5 = arith.constant 1.280000e+02 : f32
    %5 = vector.broadcast %cst_5 : f32 to vector<32x1xf32>
    %6 = arith.divf %4, %5 : vector<32x1xf32>
    %7 = vector.broadcast %6 : vector<32x1xf32> to vector<32x128xf32>
    %8 = arith.subf %0, %7 : vector<32x128xf32>
    %9 = arith.mulf %8, %8 : vector<32x128xf32>
    %cst_6 = arith.constant dense<0.000000e+00> : vector<32xf32>
    %10 = vector.multi_reduction <add>, %9, %cst_6 [1] : vector<32x128xf32> to vector<32xf32>
    %11 = vector.shape_cast %10 : vector<32xf32> to vector<32x1xf32>
    %cst_7 = arith.constant 1.280000e+02 : f32
    %12 = vector.broadcast %cst_7 : f32 to vector<32x1xf32>
    %13 = arith.divf %11, %12 : vector<32x1xf32>
    %cst_8 = arith.constant 9.99999996E-13 : f32
    %14 = vector.broadcast %cst_8 : f32 to vector<32x1xf32>
    %15 = arith.addf %13, %14 : vector<32x1xf32>
    %16 = math.rsqrt %15 : vector<32x1xf32>
    %17 = vector.broadcast %16 : vector<32x1xf32> to vector<32x128xf32>
    %18 = arith.mulf %8, %17 : vector<32x128xf32>
    %19 = vector.broadcast %1 : vector<1x128xf32> to vector<32x128xf32>
    %20 = arith.mulf %18, %19 : vector<32x128xf32>
    %21 = vector.broadcast %2 : vector<1x128xf32> to vector<32x128xf32>
    %22 = arith.addf %20, %21 : vector<32x128xf32>
    %c0_9 = arith.constant 0 : index
    %c0_10 = arith.constant 0 : index
    %23 = vector.load %arg1[%c0_9, %c0_10] : memref<2x16xf32, #tpu.memory_space<vmem>>, vector<2x16xf32>
    %cst_11 = arith.constant 1.000000e+00 : f32
    %24 = vector.broadcast %cst_11 : f32 to vector<2x16xf32>
    %25 = arith.subf %24, %23 : vector<2x16xf32>
    %cst_12 = arith.constant -1.000000e+04 : f32
    %26 = vector.broadcast %cst_12 : f32 to vector<2x16xf32>
    %27 = arith.mulf %25, %26 : vector<2x16xf32>
    %c0_13 = arith.constant 0 : index
    %c0_14 = arith.constant 0 : index
    %c0_15 = arith.constant 0 : index
    %28 = vector.load %arg2[%c0_13, %c0_14, %c0_15] : memref<2x128x384xbf16, #tpu.memory_space<vmem>>, vector<1x128x384xbf16>
    %29 = vector.shape_cast %28 : vector<1x128x384xbf16> to vector<128x384xbf16>
    %c0_16 = arith.constant 0 : index
    %c0_17 = arith.constant 0 : index
    %c0_18 = arith.constant 0 : index
    %30 = vector.load %arg3[%c0_16, %c0_17, %c0_18] : memref<2x1x384xf32, #tpu.memory_space<vmem>>, vector<1x1x384xf32>
    %31 = vector.shape_cast %30 : vector<1x1x384xf32> to vector<1x384xf32>
    %32 = arith.truncf %22 : vector<32x128xf32> to vector<32x128xbf16>
    %cst_19 = arith.constant dense<0.000000e+00> : vector<32x384xf32>
    %33 = tpu.matmul %32, %29, %cst_19 {dimension_numbers = #tpu.dot_dimension_numbers<[1], [0], [0], [1], [0, 0, 1, 1], [], []>} : vector<32x128xbf16>, vector<128x384xbf16>, vector<32x384xf32> -> vector<32x384xf32>
    %34 = vector.broadcast %31 : vector<1x384xf32> to vector<32x384xf32>
    %35 = arith.addf %33, %34 : vector<32x384xf32>
    %36 = vector.extract_strided_slice %35 {offsets = [0, 0], sizes = [32, 128], strides = [1, 1]} : vector<32x384xf32> to vector<32x128xf32>
    %37 = vector.extract_strided_slice %35 {offsets = [0, 128], sizes = [32, 128], strides = [1, 1]} : vector<32x384xf32> to vector<32x128xf32>
    %38 = vector.extract_strided_slice %35 {offsets = [0, 256], sizes = [32, 128], strides = [1, 1]} : vector<32x384xf32> to vector<32x128xf32>
    %39 = vector.extract_strided_slice %27 {offsets = [0, 0], sizes = [1, 16], strides = [1, 1]} : vector<2x16xf32> to vector<1x16xf32>
    %40 = vector.extract_strided_slice %36 {offsets = [0, 0], sizes = [16, 64], strides = [1, 1]} : vector<32x128xf32> to vector<16x64xf32>
    %41 = arith.truncf %40 : vector<16x64xf32> to vector<16x64xbf16>
    %42 = vector.extract_strided_slice %37 {offsets = [0, 0], sizes = [16, 64], strides = [1, 1]} : vector<32x128xf32> to vector<16x64xf32>
    %43 = arith.truncf %42 : vector<16x64xf32> to vector<16x64xbf16>
    %44 = vector.extract_strided_slice %38 {offsets = [0, 0], sizes = [16, 64], strides = [1, 1]} : vector<32x128xf32> to vector<16x64xf32>
    %45 = arith.truncf %44 : vector<16x64xf32> to vector<16x64xbf16>
    %cst_20 = arith.constant dense<0.000000e+00> : vector<16x16xf32>
    %46 = tpu.matmul %41, %43, %cst_20 {dimension_numbers = #tpu.dot_dimension_numbers<[1], [1], [0], [0], [0, 0, 1, 0], [], []>} : vector<16x64xbf16>, vector<16x64xbf16>, vector<16x16xf32> -> vector<16x16xf32>
    %cst_21 = arith.constant 1.250000e-01 : f32
    %47 = vector.broadcast %cst_21 : f32 to vector<16x16xf32>
    %48 = arith.mulf %46, %47 : vector<16x16xf32>
    %49 = vector.broadcast %39 : vector<1x16xf32> to vector<16x16xf32>
    %50 = arith.addf %48, %49 : vector<16x16xf32>
    %cst_22 = arith.constant dense<0xFF800000> : vector<16xf32>
    %51 = vector.multi_reduction <maximumf>, %50, %cst_22 [1] : vector<16x16xf32> to vector<16xf32>
    %52 = vector.shape_cast %51 : vector<16xf32> to vector<16x1xf32>
    %53 = vector.broadcast %52 : vector<16x1xf32> to vector<16x16xf32>
    %54 = arith.subf %50, %53 : vector<16x16xf32>
    %55 = math.exp %54 : vector<16x16xf32>
    %cst_23 = arith.constant dense<0.000000e+00> : vector<16xf32>
    %56 = vector.multi_reduction <add>, %55, %cst_23 [1] : vector<16x16xf32> to vector<16xf32>
    %57 = vector.shape_cast %56 : vector<16xf32> to vector<16x1xf32>
    %58 = tpu.reciprocal %57 {approx = true} : vector<16x1xf32> -> vector<16x1xf32>
    %59 = vector.broadcast %58 : vector<16x1xf32> to vector<16x16xf32>
    %60 = arith.mulf %55, %59 : vector<16x16xf32>
    %61 = arith.truncf %60 : vector<16x16xf32> to vector<16x16xbf16>
    %cst_24 = arith.constant dense<0.000000e+00> : vector<16x64xf32>
    %62 = tpu.matmul %61, %45, %cst_24 {dimension_numbers = #tpu.dot_dimension_numbers<[1], [0], [0], [1], [0, 0, 1, 1], [], []>} : vector<16x16xbf16>, vector<16x64xbf16>, vector<16x64xf32> -> vector<16x64xf32>
    %63 = vector.extract_strided_slice %36 {offsets = [0, 64], sizes = [16, 64], strides = [1, 1]} : vector<32x128xf32> to vector<16x64xf32>
    %64 = arith.truncf %63 : vector<16x64xf32> to vector<16x64xbf16>
    %65 = vector.extract_strided_slice %37 {offsets = [0, 64], sizes = [16, 64], strides = [1, 1]} : vector<32x128xf32> to vector<16x64xf32>
    %66 = arith.truncf %65 : vector<16x64xf32> to vector<16x64xbf16>
    %67 = vector.extract_strided_slice %38 {offsets = [0, 64], sizes = [16, 64], strides = [1, 1]} : vector<32x128xf32> to vector<16x64xf32>
    %68 = arith.truncf %67 : vector<16x64xf32> to vector<16x64xbf16>
    %cst_25 = arith.constant dense<0.000000e+00> : vector<16x16xf32>
    %69 = tpu.matmul %64, %66, %cst_25 {dimension_numbers = #tpu.dot_dimension_numbers<[1], [1], [0], [0], [0, 0, 1, 0], [], []>} : vector<16x64xbf16>, vector<16x64xbf16>, vector<16x16xf32> -> vector<16x16xf32>
    %cst_26 = arith.constant 1.250000e-01 : f32
    %70 = vector.broadcast %cst_26 : f32 to vector<16x16xf32>
    %71 = arith.mulf %69, %70 : vector<16x16xf32>
    %72 = vector.broadcast %39 : vector<1x16xf32> to vector<16x16xf32>
    %73 = arith.addf %71, %72 : vector<16x16xf32>
    %cst_27 = arith.constant dense<0xFF800000> : vector<16xf32>
    %74 = vector.multi_reduction <maximumf>, %73, %cst_27 [1] : vector<16x16xf32> to vector<16xf32>
    %75 = vector.shape_cast %74 : vector<16xf32> to vector<16x1xf32>
    %76 = vector.broadcast %75 : vector<16x1xf32> to vector<16x16xf32>
    %77 = arith.subf %73, %76 : vector<16x16xf32>
    %78 = math.exp %77 : vector<16x16xf32>
    %cst_28 = arith.constant dense<0.000000e+00> : vector<16xf32>
    %79 = vector.multi_reduction <add>, %78, %cst_28 [1] : vector<16x16xf32> to vector<16xf32>
    %80 = vector.shape_cast %79 : vector<16xf32> to vector<16x1xf32>
    %81 = tpu.reciprocal %80 {approx = true} : vector<16x1xf32> -> vector<16x1xf32>
    %82 = vector.broadcast %81 : vector<16x1xf32> to vector<16x16xf32>
    %83 = arith.mulf %78, %82 : vector<16x16xf32>
    %84 = arith.truncf %83 : vector<16x16xf32> to vector<16x16xbf16>
    %cst_29 = arith.constant dense<0.000000e+00> : vector<16x64xf32>
    %85 = tpu.matmul %84, %68, %cst_29 {dimension_numbers = #tpu.dot_dimension_numbers<[1], [0], [0], [1], [0, 0, 1, 1], [], []>} : vector<16x16xbf16>, vector<16x64xbf16>, vector<16x64xf32> -> vector<16x64xf32>
    %86 = tpu.concatenate %62, %85 in 1 : vector<16x64xf32>, vector<16x64xf32> -> vector<16x128xf32>
    %87 = vector.extract_strided_slice %27 {offsets = [1, 0], sizes = [1, 16], strides = [1, 1]} : vector<2x16xf32> to vector<1x16xf32>
    %88 = vector.extract_strided_slice %36 {offsets = [16, 0], sizes = [16, 64], strides = [1, 1]} : vector<32x128xf32> to vector<16x64xf32>
    %89 = arith.truncf %88 : vector<16x64xf32> to vector<16x64xbf16>
    %90 = vector.extract_strided_slice %37 {offsets = [16, 0], sizes = [16, 64], strides = [1, 1]} : vector<32x128xf32> to vector<16x64xf32>
    %91 = arith.truncf %90 : vector<16x64xf32> to vector<16x64xbf16>
    %92 = vector.extract_strided_slice %38 {offsets = [16, 0], sizes = [16, 64], strides = [1, 1]} : vector<32x128xf32> to vector<16x64xf32>
    %93 = arith.truncf %92 : vector<16x64xf32> to vector<16x64xbf16>
    %cst_30 = arith.constant dense<0.000000e+00> : vector<16x16xf32>
    %94 = tpu.matmul %89, %91, %cst_30 {dimension_numbers = #tpu.dot_dimension_numbers<[1], [1], [0], [0], [0, 0, 1, 0], [], []>} : vector<16x64xbf16>, vector<16x64xbf16>, vector<16x16xf32> -> vector<16x16xf32>
    %cst_31 = arith.constant 1.250000e-01 : f32
    %95 = vector.broadcast %cst_31 : f32 to vector<16x16xf32>
    %96 = arith.mulf %94, %95 : vector<16x16xf32>
    %97 = vector.broadcast %87 : vector<1x16xf32> to vector<16x16xf32>
    %98 = arith.addf %96, %97 : vector<16x16xf32>
    %cst_32 = arith.constant dense<0xFF800000> : vector<16xf32>
    %99 = vector.multi_reduction <maximumf>, %98, %cst_32 [1] : vector<16x16xf32> to vector<16xf32>
    %100 = vector.shape_cast %99 : vector<16xf32> to vector<16x1xf32>
    %101 = vector.broadcast %100 : vector<16x1xf32> to vector<16x16xf32>
    %102 = arith.subf %98, %101 : vector<16x16xf32>
    %103 = math.exp %102 : vector<16x16xf32>
    %cst_33 = arith.constant dense<0.000000e+00> : vector<16xf32>
    %104 = vector.multi_reduction <add>, %103, %cst_33 [1] : vector<16x16xf32> to vector<16xf32>
    %105 = vector.shape_cast %104 : vector<16xf32> to vector<16x1xf32>
    %106 = tpu.reciprocal %105 {approx = true} : vector<16x1xf32> -> vector<16x1xf32>
    %107 = vector.broadcast %106 : vector<16x1xf32> to vector<16x16xf32>
    %108 = arith.mulf %103, %107 : vector<16x16xf32>
    %109 = arith.truncf %108 : vector<16x16xf32> to vector<16x16xbf16>
    %cst_34 = arith.constant dense<0.000000e+00> : vector<16x64xf32>
    %110 = tpu.matmul %109, %93, %cst_34 {dimension_numbers = #tpu.dot_dimension_numbers<[1], [0], [0], [1], [0, 0, 1, 1], [], []>} : vector<16x16xbf16>, vector<16x64xbf16>, vector<16x64xf32> -> vector<16x64xf32>
    %111 = vector.extract_strided_slice %36 {offsets = [16, 64], sizes = [16, 64], strides = [1, 1]} : vector<32x128xf32> to vector<16x64xf32>
    %112 = arith.truncf %111 : vector<16x64xf32> to vector<16x64xbf16>
    %113 = vector.extract_strided_slice %37 {offsets = [16, 64], sizes = [16, 64], strides = [1, 1]} : vector<32x128xf32> to vector<16x64xf32>
    %114 = arith.truncf %113 : vector<16x64xf32> to vector<16x64xbf16>
    %115 = vector.extract_strided_slice %38 {offsets = [16, 64], sizes = [16, 64], strides = [1, 1]} : vector<32x128xf32> to vector<16x64xf32>
    %116 = arith.truncf %115 : vector<16x64xf32> to vector<16x64xbf16>
    %cst_35 = arith.constant dense<0.000000e+00> : vector<16x16xf32>
    %117 = tpu.matmul %112, %114, %cst_35 {dimension_numbers = #tpu.dot_dimension_numbers<[1], [1], [0], [0], [0, 0, 1, 0], [], []>} : vector<16x64xbf16>, vector<16x64xbf16>, vector<16x16xf32> -> vector<16x16xf32>
    %cst_36 = arith.constant 1.250000e-01 : f32
    %118 = vector.broadcast %cst_36 : f32 to vector<16x16xf32>
    %119 = arith.mulf %117, %118 : vector<16x16xf32>
    %120 = vector.broadcast %87 : vector<1x16xf32> to vector<16x16xf32>
    %121 = arith.addf %119, %120 : vector<16x16xf32>
    %cst_37 = arith.constant dense<0xFF800000> : vector<16xf32>
    %122 = vector.multi_reduction <maximumf>, %121, %cst_37 [1] : vector<16x16xf32> to vector<16xf32>
    %123 = vector.shape_cast %122 : vector<16xf32> to vector<16x1xf32>
    %124 = vector.broadcast %123 : vector<16x1xf32> to vector<16x16xf32>
    %125 = arith.subf %121, %124 : vector<16x16xf32>
    %126 = math.exp %125 : vector<16x16xf32>
    %cst_38 = arith.constant dense<0.000000e+00> : vector<16xf32>
    %127 = vector.multi_reduction <add>, %126, %cst_38 [1] : vector<16x16xf32> to vector<16xf32>
    %128 = vector.shape_cast %127 : vector<16xf32> to vector<16x1xf32>
    %129 = tpu.reciprocal %128 {approx = true} : vector<16x1xf32> -> vector<16x1xf32>
    %130 = vector.broadcast %129 : vector<16x1xf32> to vector<16x16xf32>
    %131 = arith.mulf %126, %130 : vector<16x16xf32>
    %132 = arith.truncf %131 : vector<16x16xf32> to vector<16x16xbf16>
    %cst_39 = arith.constant dense<0.000000e+00> : vector<16x64xf32>
    %133 = tpu.matmul %132, %116, %cst_39 {dimension_numbers = #tpu.dot_dimension_numbers<[1], [0], [0], [1], [0, 0, 1, 1], [], []>} : vector<16x16xbf16>, vector<16x64xbf16>, vector<16x64xf32> -> vector<16x64xf32>
    %134 = tpu.concatenate %110, %133 in 1 : vector<16x64xf32>, vector<16x64xf32> -> vector<16x128xf32>
    %135 = tpu.concatenate %86, %134 in 0 : vector<16x128xf32>, vector<16x128xf32> -> vector<32x128xf32>
    %c0_40 = arith.constant 0 : index
    %c0_41 = arith.constant 0 : index
    %c0_42 = arith.constant 0 : index
    %136 = vector.load %arg4[%c0_40, %c0_41, %c0_42] : memref<2x128x128xbf16, #tpu.memory_space<vmem>>, vector<1x128x128xbf16>
    %137 = vector.shape_cast %136 : vector<1x128x128xbf16> to vector<128x128xbf16>
    %c0_43 = arith.constant 0 : index
    %c0_44 = arith.constant 0 : index
    %c0_45 = arith.constant 0 : index
    %138 = vector.load %arg5[%c0_43, %c0_44, %c0_45] : memref<2x1x128xf32, #tpu.memory_space<vmem>>, vector<1x1x128xf32>
    %139 = vector.shape_cast %138 : vector<1x1x128xf32> to vector<1x128xf32>
    %140 = arith.truncf %135 : vector<32x128xf32> to vector<32x128xbf16>
    %cst_46 = arith.constant dense<0.000000e+00> : vector<32x128xf32>
    %141 = tpu.matmul %140, %137, %cst_46 {dimension_numbers = #tpu.dot_dimension_numbers<[1], [0], [0], [1], [0, 0, 1, 1], [], []>} : vector<32x128xbf16>, vector<128x128xbf16>, vector<32x128xf32> -> vector<32x128xf32>
    %142 = vector.broadcast %139 : vector<1x128xf32> to vector<32x128xf32>
    %143 = arith.addf %141, %142 : vector<32x128xf32>
    %144 = arith.addf %143, %22 : vector<32x128xf32>
    %c0_47 = arith.constant 0 : index
    %c0_48 = arith.constant 0 : index
    %c0_49 = arith.constant 0 : index
    %145 = vector.load %arg6[%c0_47, %c0_48, %c0_49] : memref<2x1x128xf32, #tpu.memory_space<vmem>>, vector<1x1x128xf32>
    %146 = vector.shape_cast %145 : vector<1x1x128xf32> to vector<1x128xf32>
    %c0_50 = arith.constant 0 : index
    %c0_51 = arith.constant 0 : index
    %c0_52 = arith.constant 0 : index
    %147 = vector.load %arg7[%c0_50, %c0_51, %c0_52] : memref<2x1x128xf32, #tpu.memory_space<vmem>>, vector<1x1x128xf32>
    %148 = vector.shape_cast %147 : vector<1x1x128xf32> to vector<1x128xf32>
    %cst_53 = arith.constant dense<0.000000e+00> : vector<32xf32>
    %149 = vector.multi_reduction <add>, %144, %cst_53 [1] : vector<32x128xf32> to vector<32xf32>
    %150 = vector.shape_cast %149 : vector<32xf32> to vector<32x1xf32>
    %cst_54 = arith.constant 1.280000e+02 : f32
    %151 = vector.broadcast %cst_54 : f32 to vector<32x1xf32>
    %152 = arith.divf %150, %151 : vector<32x1xf32>
    %153 = vector.broadcast %152 : vector<32x1xf32> to vector<32x128xf32>
    %154 = arith.subf %144, %153 : vector<32x128xf32>
    %155 = arith.mulf %154, %154 : vector<32x128xf32>
    %cst_55 = arith.constant dense<0.000000e+00> : vector<32xf32>
    %156 = vector.multi_reduction <add>, %155, %cst_55 [1] : vector<32x128xf32> to vector<32xf32>
    %157 = vector.shape_cast %156 : vector<32xf32> to vector<32x1xf32>
    %cst_56 = arith.constant 1.280000e+02 : f32
    %158 = vector.broadcast %cst_56 : f32 to vector<32x1xf32>
    %159 = arith.divf %157, %158 : vector<32x1xf32>
    %cst_57 = arith.constant 9.99999996E-13 : f32
    %160 = vector.broadcast %cst_57 : f32 to vector<32x1xf32>
    %161 = arith.addf %159, %160 : vector<32x1xf32>
    %162 = math.rsqrt %161 : vector<32x1xf32>
    %163 = vector.broadcast %162 : vector<32x1xf32> to vector<32x128xf32>
    %164 = arith.mulf %154, %163 : vector<32x128xf32>
    %165 = vector.broadcast %146 : vector<1x128xf32> to vector<32x128xf32>
    %166 = arith.mulf %164, %165 : vector<32x128xf32>
    %167 = vector.broadcast %148 : vector<1x128xf32> to vector<32x128xf32>
    %168 = arith.addf %166, %167 : vector<32x128xf32>
    %c0_58 = arith.constant 0 : index
    %c0_59 = arith.constant 0 : index
    %c0_60 = arith.constant 0 : index
    %169 = vector.load %arg8[%c0_58, %c0_59, %c0_60] : memref<2x128x256xbf16, #tpu.memory_space<vmem>>, vector<1x128x256xbf16>
    %170 = vector.shape_cast %169 : vector<1x128x256xbf16> to vector<128x256xbf16>
    %c0_61 = arith.constant 0 : index
    %c0_62 = arith.constant 0 : index
    %c0_63 = arith.constant 0 : index
    %171 = vector.load %arg9[%c0_61, %c0_62, %c0_63] : memref<2x1x256xf32, #tpu.memory_space<vmem>>, vector<1x1x256xf32>
    %172 = vector.shape_cast %171 : vector<1x1x256xf32> to vector<1x256xf32>
    %173 = arith.truncf %168 : vector<32x128xf32> to vector<32x128xbf16>
    %cst_64 = arith.constant dense<0.000000e+00> : vector<32x256xf32>
    %174 = tpu.matmul %173, %170, %cst_64 {dimension_numbers = #tpu.dot_dimension_numbers<[1], [0], [0], [1], [0, 0, 1, 1], [], []>} : vector<32x128xbf16>, vector<128x256xbf16>, vector<32x256xf32> -> vector<32x256xf32>
    %175 = vector.broadcast %172 : vector<1x256xf32> to vector<32x256xf32>
    %176 = arith.addf %174, %175 : vector<32x256xf32>
    %cst_65 = arith.constant 5.000000e-01 : f32
    %177 = vector.broadcast %cst_65 : f32 to vector<32x256xf32>
    %178 = arith.mulf %177, %176 : vector<32x256xf32>
    %cst_66 = arith.constant 0.707106769 : f32
    %179 = vector.broadcast %cst_66 : f32 to vector<32x256xf32>
    %180 = arith.mulf %176, %179 : vector<32x256xf32>
    %181 = math.erf %180 : vector<32x256xf32>
    %cst_67 = arith.constant 1.000000e+00 : f32
    %182 = vector.broadcast %cst_67 : f32 to vector<32x256xf32>
    %183 = arith.addf %182, %181 : vector<32x256xf32>
    %184 = arith.mulf %178, %183 : vector<32x256xf32>
    %c0_68 = arith.constant 0 : index
    %c0_69 = arith.constant 0 : index
    %c0_70 = arith.constant 0 : index
    %185 = vector.load %arg10[%c0_68, %c0_69, %c0_70] : memref<2x256x128xbf16, #tpu.memory_space<vmem>>, vector<1x256x128xbf16>
    %186 = vector.shape_cast %185 : vector<1x256x128xbf16> to vector<256x128xbf16>
    %c0_71 = arith.constant 0 : index
    %c0_72 = arith.constant 0 : index
    %c0_73 = arith.constant 0 : index
    %187 = vector.load %arg11[%c0_71, %c0_72, %c0_73] : memref<2x1x128xf32, #tpu.memory_space<vmem>>, vector<1x1x128xf32>
    %188 = vector.shape_cast %187 : vector<1x1x128xf32> to vector<1x128xf32>
    %189 = arith.truncf %184 : vector<32x256xf32> to vector<32x256xbf16>
    %cst_74 = arith.constant dense<0.000000e+00> : vector<32x128xf32>
    %190 = tpu.matmul %189, %186, %cst_74 {dimension_numbers = #tpu.dot_dimension_numbers<[1], [0], [0], [1], [0, 0, 1, 1], [], []>} : vector<32x256xbf16>, vector<256x128xbf16>, vector<32x128xf32> -> vector<32x128xf32>
    %191 = vector.broadcast %188 : vector<1x128xf32> to vector<32x128xf32>
    %192 = arith.addf %190, %191 : vector<32x128xf32>
    %193 = arith.addf %192, %168 : vector<32x128xf32>
    %c0_75 = arith.constant 0 : index
    %c0_76 = arith.constant 0 : index
    %c0_77 = arith.constant 0 : index
    %194 = vector.load %arg12[%c0_75, %c0_76, %c0_77] : memref<2x1x128xf32, #tpu.memory_space<vmem>>, vector<1x1x128xf32>
    %195 = vector.shape_cast %194 : vector<1x1x128xf32> to vector<1x128xf32>
    %c0_78 = arith.constant 0 : index
    %c0_79 = arith.constant 0 : index
    %c0_80 = arith.constant 0 : index
    %196 = vector.load %arg13[%c0_78, %c0_79, %c0_80] : memref<2x1x128xf32, #tpu.memory_space<vmem>>, vector<1x1x128xf32>
    %197 = vector.shape_cast %196 : vector<1x1x128xf32> to vector<1x128xf32>
    %cst_81 = arith.constant dense<0.000000e+00> : vector<32xf32>
    %198 = vector.multi_reduction <add>, %193, %cst_81 [1] : vector<32x128xf32> to vector<32xf32>
    %199 = vector.shape_cast %198 : vector<32xf32> to vector<32x1xf32>
    %cst_82 = arith.constant 1.280000e+02 : f32
    %200 = vector.broadcast %cst_82 : f32 to vector<32x1xf32>
    %201 = arith.divf %199, %200 : vector<32x1xf32>
    %202 = vector.broadcast %201 : vector<32x1xf32> to vector<32x128xf32>
    %203 = arith.subf %193, %202 : vector<32x128xf32>
    %204 = arith.mulf %203, %203 : vector<32x128xf32>
    %cst_83 = arith.constant dense<0.000000e+00> : vector<32xf32>
    %205 = vector.multi_reduction <add>, %204, %cst_83 [1] : vector<32x128xf32> to vector<32xf32>
    %206 = vector.shape_cast %205 : vector<32xf32> to vector<32x1xf32>
    %cst_84 = arith.constant 1.280000e+02 : f32
    %207 = vector.broadcast %cst_84 : f32 to vector<32x1xf32>
    %208 = arith.divf %206, %207 : vector<32x1xf32>
    %cst_85 = arith.constant 9.99999996E-13 : f32
    %209 = vector.broadcast %cst_85 : f32 to vector<32x1xf32>
    %210 = arith.addf %208, %209 : vector<32x1xf32>
    %211 = math.rsqrt %210 : vector<32x1xf32>
    %212 = vector.broadcast %211 : vector<32x1xf32> to vector<32x128xf32>
    %213 = arith.mulf %203, %212 : vector<32x128xf32>
    %214 = vector.broadcast %195 : vector<1x128xf32> to vector<32x128xf32>
    %215 = arith.mulf %213, %214 : vector<32x128xf32>
    %216 = vector.broadcast %197 : vector<1x128xf32> to vector<32x128xf32>
    %217 = arith.addf %215, %216 : vector<32x128xf32>
    %c1 = arith.constant 1 : index
    %c0_86 = arith.constant 0 : index
    %c0_87 = arith.constant 0 : index
    %218 = vector.load %arg2[%c1, %c0_86, %c0_87] : memref<2x128x384xbf16, #tpu.memory_space<vmem>>, vector<1x128x384xbf16>
    %219 = vector.shape_cast %218 : vector<1x128x384xbf16> to vector<128x384xbf16>
    %c1_88 = arith.constant 1 : index
    %c0_89 = arith.constant 0 : index
    %c0_90 = arith.constant 0 : index
    %220 = vector.load %arg3[%c1_88, %c0_89, %c0_90] : memref<2x1x384xf32, #tpu.memory_space<vmem>>, vector<1x1x384xf32>
    %221 = vector.shape_cast %220 : vector<1x1x384xf32> to vector<1x384xf32>
    %222 = arith.truncf %217 : vector<32x128xf32> to vector<32x128xbf16>
    %cst_91 = arith.constant dense<0.000000e+00> : vector<32x384xf32>
    %223 = tpu.matmul %222, %219, %cst_91 {dimension_numbers = #tpu.dot_dimension_numbers<[1], [0], [0], [1], [0, 0, 1, 1], [], []>} : vector<32x128xbf16>, vector<128x384xbf16>, vector<32x384xf32> -> vector<32x384xf32>
    %224 = vector.broadcast %221 : vector<1x384xf32> to vector<32x384xf32>
    %225 = arith.addf %223, %224 : vector<32x384xf32>
    %226 = vector.extract_strided_slice %225 {offsets = [0, 0], sizes = [32, 128], strides = [1, 1]} : vector<32x384xf32> to vector<32x128xf32>
    %227 = vector.extract_strided_slice %225 {offsets = [0, 128], sizes = [32, 128], strides = [1, 1]} : vector<32x384xf32> to vector<32x128xf32>
    %228 = vector.extract_strided_slice %225 {offsets = [0, 256], sizes = [32, 128], strides = [1, 1]} : vector<32x384xf32> to vector<32x128xf32>
    %229 = vector.extract_strided_slice %27 {offsets = [0, 0], sizes = [1, 16], strides = [1, 1]} : vector<2x16xf32> to vector<1x16xf32>
    %230 = vector.extract_strided_slice %226 {offsets = [0, 0], sizes = [16, 64], strides = [1, 1]} : vector<32x128xf32> to vector<16x64xf32>
    %231 = arith.truncf %230 : vector<16x64xf32> to vector<16x64xbf16>
    %232 = vector.extract_strided_slice %227 {offsets = [0, 0], sizes = [16, 64], strides = [1, 1]} : vector<32x128xf32> to vector<16x64xf32>
    %233 = arith.truncf %232 : vector<16x64xf32> to vector<16x64xbf16>
    %234 = vector.extract_strided_slice %228 {offsets = [0, 0], sizes = [16, 64], strides = [1, 1]} : vector<32x128xf32> to vector<16x64xf32>
    %235 = arith.truncf %234 : vector<16x64xf32> to vector<16x64xbf16>
    %cst_92 = arith.constant dense<0.000000e+00> : vector<16x16xf32>
    %236 = tpu.matmul %231, %233, %cst_92 {dimension_numbers = #tpu.dot_dimension_numbers<[1], [1], [0], [0], [0, 0, 1, 0], [], []>} : vector<16x64xbf16>, vector<16x64xbf16>, vector<16x16xf32> -> vector<16x16xf32>
    %cst_93 = arith.constant 1.250000e-01 : f32
    %237 = vector.broadcast %cst_93 : f32 to vector<16x16xf32>
    %238 = arith.mulf %236, %237 : vector<16x16xf32>
    %239 = vector.broadcast %229 : vector<1x16xf32> to vector<16x16xf32>
    %240 = arith.addf %238, %239 : vector<16x16xf32>
    %cst_94 = arith.constant dense<0xFF800000> : vector<16xf32>
    %241 = vector.multi_reduction <maximumf>, %240, %cst_94 [1] : vector<16x16xf32> to vector<16xf32>
    %242 = vector.shape_cast %241 : vector<16xf32> to vector<16x1xf32>
    %243 = vector.broadcast %242 : vector<16x1xf32> to vector<16x16xf32>
    %244 = arith.subf %240, %243 : vector<16x16xf32>
    %245 = math.exp %244 : vector<16x16xf32>
    %cst_95 = arith.constant dense<0.000000e+00> : vector<16xf32>
    %246 = vector.multi_reduction <add>, %245, %cst_95 [1] : vector<16x16xf32> to vector<16xf32>
    %247 = vector.shape_cast %246 : vector<16xf32> to vector<16x1xf32>
    %248 = tpu.reciprocal %247 {approx = true} : vector<16x1xf32> -> vector<16x1xf32>
    %249 = vector.broadcast %248 : vector<16x1xf32> to vector<16x16xf32>
    %250 = arith.mulf %245, %249 : vector<16x16xf32>
    %251 = arith.truncf %250 : vector<16x16xf32> to vector<16x16xbf16>
    %cst_96 = arith.constant dense<0.000000e+00> : vector<16x64xf32>
    %252 = tpu.matmul %251, %235, %cst_96 {dimension_numbers = #tpu.dot_dimension_numbers<[1], [0], [0], [1], [0, 0, 1, 1], [], []>} : vector<16x16xbf16>, vector<16x64xbf16>, vector<16x64xf32> -> vector<16x64xf32>
    %253 = vector.extract_strided_slice %226 {offsets = [0, 64], sizes = [16, 64], strides = [1, 1]} : vector<32x128xf32> to vector<16x64xf32>
    %254 = arith.truncf %253 : vector<16x64xf32> to vector<16x64xbf16>
    %255 = vector.extract_strided_slice %227 {offsets = [0, 64], sizes = [16, 64], strides = [1, 1]} : vector<32x128xf32> to vector<16x64xf32>
    %256 = arith.truncf %255 : vector<16x64xf32> to vector<16x64xbf16>
    %257 = vector.extract_strided_slice %228 {offsets = [0, 64], sizes = [16, 64], strides = [1, 1]} : vector<32x128xf32> to vector<16x64xf32>
    %258 = arith.truncf %257 : vector<16x64xf32> to vector<16x64xbf16>
    %cst_97 = arith.constant dense<0.000000e+00> : vector<16x16xf32>
    %259 = tpu.matmul %254, %256, %cst_97 {dimension_numbers = #tpu.dot_dimension_numbers<[1], [1], [0], [0], [0, 0, 1, 0], [], []>} : vector<16x64xbf16>, vector<16x64xbf16>, vector<16x16xf32> -> vector<16x16xf32>
    %cst_98 = arith.constant 1.250000e-01 : f32
    %260 = vector.broadcast %cst_98 : f32 to vector<16x16xf32>
    %261 = arith.mulf %259, %260 : vector<16x16xf32>
    %262 = vector.broadcast %229 : vector<1x16xf32> to vector<16x16xf32>
    %263 = arith.addf %261, %262 : vector<16x16xf32>
    %cst_99 = arith.constant dense<0xFF800000> : vector<16xf32>
    %264 = vector.multi_reduction <maximumf>, %263, %cst_99 [1] : vector<16x16xf32> to vector<16xf32>
    %265 = vector.shape_cast %264 : vector<16xf32> to vector<16x1xf32>
    %266 = vector.broadcast %265 : vector<16x1xf32> to vector<16x16xf32>
    %267 = arith.subf %263, %266 : vector<16x16xf32>
    %268 = math.exp %267 : vector<16x16xf32>
    %cst_100 = arith.constant dense<0.000000e+00> : vector<16xf32>
    %269 = vector.multi_reduction <add>, %268, %cst_100 [1] : vector<16x16xf32> to vector<16xf32>
    %270 = vector.shape_cast %269 : vector<16xf32> to vector<16x1xf32>
    %271 = tpu.reciprocal %270 {approx = true} : vector<16x1xf32> -> vector<16x1xf32>
    %272 = vector.broadcast %271 : vector<16x1xf32> to vector<16x16xf32>
    %273 = arith.mulf %268, %272 : vector<16x16xf32>
    %274 = arith.truncf %273 : vector<16x16xf32> to vector<16x16xbf16>
    %cst_101 = arith.constant dense<0.000000e+00> : vector<16x64xf32>
    %275 = tpu.matmul %274, %258, %cst_101 {dimension_numbers = #tpu.dot_dimension_numbers<[1], [0], [0], [1], [0, 0, 1, 1], [], []>} : vector<16x16xbf16>, vector<16x64xbf16>, vector<16x64xf32> -> vector<16x64xf32>
    %276 = tpu.concatenate %252, %275 in 1 : vector<16x64xf32>, vector<16x64xf32> -> vector<16x128xf32>
    %277 = vector.extract_strided_slice %27 {offsets = [1, 0], sizes = [1, 16], strides = [1, 1]} : vector<2x16xf32> to vector<1x16xf32>
    %278 = vector.extract_strided_slice %226 {offsets = [16, 0], sizes = [16, 64], strides = [1, 1]} : vector<32x128xf32> to vector<16x64xf32>
    %279 = arith.truncf %278 : vector<16x64xf32> to vector<16x64xbf16>
    %280 = vector.extract_strided_slice %227 {offsets = [16, 0], sizes = [16, 64], strides = [1, 1]} : vector<32x128xf32> to vector<16x64xf32>
    %281 = arith.truncf %280 : vector<16x64xf32> to vector<16x64xbf16>
    %282 = vector.extract_strided_slice %228 {offsets = [16, 0], sizes = [16, 64], strides = [1, 1]} : vector<32x128xf32> to vector<16x64xf32>
    %283 = arith.truncf %282 : vector<16x64xf32> to vector<16x64xbf16>
    %cst_102 = arith.constant dense<0.000000e+00> : vector<16x16xf32>
    %284 = tpu.matmul %279, %281, %cst_102 {dimension_numbers = #tpu.dot_dimension_numbers<[1], [1], [0], [0], [0, 0, 1, 0], [], []>} : vector<16x64xbf16>, vector<16x64xbf16>, vector<16x16xf32> -> vector<16x16xf32>
    %cst_103 = arith.constant 1.250000e-01 : f32
    %285 = vector.broadcast %cst_103 : f32 to vector<16x16xf32>
    %286 = arith.mulf %284, %285 : vector<16x16xf32>
    %287 = vector.broadcast %277 : vector<1x16xf32> to vector<16x16xf32>
    %288 = arith.addf %286, %287 : vector<16x16xf32>
    %cst_104 = arith.constant dense<0xFF800000> : vector<16xf32>
    %289 = vector.multi_reduction <maximumf>, %288, %cst_104 [1] : vector<16x16xf32> to vector<16xf32>
    %290 = vector.shape_cast %289 : vector<16xf32> to vector<16x1xf32>
    %291 = vector.broadcast %290 : vector<16x1xf32> to vector<16x16xf32>
    %292 = arith.subf %288, %291 : vector<16x16xf32>
    %293 = math.exp %292 : vector<16x16xf32>
    %cst_105 = arith.constant dense<0.000000e+00> : vector<16xf32>
    %294 = vector.multi_reduction <add>, %293, %cst_105 [1] : vector<16x16xf32> to vector<16xf32>
    %295 = vector.shape_cast %294 : vector<16xf32> to vector<16x1xf32>
    %296 = tpu.reciprocal %295 {approx = true} : vector<16x1xf32> -> vector<16x1xf32>
    %297 = vector.broadcast %296 : vector<16x1xf32> to vector<16x16xf32>
    %298 = arith.mulf %293, %297 : vector<16x16xf32>
    %299 = arith.truncf %298 : vector<16x16xf32> to vector<16x16xbf16>
    %cst_106 = arith.constant dense<0.000000e+00> : vector<16x64xf32>
    %300 = tpu.matmul %299, %283, %cst_106 {dimension_numbers = #tpu.dot_dimension_numbers<[1], [0], [0], [1], [0, 0, 1, 1], [], []>} : vector<16x16xbf16>, vector<16x64xbf16>, vector<16x64xf32> -> vector<16x64xf32>
    %301 = vector.extract_strided_slice %226 {offsets = [16, 64], sizes = [16, 64], strides = [1, 1]} : vector<32x128xf32> to vector<16x64xf32>
    %302 = arith.truncf %301 : vector<16x64xf32> to vector<16x64xbf16>
    %303 = vector.extract_strided_slice %227 {offsets = [16, 64], sizes = [16, 64], strides = [1, 1]} : vector<32x128xf32> to vector<16x64xf32>
    %304 = arith.truncf %303 : vector<16x64xf32> to vector<16x64xbf16>
    %305 = vector.extract_strided_slice %228 {offsets = [16, 64], sizes = [16, 64], strides = [1, 1]} : vector<32x128xf32> to vector<16x64xf32>
    %306 = arith.truncf %305 : vector<16x64xf32> to vector<16x64xbf16>
    %cst_107 = arith.constant dense<0.000000e+00> : vector<16x16xf32>
    %307 = tpu.matmul %302, %304, %cst_107 {dimension_numbers = #tpu.dot_dimension_numbers<[1], [1], [0], [0], [0, 0, 1, 0], [], []>} : vector<16x64xbf16>, vector<16x64xbf16>, vector<16x16xf32> -> vector<16x16xf32>
    %cst_108 = arith.constant 1.250000e-01 : f32
    %308 = vector.broadcast %cst_108 : f32 to vector<16x16xf32>
    %309 = arith.mulf %307, %308 : vector<16x16xf32>
    %310 = vector.broadcast %277 : vector<1x16xf32> to vector<16x16xf32>
    %311 = arith.addf %309, %310 : vector<16x16xf32>
    %cst_109 = arith.constant dense<0xFF800000> : vector<16xf32>
    %312 = vector.multi_reduction <maximumf>, %311, %cst_109 [1] : vector<16x16xf32> to vector<16xf32>
    %313 = vector.shape_cast %312 : vector<16xf32> to vector<16x1xf32>
    %314 = vector.broadcast %313 : vector<16x1xf32> to vector<16x16xf32>
    %315 = arith.subf %311, %314 : vector<16x16xf32>
    %316 = math.exp %315 : vector<16x16xf32>
    %cst_110 = arith.constant dense<0.000000e+00> : vector<16xf32>
    %317 = vector.multi_reduction <add>, %316, %cst_110 [1] : vector<16x16xf32> to vector<16xf32>
    %318 = vector.shape_cast %317 : vector<16xf32> to vector<16x1xf32>
    %319 = tpu.reciprocal %318 {approx = true} : vector<16x1xf32> -> vector<16x1xf32>
    %320 = vector.broadcast %319 : vector<16x1xf32> to vector<16x16xf32>
    %321 = arith.mulf %316, %320 : vector<16x16xf32>
    %322 = arith.truncf %321 : vector<16x16xf32> to vector<16x16xbf16>
    %cst_111 = arith.constant dense<0.000000e+00> : vector<16x64xf32>
    %323 = tpu.matmul %322, %306, %cst_111 {dimension_numbers = #tpu.dot_dimension_numbers<[1], [0], [0], [1], [0, 0, 1, 1], [], []>} : vector<16x16xbf16>, vector<16x64xbf16>, vector<16x64xf32> -> vector<16x64xf32>
    %324 = tpu.concatenate %300, %323 in 1 : vector<16x64xf32>, vector<16x64xf32> -> vector<16x128xf32>
    %325 = tpu.concatenate %276, %324 in 0 : vector<16x128xf32>, vector<16x128xf32> -> vector<32x128xf32>
    %c1_112 = arith.constant 1 : index
    %c0_113 = arith.constant 0 : index
    %c0_114 = arith.constant 0 : index
    %326 = vector.load %arg4[%c1_112, %c0_113, %c0_114] : memref<2x128x128xbf16, #tpu.memory_space<vmem>>, vector<1x128x128xbf16>
    %327 = vector.shape_cast %326 : vector<1x128x128xbf16> to vector<128x128xbf16>
    %c1_115 = arith.constant 1 : index
    %c0_116 = arith.constant 0 : index
    %c0_117 = arith.constant 0 : index
    %328 = vector.load %arg5[%c1_115, %c0_116, %c0_117] : memref<2x1x128xf32, #tpu.memory_space<vmem>>, vector<1x1x128xf32>
    %329 = vector.shape_cast %328 : vector<1x1x128xf32> to vector<1x128xf32>
    %330 = arith.truncf %325 : vector<32x128xf32> to vector<32x128xbf16>
    %cst_118 = arith.constant dense<0.000000e+00> : vector<32x128xf32>
    %331 = tpu.matmul %330, %327, %cst_118 {dimension_numbers = #tpu.dot_dimension_numbers<[1], [0], [0], [1], [0, 0, 1, 1], [], []>} : vector<32x128xbf16>, vector<128x128xbf16>, vector<32x128xf32> -> vector<32x128xf32>
    %332 = vector.broadcast %329 : vector<1x128xf32> to vector<32x128xf32>
    %333 = arith.addf %331, %332 : vector<32x128xf32>
    %334 = arith.addf %333, %217 : vector<32x128xf32>
    %c1_119 = arith.constant 1 : index
    %c0_120 = arith.constant 0 : index
    %c0_121 = arith.constant 0 : index
    %335 = vector.load %arg6[%c1_119, %c0_120, %c0_121] : memref<2x1x128xf32, #tpu.memory_space<vmem>>, vector<1x1x128xf32>
    %336 = vector.shape_cast %335 : vector<1x1x128xf32> to vector<1x128xf32>
    %c1_122 = arith.constant 1 : index
    %c0_123 = arith.constant 0 : index
    %c0_124 = arith.constant 0 : index
    %337 = vector.load %arg7[%c1_122, %c0_123, %c0_124] : memref<2x1x128xf32, #tpu.memory_space<vmem>>, vector<1x1x128xf32>
    %338 = vector.shape_cast %337 : vector<1x1x128xf32> to vector<1x128xf32>
    %cst_125 = arith.constant dense<0.000000e+00> : vector<32xf32>
    %339 = vector.multi_reduction <add>, %334, %cst_125 [1] : vector<32x128xf32> to vector<32xf32>
    %340 = vector.shape_cast %339 : vector<32xf32> to vector<32x1xf32>
    %cst_126 = arith.constant 1.280000e+02 : f32
    %341 = vector.broadcast %cst_126 : f32 to vector<32x1xf32>
    %342 = arith.divf %340, %341 : vector<32x1xf32>
    %343 = vector.broadcast %342 : vector<32x1xf32> to vector<32x128xf32>
    %344 = arith.subf %334, %343 : vector<32x128xf32>
    %345 = arith.mulf %344, %344 : vector<32x128xf32>
    %cst_127 = arith.constant dense<0.000000e+00> : vector<32xf32>
    %346 = vector.multi_reduction <add>, %345, %cst_127 [1] : vector<32x128xf32> to vector<32xf32>
    %347 = vector.shape_cast %346 : vector<32xf32> to vector<32x1xf32>
    %cst_128 = arith.constant 1.280000e+02 : f32
    %348 = vector.broadcast %cst_128 : f32 to vector<32x1xf32>
    %349 = arith.divf %347, %348 : vector<32x1xf32>
    %cst_129 = arith.constant 9.99999996E-13 : f32
    %350 = vector.broadcast %cst_129 : f32 to vector<32x1xf32>
    %351 = arith.addf %349, %350 : vector<32x1xf32>
    %352 = math.rsqrt %351 : vector<32x1xf32>
    %353 = vector.broadcast %352 : vector<32x1xf32> to vector<32x128xf32>
    %354 = arith.mulf %344, %353 : vector<32x128xf32>
    %355 = vector.broadcast %336 : vector<1x128xf32> to vector<32x128xf32>
    %356 = arith.mulf %354, %355 : vector<32x128xf32>
    %357 = vector.broadcast %338 : vector<1x128xf32> to vector<32x128xf32>
    %358 = arith.addf %356, %357 : vector<32x128xf32>
    %c1_130 = arith.constant 1 : index
    %c0_131 = arith.constant 0 : index
    %c0_132 = arith.constant 0 : index
    %359 = vector.load %arg8[%c1_130, %c0_131, %c0_132] : memref<2x128x256xbf16, #tpu.memory_space<vmem>>, vector<1x128x256xbf16>
    %360 = vector.shape_cast %359 : vector<1x128x256xbf16> to vector<128x256xbf16>
    %c1_133 = arith.constant 1 : index
    %c0_134 = arith.constant 0 : index
    %c0_135 = arith.constant 0 : index
    %361 = vector.load %arg9[%c1_133, %c0_134, %c0_135] : memref<2x1x256xf32, #tpu.memory_space<vmem>>, vector<1x1x256xf32>
    %362 = vector.shape_cast %361 : vector<1x1x256xf32> to vector<1x256xf32>
    %363 = arith.truncf %358 : vector<32x128xf32> to vector<32x128xbf16>
    %cst_136 = arith.constant dense<0.000000e+00> : vector<32x256xf32>
    %364 = tpu.matmul %363, %360, %cst_136 {dimension_numbers = #tpu.dot_dimension_numbers<[1], [0], [0], [1], [0, 0, 1, 1], [], []>} : vector<32x128xbf16>, vector<128x256xbf16>, vector<32x256xf32> -> vector<32x256xf32>
    %365 = vector.broadcast %362 : vector<1x256xf32> to vector<32x256xf32>
    %366 = arith.addf %364, %365 : vector<32x256xf32>
    %cst_137 = arith.constant 5.000000e-01 : f32
    %367 = vector.broadcast %cst_137 : f32 to vector<32x256xf32>
    %368 = arith.mulf %367, %366 : vector<32x256xf32>
    %cst_138 = arith.constant 0.707106769 : f32
    %369 = vector.broadcast %cst_138 : f32 to vector<32x256xf32>
    %370 = arith.mulf %366, %369 : vector<32x256xf32>
    %371 = math.erf %370 : vector<32x256xf32>
    %cst_139 = arith.constant 1.000000e+00 : f32
    %372 = vector.broadcast %cst_139 : f32 to vector<32x256xf32>
    %373 = arith.addf %372, %371 : vector<32x256xf32>
    %374 = arith.mulf %368, %373 : vector<32x256xf32>
    %c1_140 = arith.constant 1 : index
    %c0_141 = arith.constant 0 : index
    %c0_142 = arith.constant 0 : index
    %375 = vector.load %arg10[%c1_140, %c0_141, %c0_142] : memref<2x256x128xbf16, #tpu.memory_space<vmem>>, vector<1x256x128xbf16>
    %376 = vector.shape_cast %375 : vector<1x256x128xbf16> to vector<256x128xbf16>
    %c1_143 = arith.constant 1 : index
    %c0_144 = arith.constant 0 : index
    %c0_145 = arith.constant 0 : index
    %377 = vector.load %arg11[%c1_143, %c0_144, %c0_145] : memref<2x1x128xf32, #tpu.memory_space<vmem>>, vector<1x1x128xf32>
    %378 = vector.shape_cast %377 : vector<1x1x128xf32> to vector<1x128xf32>
    %379 = arith.truncf %374 : vector<32x256xf32> to vector<32x256xbf16>
    %cst_146 = arith.constant dense<0.000000e+00> : vector<32x128xf32>
    %380 = tpu.matmul %379, %376, %cst_146 {dimension_numbers = #tpu.dot_dimension_numbers<[1], [0], [0], [1], [0, 0, 1, 1], [], []>} : vector<32x256xbf16>, vector<256x128xbf16>, vector<32x128xf32> -> vector<32x128xf32>
    %381 = vector.broadcast %378 : vector<1x128xf32> to vector<32x128xf32>
    %382 = arith.addf %380, %381 : vector<32x128xf32>
    %383 = arith.addf %382, %358 : vector<32x128xf32>
    %c1_147 = arith.constant 1 : index
    %c0_148 = arith.constant 0 : index
    %c0_149 = arith.constant 0 : index
    %384 = vector.load %arg12[%c1_147, %c0_148, %c0_149] : memref<2x1x128xf32, #tpu.memory_space<vmem>>, vector<1x1x128xf32>
    %385 = vector.shape_cast %384 : vector<1x1x128xf32> to vector<1x128xf32>
    %c1_150 = arith.constant 1 : index
    %c0_151 = arith.constant 0 : index
    %c0_152 = arith.constant 0 : index
    %386 = vector.load %arg13[%c1_150, %c0_151, %c0_152] : memref<2x1x128xf32, #tpu.memory_space<vmem>>, vector<1x1x128xf32>
    %387 = vector.shape_cast %386 : vector<1x1x128xf32> to vector<1x128xf32>
    %cst_153 = arith.constant dense<0.000000e+00> : vector<32xf32>
    %388 = vector.multi_reduction <add>, %383, %cst_153 [1] : vector<32x128xf32> to vector<32xf32>
    %389 = vector.shape_cast %388 : vector<32xf32> to vector<32x1xf32>
    %cst_154 = arith.constant 1.280000e+02 : f32
    %390 = vector.broadcast %cst_154 : f32 to vector<32x1xf32>
    %391 = arith.divf %389, %390 : vector<32x1xf32>
    %392 = vector.broadcast %391 : vector<32x1xf32> to vector<32x128xf32>
    %393 = arith.subf %383, %392 : vector<32x128xf32>
    %394 = arith.mulf %393, %393 : vector<32x128xf32>
    %cst_155 = arith.constant dense<0.000000e+00> : vector<32xf32>
    %395 = vector.multi_reduction <add>, %394, %cst_155 [1] : vector<32x128xf32> to vector<32xf32>
    %396 = vector.shape_cast %395 : vector<32xf32> to vector<32x1xf32>
    %cst_156 = arith.constant 1.280000e+02 : f32
    %397 = vector.broadcast %cst_156 : f32 to vector<32x1xf32>
    %398 = arith.divf %396, %397 : vector<32x1xf32>
    %cst_157 = arith.constant 9.99999996E-13 : f32
    %399 = vector.broadcast %cst_157 : f32 to vector<32x1xf32>
    %400 = arith.addf %398, %399 : vector<32x1xf32>
    %401 = math.rsqrt %400 : vector<32x1xf32>
    %402 = vector.broadcast %401 : vector<32x1xf32> to vector<32x128xf32>
    %403 = arith.mulf %393, %402 : vector<32x128xf32>
    %404 = vector.broadcast %385 : vector<1x128xf32> to vector<32x128xf32>
    %405 = arith.mulf %403, %404 : vector<32x128xf32>
    %406 = vector.broadcast %387 : vector<1x128xf32> to vector<32x128xf32>
    %407 = arith.addf %405, %406 : vector<32x128xf32>
    %408 = vector.extract_strided_slice %407 {offsets = [0, 0], sizes = [1, 128], strides = [1, 1]} : vector<32x128xf32> to vector<1x128xf32>
    %409 = vector.extract_strided_slice %407 {offsets = [16, 0], sizes = [1, 128], strides = [1, 1]} : vector<32x128xf32> to vector<1x128xf32>
    %410 = tpu.concatenate %408, %409 in 0 : vector<1x128xf32>, vector<1x128xf32> -> vector<2x128xf32>
    %c0_158 = arith.constant 0 : index
    %c0_159 = arith.constant 0 : index
    %411 = vector.load %arg16[%c0_158, %c0_159] : memref<128x128xbf16, #tpu.memory_space<vmem>>, vector<128x128xbf16>
    %c0_160 = arith.constant 0 : index
    %c0_161 = arith.constant 0 : index
    %412 = vector.load %arg17[%c0_160, %c0_161] : memref<1x128xf32, #tpu.memory_space<vmem>>, vector<1x128xf32>
    %413 = arith.truncf %410 : vector<2x128xf32> to vector<2x128xbf16>
    %cst_162 = arith.constant dense<0.000000e+00> : vector<2x128xf32>
    %414 = tpu.matmul %413, %411, %cst_162 {dimension_numbers = #tpu.dot_dimension_numbers<[1], [0], [0], [1], [0, 0, 1, 1], [], []>} : vector<2x128xbf16>, vector<128x128xbf16>, vector<2x128xf32> -> vector<2x128xf32>
    %415 = vector.broadcast %412 : vector<1x128xf32> to vector<2x128xf32>
    %416 = arith.addf %414, %415 : vector<2x128xf32>
    %c0_163 = arith.constant 0 : index
    %c0_164 = arith.constant 0 : index
    %417 = vector.load %arg18[%c0_163, %c0_164] : memref<2x128xf32, #tpu.memory_space<vmem>>, vector<2x128xf32>
    tpu.vector_store %arg18[%c0_163, %c0_164], %416 {strides = array<i32>} : memref<2x128xf32, #tpu.memory_space<vmem>>, vector<2x128xf32>,
    return
  }
}

</mosaic_0001>

<llo_original>
// kernel: forward.1
$region0: #{forward.1}
  #allocation0 [shape = 'u32[]', space=smem, size = 0x4, offset = 0x4, fixed_abs, tag = 'smem constant byte address 0x4 - core index']
  #allocation1 [shape = 'u32[144,128]{1,0:T(1,128)}', space=vmem, size = 0x12000, scoped, tag = 'internal scratch']
  %s0 = inlined_call_operand.vmem [shape: f32[32,128], index: 0, kind: input, shape index: {}]
  %s1 = inlined_call_operand.vmem [shape: f32[2,16], index: 1, kind: input, shape index: {}]
  %s2 = inlined_call_operand.vmem [shape: bf16[2,128,384], index: 2, kind: input, shape index: {}]
  %s3 = inlined_call_operand.vmem [shape: f32[2,1,384], index: 3, kind: input, shape index: {}]
  %s4 = inlined_call_operand.vmem [shape: bf16[2,128,128], index: 4, kind: input, shape index: {}]
  %s5 = inlined_call_operand.vmem [shape: f32[2,1,128], index: 5, kind: input, shape index: {}]
  %s6 = inlined_call_operand.vmem [shape: f32[2,1,128], index: 6, kind: input, shape index: {}]
  %s7 = inlined_call_operand.vmem [shape: f32[2,1,128], index: 7, kind: input, shape index: {}]
  %s8 = inlined_call_operand.vmem [shape: bf16[2,128,256], index: 8, kind: input, shape index: {}]
  %s9 = inlined_call_operand.vmem [shape: f32[2,1,256], index: 9, kind: input, shape index: {}]
  %s10 = inlined_call_operand.hbm [shape: bf16[2,256,128], index: 10, kind: input, shape index: {}]
  %s11 = inlined_call_operand.vmem [shape: f32[2,1,128], index: 11, kind: input, shape index: {}]
  %s12 = inlined_call_operand.vmem [shape: f32[2,1,128], index: 12, kind: input, shape index: {}]
  %s13 = inlined_call_operand.vmem [shape: f32[2,1,128], index: 13, kind: input, shape index: {}]
  %s14 = inlined_call_operand.vmem [shape: f32[1,128], index: 14, kind: input, shape index: {}]
  %s15 = inlined_call_operand.vmem [shape: f32[1,128], index: 15, kind: input, shape index: {}]
  %s16 = inlined_call_operand.hbm [shape: bf16[128,128], index: 16, kind: input, shape index: {}]
  %s17 = inlined_call_operand.vmem [shape: f32[1,128], index: 17, kind: input, shape index: {}]
  %s18 = inlined_call_operand.hbm [shape: f32[2,128], index: 18, kind: output, shape index: {}]
  %s19 = sld [smem:[#allocation0]]
  $region90: #{forward.1} parent=0
    _
  %s21 = ssub.s32 1, %s19
  %s22 = scalar_select 0, %s21, %s19
  $region1: #{forward.1} parent=0
    #allocation2 [shape = 'u8[131072]{0}', space=vmem, size = 0x20000, scoped, tag = 'input window, operand 10, single buffered']
    #allocation3 [shape = 's32[1]{0}', space=sflag, size = 0x4, scoped, tag = 'scoped memory for forward.1']
    #allocation4 [shape = 's32[1]{0}', space=sflag, size = 0x4, scoped, tag = 'scoped memory for forward.1']
    #allocation5 [shape = 'u8[32768]{0}', space=vmem, size = 0x8000, scoped, tag = 'input window, operand 16, single buffered']
    #allocation6 [shape = 's32[1]{0}', space=sflag, size = 0x4, scoped, tag = 'scoped memory for forward.1']
    #allocation7 [shape = 'u8[1024]{0}', space=vmem, size = 0x400, scoped, tag = 'output window, operand 0, single buffered']
    %23 = vsyncpa [#allocation3], 0
    %24 = vsyncpa [#allocation6], 0
    %25 = vsyncpa [#allocation4], 0
    // Predicated region
    $region2: #{forward.1} parent=1 // pred_check
      _
    $region3: #{forward.1} parent=1 // pred_check_branch
      %27 = sbr.rel (0) target = $region5
    $region4: #{forward.1} parent=1 // pred_region
      _
    $region5: #{forward.1} parent=1 // pred_fallthru
      _
    // Predicated region
    $region6: #{forward.1} parent=1 // pred_check
      _
    $region7: #{forward.1} parent=1 // pred_check_branch
      %29 = sbr.rel (0) target = $region9
    $region8: #{forward.1} parent=1 // pred_region
      _
    $region9: #{forward.1} parent=1 // pred_fallthru
      _
    // Predicated region
    $region10: #{forward.1} parent=1 // pred_check
      _
    $region11: #{forward.1} parent=1 // pred_check_branch
      %31 = sbr.rel (0) target = $region13
    $region12: #{forward.1} parent=1 // pred_region
      _
    $region13: #{forward.1} parent=1 // pred_fallthru
      _
    // Predicated region
    $region14: #{forward.1} parent=1 // pred_check
      _
    $region15: #{forward.1} parent=1 // pred_check_branch
      %33 = sbr.rel (0) target = $region17
    $region16: #{forward.1} parent=1 // pred_region
      _
    $region17: #{forward.1} parent=1 // pred_fallthru
      _
    // Predicated region
    $region18: #{forward.1} parent=1 // pred_check
      _
    $region19: #{forward.1} parent=1 // pred_check_branch
      %35 = sbr.rel (0) target = $region21
    $region20: #{forward.1} parent=1 // pred_region
      _
    $region21: #{forward.1} parent=1 // pred_fallthru
      _
    // Predicated region
    $region22: #{forward.1} parent=1 // pred_check
      _
    $region23: #{forward.1} parent=1 // pred_check_branch
      %37 = sbr.rel (0) target = $region25
    $region24: #{forward.1} parent=1 // pred_region
      _
    $region25: #{forward.1} parent=1 // pred_fallthru
      _
    // Predicated region
    $region26: #{forward.1} parent=1 // pred_check
      _
    $region27: #{forward.1} parent=1 // pred_check_branch
      %39 = sbr.rel (0) target = $region29
    $region28: #{forward.1} parent=1 // pred_region
      _
    $region29: #{forward.1} parent=1 // pred_fallthru
      _
    // Predicated region
    $region30: #{forward.1} parent=1 // pred_check
      _
    $region31: #{forward.1} parent=1 // pred_check_branch
      %41 = sbr.rel (0) target = $region33
    $region32: #{forward.1} parent=1 // pred_region
      _
    $region33: #{forward.1} parent=1 // pred_fallthru
      _
    // Predicated region
    $region34: #{forward.1} parent=1 // pred_check
      _
    $region35: #{forward.1} parent=1 // pred_check_branch
      %43 = sbr.rel (0) target = $region37
    $region36: #{forward.1} parent=1 // pred_region
      _
    $region37: #{forward.1} parent=1 // pred_fallthru
      _
    // Predicated region
    $region38: #{forward.1} parent=1 // pred_check
      _
    $region39: #{forward.1} parent=1 // pred_check_branch
      %45 = sbr.rel (0) target = $region41
    $region40: #{forward.1} parent=1 // pred_region
      _
    $region41: #{forward.1} parent=1 // pred_fallthru
      _
    // Predicated region
    $region42: #{forward.1} parent=1 // pred_check
      _
    $region43: #{forward.1} parent=1 // pred_check_branch
      %47 = sbr.rel (0) target = $region45
    $region44: #{forward.1} parent=1 // pred_region
      %s49 = ssub.s32 4096, 4096
      %50 = vsyncadd [#allocation3], %s49
      %s51 = sshll.u32 [#allocation2], 4
      %s52 = int_to_ptr.vmem [resolvable:$true] %s51
      %57 = dma.hbm_to_vmem [thread:$0]  %s10, 4096, %s52, [#allocation3], 64, 64, 4
    $region45: #{forward.1} parent=1 // pred_fallthru
      _
    // Predicated region
    $region46: #{forward.1} parent=1 // pred_check
      _
    $region47: #{forward.1} parent=1 // pred_check_branch
      %59 = sbr.rel (0) target = $region49
    $region48: #{forward.1} parent=1 // pred_region
      _
    $region49: #{forward.1} parent=1 // pred_fallthru
      _
    // Predicated region
    $region50: #{forward.1} parent=1 // pred_check
      _
    $region51: #{forward.1} parent=1 // pred_check_branch
      %61 = sbr.rel (0) target = $region53
    $region52: #{forward.1} parent=1 // pred_region
      _
    $region53: #{forward.1} parent=1 // pred_fallthru
      _
    // Predicated region
    $region54: #{forward.1} parent=1 // pred_check
      _
    $region55: #{forward.1} parent=1 // pred_check_branch
      %63 = sbr.rel (0) target = $region57
    $region56: #{forward.1} parent=1 // pred_region
      _
    $region57: #{forward.1} parent=1 // pred_fallthru
      _
    // Predicated region
    $region58: #{forward.1} parent=1 // pred_check
      _
    $region59: #{forward.1} parent=1 // pred_check_branch
      %65 = sbr.rel (0) target = $region61
    $region60: #{forward.1} parent=1 // pred_region
      _
    $region61: #{forward.1} parent=1 // pred_fallthru
      _
    // Predicated region
    $region62: #{forward.1} parent=1 // pred_check
      _
    $region63: #{forward.1} parent=1 // pred_check_branch
      %67 = sbr.rel (0) target = $region65
    $region64: #{forward.1} parent=1 // pred_region
      _
    $region65: #{forward.1} parent=1 // pred_fallthru
      _
    // Predicated region
    $region66: #{forward.1} parent=1 // pred_check
      _
    $region67: #{forward.1} parent=1 // pred_check_branch
      %69 = sbr.rel (0) target = $region69
    $region68: #{forward.1} parent=1 // pred_region
      %s71 = ssub.s32 1024, 1024
      %72 = vsyncadd [#allocation6], %s71
      %s73 = sshll.u32 [#allocation5], 4
      %s74 = int_to_ptr.vmem [resolvable:$true] %s73
      %79 = dma.hbm_to_vmem [thread:$0]  %s16, 1024, %s74, [#allocation6], 64, 64, 4
    $region69: #{forward.1} parent=1 // pred_fallthru
      _
    // Predicated region
    $region70: #{forward.1} parent=1 // pred_check
      _
    $region71: #{forward.1} parent=1 // pred_check_branch
      %81 = sbr.rel (0) target = $region73
    $region72: #{forward.1} parent=1 // pred_region
      _
    $region73: #{forward.1} parent=1 // pred_fallthru
      _
    // Predicated region
    $region74: #{forward.1} parent=1 // pred_check
      _
    $region75: #{forward.1} parent=1 // pred_check_branch
      %83 = sbr.rel (0) target = $region77
    $region76: #{forward.1} parent=1 // pred_region
      %84 = dma.done [#allocation3], 4096
    $region77: #{forward.1} parent=1 // pred_fallthru
      _
    // Predicated region
    $region78: #{forward.1} parent=1 // pred_check
      _
    $region79: #{forward.1} parent=1 // pred_check_branch
      %86 = sbr.rel (0) target = $region81
    $region80: #{forward.1} parent=1 // pred_region
      %87 = dma.done [#allocation6], 1024
    $region81: #{forward.1} parent=1 // pred_fallthru
      _
    %v89 = vld [vmem:[%s0] sm:$0xff]
    %v90 = vld [vmem:[%s0 + $0x8] sm:$0xff]
    %v91 = vld [vmem:[%s0 + $0x10] sm:$0xff]
    %v92 = vld [vmem:[%s0 + $0x18] sm:$0xff]
    %v93 = vld [vmem:[%s14] sm:$0x1]
    %v94 = vld [vmem:[%s15] sm:$0x1]
    %95 = vadd.xlane.f32.xlu0 %v89
    %v96 = vpop.xlane.xlu0 %95
    %97 = vadd.xlane.f32.xlu0 %v90
    %v98 = vpop.xlane.xlu0 %97
    %99 = vadd.xlane.f32.xlu0 %v91
    %v100 = vpop.xlane.xlu0 %99
    %101 = vadd.xlane.f32.xlu0 %v92
    %v102 = vpop.xlane.xlu0 %101
    %v103 = vrcp.pop 128.0
    %v104 = vmul.f32 %v96, %v103
    %v105 = vmul.f32 %v98, %v103
    %v106 = vmul.f32 %v100, %v103
    %v107 = vmul.f32 %v102, %v103
    %v108 = vsub.f32 %v89, %v104
    %v109 = vsub.f32 %v90, %v105
    %v110 = vsub.f32 %v91, %v106
    %v111 = vsub.f32 %v92, %v107
    %v112 = vmul.f32 %v108, %v108
    %v113 = vmul.f32 %v109, %v109
    %v114 = vmul.f32 %v110, %v110
    %v115 = vmul.f32 %v111, %v111
    %116 = vadd.xlane.f32.xlu0 %v112
    %v117 = vpop.xlane.xlu0 %116
    %118 = vadd.xlane.f32.xlu0 %v113
    %v119 = vpop.xlane.xlu0 %118
    %120 = vadd.xlane.f32.xlu0 %v114
    %v121 = vpop.xlane.xlu0 %120
    %122 = vadd.xlane.f32.xlu0 %v115
    %v123 = vpop.xlane.xlu0 %122
    %v124 = vmul.f32 %v117, %v103
    %v125 = vmul.f32 %v119, %v103
    %v126 = vmul.f32 %v121, %v103
    %v127 = vmul.f32 %v123, %v103
    %v128 = vadd.f32 %v124, 1e-12
    %v129 = vadd.f32 %v125, 1e-12
    %v130 = vadd.f32 %v126, 1e-12
    %v131 = vadd.f32 %v127, 1e-12
    %v132 = vrsqrt.pop %v128
    %v133 = vrsqrt.pop %v129
    %v134 = vrsqrt.pop %v130
    %v135 = vrsqrt.pop %v131
    %v136 = vmul.f32 %v108, %v132
    %v137 = vmul.f32 %v109, %v133
    %v138 = vmul.f32 %v110, %v134
    %v139 = vmul.f32 %v111, %v135
    %v141 = vlaneseq
    %v142 = vshrl.u32 %v141, 7
    %v143 = vsub.s32 0, %v142
    %v144 = vrot.slane %v93, %v143
    %v146 = vmul.f32 %v136, %v144
    %v147 = vmul.f32 %v137, %v144
    %v148 = vmul.f32 %v138, %v144
    %v149 = vmul.f32 %v139, %v144
    %v151 = vlaneseq
    %v152 = vshrl.u32 %v151, 7
    %v153 = vsub.s32 0, %v152
    %v154 = vrot.slane %v94, %v153
    %v156 = vadd.f32 %v146, %v154
    %v157 = vadd.f32 %v147, %v154
    %v158 = vadd.f32 %v148, %v154
    %v159 = vadd.f32 %v149, %v154
    %v160 = vld [vmem:[%s1] sm:$0x3]
    %v161 = vsub.f32 1.0, %v160
    %v162 = vmul.f32 %v161, -10000.0
    %v163 = vld [vmem:[%s2] sm:$0xff]
    %v164 = vld [vmem:[%s2 + $0x8] sm:$0xf]
    %v165 = vld [vmem:[%s2 + $0xc] sm:$0xff]
    %v166 = vld [vmem:[%s2 + $0x14] sm:$0xf]
    %v167 = vld [vmem:[%s2 + $0x18] sm:$0xff]
    %v168 = vld [vmem:[%s2 + $0x20] sm:$0xf]
    %v169 = vld [vmem:[%s2 + $0x24] sm:$0xff]
    %v170 = vld [vmem:[%s2 + $0x2c] sm:$0xf]
    %v171 = vld [vmem:[%s2 + $0x30] sm:$0xff]
    %v172 = vld [vmem:[%s2 + $0x38] sm:$0xf]
    %v173 = vld [vmem:[%s2 + $0x3c] sm:$0xff]
    %v174 = vld [vmem:[%s2 + $0x44] sm:$0xf]
    %v175 = vld [vmem:[%s2 + $0x48] sm:$0xff]
    %v176 = vld [vmem:[%s2 + $0x50] sm:$0xf]
    %v177 = vld [vmem:[%s2 + $0x54] sm:$0xff]
    %v178 = vld [vmem:[%s2 + $0x5c] sm:$0xf]
    %v179 = vld [vmem:[%s2 + $0x60] sm:$0xff]
    %v180 = vld [vmem:[%s2 + $0x68] sm:$0xf]
    %v181 = vld [vmem:[%s2 + $0x6c] sm:$0xff]
    %v182 = vld [vmem:[%s2 + $0x74] sm:$0xf]
    %v183 = vld [vmem:[%s2 + $0x78] sm:$0xff]
    %v184 = vld [vmem:[%s2 + $0x80] sm:$0xf]
    %v185 = vld [vmem:[%s2 + $0x84] sm:$0xff]
    %v186 = vld [vmem:[%s2 + $0x8c] sm:$0xf]
    %v187 = vld [vmem:[%s2 + $0x90] sm:$0xff]
    %v188 = vld [vmem:[%s2 + $0x98] sm:$0xf]
    %v189 = vld [vmem:[%s2 + $0x9c] sm:$0xff]
    %v190 = vld [vmem:[%s2 + $0xa4] sm:$0xf]
    %v191 = vld [vmem:[%s2 + $0xa8] sm:$0xff]
    %v192 = vld [vmem:[%s2 + $0xb0] sm:$0xf]
    %v193 = vld [vmem:[%s2 + $0xb4] sm:$0xff]
    %v194 = vld [vmem:[%s2 + $0xbc] sm:$0xf]
    %v195 = vld [vmem:[%s3] sm:$0x7]
    %v196 = vpack.c.bf16 %v157, %v156
    %v197 = vpack.c.bf16 %v159, %v158
    %v199 = vlaneseq
    %v200 = vshrl.u32 %v199, 7
    %v201 = vsub.s32 0, %v200
    %v202 = vrot.slane %v195, %v201
    %v203 = vlaneseq
    %v204 = vshrl.u32 %v203, 7
    %v205 = vsub.s32 1, %v204
    %v206 = vrot.slane %v195, %v205
    %v207 = vlaneseq
    %v208 = vshrl.u32 %v207, 7
    %v209 = vsub.s32 2, %v208
    %v210 = vrot.slane %v195, %v209
    %v246 = vunpack.c.l.b16 %v163
    %v247 = vunpack.c.h.b16 %v163
    %v248 = vunpack.c.l.b16 %v164
    %v249 = vunpack.c.l.b16 %v165
    %v250 = vunpack.c.h.b16 %v165
    %v251 = vunpack.c.l.b16 %v166
    %v252 = vunpack.c.l.b16 %v167
    %v253 = vunpack.c.h.b16 %v167
    %v254 = vunpack.c.l.b16 %v168
    %v255 = vunpack.c.l.b16 %v169
    %v256 = vunpack.c.h.b16 %v169
    %v257 = vunpack.c.l.b16 %v170
    %v258 = vunpack.c.l.b16 %v171
    %v259 = vunpack.c.h.b16 %v171
    %v260 = vunpack.c.l.b16 %v172
    %v261 = vunpack.c.l.b16 %v173
    %v262 = vunpack.c.h.b16 %v173
    %v263 = vunpack.c.l.b16 %v174
    %v264 = vunpack.c.l.b16 %v175
    %v265 = vunpack.c.h.b16 %v175
    %v266 = vunpack.c.l.b16 %v176
    %v267 = vunpack.c.l.b16 %v177
    %v268 = vunpack.c.h.b16 %v177
    %v269 = vunpack.c.l.b16 %v178
    %v270 = vunpack.c.l.b16 %v179
    %v271 = vunpack.c.h.b16 %v179
    %v272 = vunpack.c.l.b16 %v180
    %v273 = vunpack.c.l.b16 %v181
    %v274 = vunpack.c.h.b16 %v181
    %v275 = vunpack.c.l.b16 %v182
    %v276 = vunpack.c.l.b16 %v183
    %v277 = vunpack.c.h.b16 %v183
    %v278 = vunpack.c.l.b16 %v184
    %v279 = vunpack.c.l.b16 %v185
    %v280 = vunpack.c.h.b16 %v185
    %v281 = vunpack.c.l.b16 %v186
    %v282 = vunpack.c.l.b16 %v187
    %v283 = vunpack.c.h.b16 %v187
    %v284 = vunpack.c.l.b16 %v188
    %v285 = vunpack.c.l.b16 %v189
    %v286 = vunpack.c.h.b16 %v189
    %v287 = vunpack.c.l.b16 %v190
    %v288 = vunpack.c.l.b16 %v191
    %v289 = vunpack.c.h.b16 %v191
    %v290 = vunpack.c.l.b16 %v192
    %v291 = vunpack.c.l.b16 %v193
    %v292 = vunpack.c.h.b16 %v193
    %v293 = vunpack.c.l.b16 %v194
    %v294 = vpack.c.b16 %v249, %v246
    %v295 = vpack.c.b16 %v250, %v247
    %v296 = vpack.c.b16 %v251, %v248
    %v297 = vpack.c.b16 %v255, %v252
    %v298 = vpack.c.b16 %v256, %v253
    %v299 = vpack.c.b16 %v257, %v254
    %v300 = vpack.c.b16 %v261, %v258
    %v301 = vpack.c.b16 %v262, %v259
    %v302 = vpack.c.b16 %v263, %v260
    %v303 = vpack.c.b16 %v267, %v264
    %v304 = vpack.c.b16 %v268, %v265
    %v305 = vpack.c.b16 %v269, %v266
    %v306 = vpack.c.b16 %v273, %v270
    %v307 = vpack.c.b16 %v274, %v271
    %v308 = vpack.c.b16 %v275, %v272
    %v309 = vpack.c.b16 %v279, %v276
    %v310 = vpack.c.b16 %v280, %v277
    %v311 = vpack.c.b16 %v281, %v278
    %v312 = vpack.c.b16 %v285, %v282
    %v313 = vpack.c.b16 %v286, %v283
    %v314 = vpack.c.b16 %v287, %v284
    %v315 = vpack.c.b16 %v291, %v288
    %v316 = vpack.c.b16 %v292, %v289
    %v317 = vpack.c.b16 %v293, %v290
    %342 = vmatprep.subr.bf16.mxu0 %v295
    %343 = vmatpush1.bf16.msra.mxu0 %v294
    %344 = vmatprep.subr.bf16.mxu0 %v298
    %345 = vmatpush1.bf16.msra.mxu0 %v297
    %346 = vmatprep.subr.bf16.mxu0 %v301
    %347 = vmatpush1.bf16.msra.mxu0 %v300
    %348 = vmatprep.subr.bf16.mxu0 %v304
    %349 = vmatpush1.bf16.msra.mxu0 %v303
    %350 = vmatprep.subr.bf16.mxu0 %v307
    %351 = vmatpush1.bf16.msra.mxu0 %v306
    %352 = vmatprep.subr.bf16.mxu0 %v310
    %353 = vmatpush1.bf16.msra.mxu0 %v309
    %354 = vmatprep.subr.bf16.mxu0 %v313
    %355 = vmatpush1.bf16.msra.mxu0 %v312
    %356 = vmatprep.subr.bf16.mxu0 %v316
    %357 = vmatpush1.bf16.msra.mxu0 %v315
    %358 = vmatprep.subr.bf16.mxu0 0
    %359 = vmatpush1.bf16.msra.mxu0 0
    %360 = vmatprep.subr.bf16.mxu0 0
    %361 = vmatpush1.bf16.msra.mxu0 0
    %362 = vmatprep.subr.bf16.mxu0 0
    %363 = vmatpush1.bf16.msra.mxu0 0
    %364 = vmatprep.subr.bf16.mxu0 0
    %365 = vmatpush1.bf16.msra.mxu0 0
    %366 = vmatprep.subr.bf16.mxu0 0
    %367 = vmatpush1.bf16.msra.mxu0 0
    %368 = vmatprep.subr.bf16.mxu0 0
    %369 = vmatpush1.bf16.msra.mxu0 0
    %370 = vmatprep.subr.bf16.mxu0 0
    %371 = vmatpush1.bf16.msra.mxu0 0
    %372 = vmatprep.subr.bf16.mxu0 0
    %373 = vmatpush1.bf16.msra.mxu0 0
    %374 = vmatprep.mubr.bf16.mxu0 0
    %375 = vmatmul.mubr.bf16.gmra.mrb[0].mxu0 %v196
    %v376 = vpop.f32.mrb[0].mxu0
    %v377 = vadd.f32 %v202, %v376
    %v378 = vpop.f32.mrb[0].mxu0
    %v379 = vadd.f32 %v206, %v378
    %v380 = vpop.f32.mrb[0].mxu0
    %v381 = vadd.f32 %v202, %v380
    %v382 = vpop.f32.mrb[0].mxu0
    %v383 = vadd.f32 %v206, %v382
    %384 = vmatprep.mubr.bf16.mxu0 0
    %385 = vmatmul.mubr.bf16.gmra.mrb[0].mxu0 %v197
    %v386 = vpop.f32.mrb[0].mxu0
    %v387 = vadd.f32 %v202, %v386
    %v388 = vpop.f32.mrb[0].mxu0
    %v389 = vadd.f32 %v206, %v388
    %v390 = vpop.f32.mrb[0].mxu0
    %v391 = vadd.f32 %v202, %v390
    %v392 = vpop.f32.mrb[0].mxu0
    %v393 = vadd.f32 %v206, %v392
    %394 = vdwg.mxu0
    %395 = vmatprep.subr.bf16.mxu0 0
    %396 = vmatpush1.bf16.msra.mxu0 %v296
    %397 = vmatprep.subr.bf16.mxu0 0
    %398 = vmatpush1.bf16.msra.mxu0 %v299
    %399 = vmatprep.subr.bf16.mxu0 0
    %400 = vmatpush1.bf16.msra.mxu0 %v302
    %401 = vmatprep.subr.bf16.mxu0 0
    %402 = vmatpush1.bf16.msra.mxu0 %v305
    %403 = vmatprep.subr.bf16.mxu0 0
    %404 = vmatpush1.bf16.msra.mxu0 %v308
    %405 = vmatprep.subr.bf16.mxu0 0
    %406 = vmatpush1.bf16.msra.mxu0 %v311
    %407 = vmatprep.subr.bf16.mxu0 0
    %408 = vmatpush1.bf16.msra.mxu0 %v314
    %409 = vmatprep.subr.bf16.mxu0 0
    %410 = vmatpush1.bf16.msra.mxu0 %v317
    %411 = vmatprep.subr.bf16.mxu0 0
    %412 = vmatpush1.bf16.msra.mxu0 0
    %413 = vmatprep.subr.bf16.mxu0 0
    %414 = vmatpush1.bf16.msra.mxu0 0
    %415 = vmatprep.subr.bf16.mxu0 0
    %416 = vmatpush1.bf16.msra.mxu0 0
    %417 = vmatprep.subr.bf16.mxu0 0
    %418 = vmatpush1.bf16.msra.mxu0 0
    %419 = vmatprep.subr.bf16.mxu0 0
    %420 = vmatpush1.bf16.msra.mxu0 0
    %421 = vmatprep.subr.bf16.mxu0 0
    %422 = vmatpush1.bf16.msra.mxu0 0
    %423 = vmatprep.subr.bf16.mxu0 0
    %424 = vmatpush1.bf16.msra.mxu0 0
    %425 = vmatprep.subr.bf16.mxu0 0
    %426 = vmatpush1.bf16.msra.mxu0 0
    %427 = vmatprep.mubr.bf16.mxu0 0
    %428 = vmatmul.mubr.bf16.gmra.mrb[0].mxu0 %v196
    %v429 = vpop.f32.mrb[0].mxu0
    %v430 = vadd.f32 %v210, %v429
    %v431 = vpop.f32.mrb[0].mxu0
    %v432 = vpop.f32.mrb[0].mxu0
    %v433 = vadd.f32 %v210, %v432
    %v434 = vpop.f32.mrb[0].mxu0
    %435 = vmatprep.mubr.bf16.mxu0 0
    %436 = vmatmul.mubr.bf16.gmra.mrb[0].mxu0 %v197
    %v437 = vpop.f32.mrb[0].mxu0
    %v438 = vadd.f32 %v210, %v437
    %v439 = vpop.f32.mrb[0].mxu0
    %v440 = vpop.f32.mrb[0].mxu0
    %v441 = vadd.f32 %v210, %v440
    %v442 = vpop.f32.mrb[0].mxu0
    %443 = vdwg.mxu0
    %v444 = vpack.c.bf16 %v381, %v377
    %v445 = vpack.c.bf16 %v383, %v379
    %v446 = vpack.c.bf16 %v433, %v430
    %vm447 = vcmask 523264
    %v449 = vsel %vm447, %v444, 0
    %v452 = vsel %vm447, %v445, 0
    %454 = vmatprep.subr.bf16.mxu0 0
    %455 = vmatpush1.bf16.xpose.msra.mxu0 %v452
    %456 = vmatprep.subr.bf16.mxu0 0
    %457 = vmatpush1.bf16.xpose.msra.mxu0 0
    %458 = vmatprep.subr.bf16.mxu0 0
    %459 = vmatpush1.bf16.xpose.msra.mxu0 0
    %460 = vmatprep.subr.bf16.mxu0 0
    %461 = vmatpush1.bf16.xpose.msra.mxu0 0
    %462 = vmatprep.subr.bf16.mxu0 0
    %463 = vmatpush1.bf16.xpose.msra.mxu0 0
    %464 = vmatprep.subr.bf16.mxu0 0
    %465 = vmatpush1.bf16.xpose.msra.mxu0 0
    %466 = vmatprep.subr.bf16.mxu0 0
    %467 = vmatpush1.bf16.xpose.msra.mxu0 0
    %468 = vmatprep.subr.bf16.mxu0 0
    %469 = vmatpush1.bf16.xpose.msra.mxu0 0
    %470 = vmatprep.subr.bf16.mxu0 0
    %471 = vmatpush1.bf16.xpose.msra.mxu0 0
    %472 = vmatprep.subr.bf16.mxu0 0
    %473 = vmatpush1.bf16.xpose.msra.mxu0 0
    %474 = vmatprep.subr.bf16.mxu0 0
    %475 = vmatpush1.bf16.xpose.msra.mxu0 0
    %476 = vmatprep.subr.bf16.mxu0 0
    %477 = vmatpush1.bf16.xpose.msra.mxu0 0
    %478 = vmatprep.subr.bf16.mxu0 0
    %479 = vmatpush1.bf16.xpose.msra.mxu0 0
    %480 = vmatprep.subr.bf16.mxu0 0
    %481 = vmatpush1.bf16.xpose.msra.mxu0 0
    %482 = vmatprep.subr.bf16.mxu0 0
    %483 = vmatpush1.bf16.xpose.msra.mxu0 0
    %484 = vmatprep.subr.bf16.mxu0 0
    %485 = vmatpush1.bf16.xpose.msra.mxu0 0
    %486 = vmatprep.mubr.bf16.mxu0 0
    %487 = vmatmul.mubr.bf16.gmra.mrb[0].mxu0 %v449
    %v488 = vpop.f32.mrb[0].mxu0
    %v489 = vadd.f32 0.0, %v488
    %v490 = vpop.f32.mrb[0].mxu0
    %v491 = vpop.f32.mrb[0].mxu0
    %v492 = vadd.f32 0.0, %v491
    %v493 = vpop.f32.mrb[0].mxu0
    %494 = vdwg.mxu0
    %v495 = vmul.f32 %v489, 0.125
    %v496 = vmul.f32 %v492, 0.125
    %v497 = vlaneseq
    %v498 = vshrl.u32 %v497, 7
    %v499 = vsub.s32 0, %v498
    %v500 = vrot.slane %v162, %v499
    %v501 = vadd.f32 %v495, %v500
    %v502 = vadd.f32 %v496, %v500
    %vm503 = vcmask 130048
    %v504 = vsel %vm503, %v501, -inf
    %505 = vmax.xlane.f32.xlu0 %v504
    %v506 = vpop.xlane.xlu0 %505
    %v507 = vsel %vm503, %v502, -inf
    %508 = vmax.xlane.f32.xlu0 %v507
    %v509 = vpop.xlane.xlu0 %508
    %v510 = vsub.f32 %v501, %v506
    %v511 = vsub.f32 %v502, %v509
    %v512 = vmul.f32 %v510, 1.442695
    %v513 = vpow.pop %v512
    %v514 = vmul.f32 %v511, 1.442695
    %v515 = vpow.pop %v514
    %v516 = vsel %vm503, %v513, 0.0
    %517 = vadd.xlane.f32.xlu0 %v516
    %v518 = vpop.xlane.xlu0 %517
    %v519 = vsel %vm503, %v515, 0.0
    %520 = vadd.xlane.f32.xlu0 %v519
    %v521 = vpop.xlane.xlu0 %520
    %v522 = vrcp.pop %v518
    %v523 = vrcp.pop %v521
    %v524 = vmul.f32 %v513, %v522
    %v525 = vmul.f32 %v515, %v523
    %v526 = vpack.c.bf16 %v525, %v524
    %v528 = vsel %vm503, %v526, 0
    %530 = vmatprep.subr.bf16.mxu0 0
    %531 = vmatpush1.bf16.msra.mxu0 %v446
    %532 = vmatprep.subr.bf16.mxu0 0
    %533 = vmatpush1.bf16.msra.mxu0 0
    %534 = vmatprep.subr.bf16.mxu0 0
    %535 = vmatpush1.bf16.msra.mxu0 0
    %536 = vmatprep.subr.bf16.mxu0 0
    %537 = vmatpush1.bf16.msra.mxu0 0
    %538 = vmatprep.subr.bf16.mxu0 0
    %539 = vmatpush1.bf16.msra.mxu0 0
    %540 = vmatprep.subr.bf16.mxu0 0
    %541 = vmatpush1.bf16.msra.mxu0 0
    %542 = vmatprep.subr.bf16.mxu0 0
    %543 = vmatpush1.bf16.msra.mxu0 0
    %544 = vmatprep.subr.bf16.mxu0 0
    %545 = vmatpush1.bf16.msra.mxu0 0
    %546 = vmatprep.subr.bf16.mxu0 0
    %547 = vmatpush1.bf16.msra.mxu0 0
    %548 = vmatprep.subr.bf16.mxu0 0
    %549 = vmatpush1.bf16.msra.mxu0 0
    %550 = vmatprep.subr.bf16.mxu0 0
    %551 = vmatpush1.bf16.msra.mxu0 0
    %552 = vmatprep.subr.bf16.mxu0 0
    %553 = vmatpush1.bf16.msra.mxu0 0
    %554 = vmatprep.subr.bf16.mxu0 0
    %555 = vmatpush1.bf16.msra.mxu0 0
    %556 = vmatprep.subr.bf16.mxu0 0
    %557 = vmatpush1.bf16.msra.mxu0 0
    %558 = vmatprep.subr.bf16.mxu0 0
    %559 = vmatpush1.bf16.msra.mxu0 0
    %560 = vmatprep.subr.bf16.mxu0 0
    %561 = vmatpush1.bf16.msra.mxu0 0
    %562 = vmatprep.mubr.bf16.mxu0 0
    %563 = vmatmul.mubr.bf16.gmra.mrb[0].mxu0 %v528
    %v564 = vpop.f32.mrb[0].mxu0
    %v565 = vadd.f32 0.0, %v564
    %v566 = vpop.f32.mrb[0].mxu0
    %v567 = vpop.f32.mrb[0].mxu0
    %v568 = vadd.f32 0.0, %v567
    %v569 = vpop.f32.mrb[0].mxu0
    %570 = vdwg.mxu0
    %572 = vrot.lane.b32.xlu0 %v444, 64
    %v573 = vpop.permute.xlu0 %572
    %575 = vrot.lane.b32.xlu0 %v445, 64
    %v576 = vpop.permute.xlu0 %575
    %v578 = vsel %vm447, %v573, 0
    %v581 = vsel %vm447, %v576, 0
    %583 = vmatprep.subr.bf16.mxu0 0
    %584 = vmatpush1.bf16.xpose.msra.mxu0 %v581
    %585 = vmatprep.subr.bf16.mxu0 0
    %586 = vmatpush1.bf16.xpose.msra.mxu0 0
    %587 = vmatprep.subr.bf16.mxu0 0
    %588 = vmatpush1.bf16.xpose.msra.mxu0 0
    %589 = vmatprep.subr.bf16.mxu0 0
    %590 = vmatpush1.bf16.xpose.msra.mxu0 0
    %591 = vmatprep.subr.bf16.mxu0 0
    %592 = vmatpush1.bf16.xpose.msra.mxu0 0
    %593 = vmatprep.subr.bf16.mxu0 0
    %594 = vmatpush1.bf16.xpose.msra.mxu0 0
    %595 = vmatprep.subr.bf16.mxu0 0
    %596 = vmatpush1.bf16.xpose.msra.mxu0 0
    %597 = vmatprep.subr.bf16.mxu0 0
    %598 = vmatpush1.bf16.xpose.msra.mxu0 0
    %599 = vmatprep.subr.bf16.mxu0 0
    %600 = vmatpush1.bf16.xpose.msra.mxu0 0
    %601 = vmatprep.subr.bf16.mxu0 0
    %602 = vmatpush1.bf16.xpose.msra.mxu0 0
    %603 = vmatprep.subr.bf16.mxu0 0
    %604 = vmatpush1.bf16.xpose.msra.mxu0 0
    %605 = vmatprep.subr.bf16.mxu0 0
    %606 = vmatpush1.bf16.xpose.msra.mxu0 0
    %607 = vmatprep.subr.bf16.mxu0 0
    %608 = vmatpush1.bf16.xpose.msra.mxu0 0
    %609 = vmatprep.subr.bf16.mxu0 0
    %610 = vmatpush1.bf16.xpose.msra.mxu0 0
    %611 = vmatprep.subr.bf16.mxu0 0
    %612 = vmatpush1.bf16.xpose.msra.mxu0 0
    %613 = vmatprep.subr.bf16.mxu0 0
    %614 = vmatpush1.bf16.xpose.msra.mxu0 0
    %615 = vmatprep.mubr.bf16.mxu0 0
    %616 = vmatmul.mubr.bf16.gmra.mrb[0].mxu0 %v578
    %v617 = vpop.f32.mrb[0].mxu0
    %v618 = vadd.f32 0.0, %v617
    %v619 = vpop.f32.mrb[0].mxu0
    %v620 = vpop.f32.mrb[0].mxu0
    %v621 = vadd.f32 0.0, %v620
    %v622 = vpop.f32.mrb[0].mxu0
    %623 = vdwg.mxu0
    %v624 = vmul.f32 %v618, 0.125
    %v625 = vmul.f32 %v621, 0.125
    %v626 = vadd.f32 %v624, %v500
    %v627 = vadd.f32 %v625, %v500
    %v628 = vsel %vm503, %v626, -inf
    %629 = vmax.xlane.f32.xlu0 %v628
    %v630 = vpop.xlane.xlu0 %629
    %v631 = vsel %vm503, %v627, -inf
    %632 = vmax.xlane.f32.xlu0 %v631
    %v633 = vpop.xlane.xlu0 %632
    %v634 = vsub.f32 %v626, %v630
    %v635 = vsub.f32 %v627, %v633
    %v636 = vmul.f32 %v634, 1.442695
    %v637 = vpow.pop %v636
    %v638 = vmul.f32 %v635, 1.442695
    %v639 = vpow.pop %v638
    %v640 = vsel %vm503, %v637, 0.0
    %641 = vadd.xlane.f32.xlu0 %v640
    %v642 = vpop.xlane.xlu0 %641
    %v643 = vsel %vm503, %v639, 0.0
    %644 = vadd.xlane.f32.xlu0 %v643
    %v645 = vpop.xlane.xlu0 %644
    %v646 = vrcp.pop %v642
    %v647 = vrcp.pop %v645
    %v648 = vmul.f32 %v637, %v646
    %v649 = vmul.f32 %v639, %v647
    %v650 = vpack.c.bf16 %v649, %v648
    %652 = vrot.lane.b32.xlu0 %v446, 64
    %v653 = vpop.permute.xlu0 %652
    %v656 = vsel %vm503, %v650, 0
    %658 = vmatprep.subr.bf16.mxu0 0
    %659 = vmatpush1.bf16.msra.mxu0 %v653
    %660 = vmatprep.subr.bf16.mxu0 0
    %661 = vmatpush1.bf16.msra.mxu0 0
    %662 = vmatprep.subr.bf16.mxu0 0
    %663 = vmatpush1.bf16.msra.mxu0 0
    %664 = vmatprep.subr.bf16.mxu0 0
    %665 = vmatpush1.bf16.msra.mxu0 0
    %666 = vmatprep.subr.bf16.mxu0 0
    %667 = vmatpush1.bf16.msra.mxu0 0
    %668 = vmatprep.subr.bf16.mxu0 0
    %669 = vmatpush1.bf16.msra.mxu0 0
    %670 = vmatprep.subr.bf16.mxu0 0
    %671 = vmatpush1.bf16.msra.mxu0 0
    %672 = vmatprep.subr.bf16.mxu0 0
    %673 = vmatpush1.bf16.msra.mxu0 0
    %674 = vmatprep.subr.bf16.mxu0 0
    %675 = vmatpush1.bf16.msra.mxu0 0
    %676 = vmatprep.subr.bf16.mxu0 0
    %677 = vmatpush1.bf16.msra.mxu0 0
    %678 = vmatprep.subr.bf16.mxu0 0
    %679 = vmatpush1.bf16.msra.mxu0 0
    %680 = vmatprep.subr.bf16.mxu0 0
    %681 = vmatpush1.bf16.msra.mxu0 0
    %682 = vmatprep.subr.bf16.mxu0 0
    %683 = vmatpush1.bf16.msra.mxu0 0
    %684 = vmatprep.subr.bf16.mxu0 0
    %685 = vmatpush1.bf16.msra.mxu0 0
    %686 = vmatprep.subr.bf16.mxu0 0
    %687 = vmatpush1.bf16.msra.mxu0 0
    %688 = vmatprep.subr.bf16.mxu0 0
    %689 = vmatpush1.bf16.msra.mxu0 0
    %690 = vmatprep.mubr.bf16.mxu0 0
    %691 = vmatmul.mubr.bf16.gmra.mrb[0].mxu0 %v656
    %v692 = vpop.f32.mrb[0].mxu0
    %v693 = vadd.f32 0.0, %v692
    %v694 = vpop.f32.mrb[0].mxu0
    %v695 = vpop.f32.mrb[0].mxu0
    %v696 = vadd.f32 0.0, %v695
    %v697 = vpop.f32.mrb[0].mxu0
    %698 = vdwg.mxu0
    %701 = vrot.lane.b32.xlu0 %v693, 64
    %v702 = vpop.permute.xlu0 %701
    %703 = vrot.lane.b32.xlu0 %v696, 64
    %v704 = vpop.permute.xlu0 %703
    %v707 = vsel %vm447, %v565, %v702
    %v708 = vsel %vm447, %v568, %v704
    %v709 = vpack.c.bf16 %v391, %v387
    %v710 = vpack.c.bf16 %v393, %v389
    %v711 = vpack.c.bf16 %v441, %v438
    %v713 = vsel %vm447, %v709, 0
    %v716 = vsel %vm447, %v710, 0
    %718 = vmatprep.subr.bf16.mxu0 0
    %719 = vmatpush1.bf16.xpose.msra.mxu0 %v716
    %720 = vmatprep.subr.bf16.mxu0 0
    %721 = vmatpush1.bf16.xpose.msra.mxu0 0
    %722 = vmatprep.subr.bf16.mxu0 0
    %723 = vmatpush1.bf16.xpose.msra.mxu0 0
    %724 = vmatprep.subr.bf16.mxu0 0
    %725 = vmatpush1.bf16.xpose.msra.mxu0 0
    %726 = vmatprep.subr.bf16.mxu0 0
    %727 = vmatpush1.bf16.xpose.msra.mxu0 0
    %728 = vmatprep.subr.bf16.mxu0 0
    %729 = vmatpush1.bf16.xpose.msra.mxu0 0
    %730 = vmatprep.subr.bf16.mxu0 0
    %731 = vmatpush1.bf16.xpose.msra.mxu0 0
    %732 = vmatprep.subr.bf16.mxu0 0
    %733 = vmatpush1.bf16.xpose.msra.mxu0 0
    %734 = vmatprep.subr.bf16.mxu0 0
    %735 = vmatpush1.bf16.xpose.msra.mxu0 0
    %736 = vmatprep.subr.bf16.mxu0 0
    %737 = vmatpush1.bf16.xpose.msra.mxu0 0
    %738 = vmatprep.subr.bf16.mxu0 0
    %739 = vmatpush1.bf16.xpose.msra.mxu0 0
    %740 = vmatprep.subr.bf16.mxu0 0
    %741 = vmatpush1.bf16.xpose.msra.mxu0 0
    %742 = vmatprep.subr.bf16.mxu0 0
    %743 = vmatpush1.bf16.xpose.msra.mxu0 0
    %744 = vmatprep.subr.bf16.mxu0 0
    %745 = vmatpush1.bf16.xpose.msra.mxu0 0
    %746 = vmatprep.subr.bf16.mxu0 0
    %747 = vmatpush1.bf16.xpose.msra.mxu0 0
    %748 = vmatprep.subr.bf16.mxu0 0
    %749 = vmatpush1.bf16.xpose.msra.mxu0 0
    %750 = vmatprep.mubr.bf16.mxu0 0
    %751 = vmatmul.mubr.bf16.gmra.mrb[0].mxu0 %v713
    %v752 = vpop.f32.mrb[0].mxu0
    %v753 = vadd.f32 0.0, %v752
    %v754 = vpop.f32.mrb[0].mxu0
    %v755 = vpop.f32.mrb[0].mxu0
    %v756 = vadd.f32 0.0, %v755
    %v757 = vpop.f32.mrb[0].mxu0
    %758 = vdwg.mxu0
    %v759 = vmul.f32 %v753, 0.125
    %v760 = vmul.f32 %v756, 0.125
    %v761 = vlaneseq
    %v762 = vshrl.u32 %v761, 7
    %v763 = vsub.s32 1, %v762
    %v764 = vrot.slane %v162, %v763
    %v765 = vadd.f32 %v759, %v764
    %v766 = vadd.f32 %v760, %v764
    %v767 = vsel %vm503, %v765, -inf
    %768 = vmax.xlane.f32.xlu0 %v767
    %v769 = vpop.xlane.xlu0 %768
    %v770 = vsel %vm503, %v766, -inf
    %771 = vmax.xlane.f32.xlu0 %v770
    %v772 = vpop.xlane.xlu0 %771
    %v773 = vsub.f32 %v765, %v769
    %v774 = vsub.f32 %v766, %v772
    %v775 = vmul.f32 %v773, 1.442695
    %v776 = vpow.pop %v775
    %v777 = vmul.f32 %v774, 1.442695
    %v778 = vpow.pop %v777
    %v779 = vsel %vm503, %v776, 0.0
    %780 = vadd.xlane.f32.xlu0 %v779
    %v781 = vpop.xlane.xlu0 %780
    %v782 = vsel %vm503, %v778, 0.0
    %783 = vadd.xlane.f32.xlu0 %v782
    %v784 = vpop.xlane.xlu0 %783
    %v785 = vrcp.pop %v781
    %v786 = vrcp.pop %v784
    %v787 = vmul.f32 %v776, %v785
    %v788 = vmul.f32 %v778, %v786
    %v789 = vpack.c.bf16 %v788, %v787
    %v791 = vsel %vm503, %v789, 0
    %793 = vmatprep.subr.bf16.mxu0 0
    %794 = vmatpush1.bf16.msra.mxu0 %v711
    %795 = vmatprep.subr.bf16.mxu0 0
    %796 = vmatpush1.bf16.msra.mxu0 0
    %797 = vmatprep.subr.bf16.mxu0 0
    %798 = vmatpush1.bf16.msra.mxu0 0
    %799 = vmatprep.subr.bf16.mxu0 0
    %800 = vmatpush1.bf16.msra.mxu0 0
    %801 = vmatprep.subr.bf16.mxu0 0
    %802 = vmatpush1.bf16.msra.mxu0 0
    %803 = vmatprep.subr.bf16.mxu0 0
    %804 = vmatpush1.bf16.msra.mxu0 0
    %805 = vmatprep.subr.bf16.mxu0 0
    %806 = vmatpush1.bf16.msra.mxu0 0
    %807 = vmatprep.subr.bf16.mxu0 0
    %808 = vmatpush1.bf16.msra.mxu0 0
    %809 = vmatprep.subr.bf16.mxu0 0
    %810 = vmatpush1.bf16.msra.mxu0 0
    %811 = vmatprep.subr.bf16.mxu0 0
    %812 = vmatpush1.bf16.msra.mxu0 0
    %813 = vmatprep.subr.bf16.mxu0 0
    %814 = vmatpush1.bf16.msra.mxu0 0
    %815 = vmatprep.subr.bf16.mxu0 0
    %816 = vmatpush1.bf16.msra.mxu0 0
    %817 = vmatprep.subr.bf16.mxu0 0
    %818 = vmatpush1.bf16.msra.mxu0 0
    %819 = vmatprep.subr.bf16.mxu0 0
    %820 = vmatpush1.bf16.msra.mxu0 0
    %821 = vmatprep.subr.bf16.mxu0 0
    %822 = vmatpush1.bf16.msra.mxu0 0
    %823 = vmatprep.subr.bf16.mxu0 0
    %824 = vmatpush1.bf16.msra.mxu0 0
    %825 = vmatprep.mubr.bf16.mxu0 0
    %826 = vmatmul.mubr.bf16.gmra.mrb[0].mxu0 %v791
    %v827 = vpop.f32.mrb[0].mxu0
    %v828 = vadd.f32 0.0, %v827
    %v829 = vpop.f32.mrb[0].mxu0
    %v830 = vpop.f32.mrb[0].mxu0
    %v831 = vadd.f32 0.0, %v830
    %v832 = vpop.f32.mrb[0].mxu0
    %833 = vdwg.mxu0
    %835 = vrot.lane.b32.xlu0 %v709, 64
    %v836 = vpop.permute.xlu0 %835
    %838 = vrot.lane.b32.xlu0 %v710, 64
    %v839 = vpop.permute.xlu0 %838
    %v841 = vsel %vm447, %v836, 0
    %v844 = vsel %vm447, %v839, 0
    %846 = vmatprep.subr.bf16.mxu0 0
    %847 = vmatpush1.bf16.xpose.msra.mxu0 %v844
    %848 = vmatprep.subr.bf16.mxu0 0
    %849 = vmatpush1.bf16.xpose.msra.mxu0 0
    %850 = vmatprep.subr.bf16.mxu0 0
    %851 = vmatpush1.bf16.xpose.msra.mxu0 0
    %852 = vmatprep.subr.bf16.mxu0 0
    %853 = vmatpush1.bf16.xpose.msra.mxu0 0
    %854 = vmatprep.subr.bf16.mxu0 0
    %855 = vmatpush1.bf16.xpose.msra.mxu0 0
    %856 = vmatprep.subr.bf16.mxu0 0
    %857 = vmatpush1.bf16.xpose.msra.mxu0 0
    %858 = vmatprep.subr.bf16.mxu0 0
    %859 = vmatpush1.bf16.xpose.msra.mxu0 0
    %860 = vmatprep.subr.bf16.mxu0 0
    %861 = vmatpush1.bf16.xpose.msra.mxu0 0
    %862 = vmatprep.subr.bf16.mxu0 0
    %863 = vmatpush1.bf16.xpose.msra.mxu0 0
    %864 = vmatprep.subr.bf16.mxu0 0
    %865 = vmatpush1.bf16.xpose.msra.mxu0 0
    %866 = vmatprep.subr.bf16.mxu0 0
    %867 = vmatpush1.bf16.xpose.msra.mxu0 0
    %868 = vmatprep.subr.bf16.mxu0 0
    %869 = vmatpush1.bf16.xpose.msra.mxu0 0
    %870 = vmatprep.subr.bf16.mxu0 0
    %871 = vmatpush1.bf16.xpose.msra.mxu0 0
    %872 = vmatprep.subr.bf16.mxu0 0
    %873 = vmatpush1.bf16.xpose.msra.mxu0 0
    %874 = vmatprep.subr.bf16.mxu0 0
    %875 = vmatpush1.bf16.xpose.msra.mxu0 0
    %876 = vmatprep.subr.bf16.mxu0 0
    %877 = vmatpush1.bf16.xpose.msra.mxu0 0
    %878 = vmatprep.mubr.bf16.mxu0 0
    %879 = vmatmul.mubr.bf16.gmra.mrb[0].mxu0 %v841
    %v880 = vpop.f32.mrb[0].mxu0
    %v881 = vadd.f32 0.0, %v880
    %v882 = vpop.f32.mrb[0].mxu0
    %v883 = vpop.f32.mrb[0].mxu0
    %v884 = vadd.f32 0.0, %v883
    %v885 = vpop.f32.mrb[0].mxu0
    %886 = vdwg.mxu0
    %v887 = vmul.f32 %v881, 0.125
    %v888 = vmul.f32 %v884, 0.125
    %v889 = vadd.f32 %v887, %v764
    %v890 = vadd.f32 %v888, %v764
    %v891 = vsel %vm503, %v889, -inf
    %892 = vmax.xlane.f32.xlu0 %v891
    %v893 = vpop.xlane.xlu0 %892
    %v894 = vsel %vm503, %v890, -inf
    %895 = vmax.xlane.f32.xlu0 %v894
    %v896 = vpop.xlane.xlu0 %895
    %v897 = vsub.f32 %v889, %v893
    %v898 = vsub.f32 %v890, %v896
    %v899 = vmul.f32 %v897, 1.442695
    %v900 = vpow.pop %v899
    %v901 = vmul.f32 %v898, 1.442695
    %v902 = vpow.pop %v901
    %v903 = vsel %vm503, %v900, 0.0
    %904 = vadd.xlane.f32.xlu0 %v903
    %v905 = vpop.xlane.xlu0 %904
    %v906 = vsel %vm503, %v902, 0.0
    %907 = vadd.xlane.f32.xlu0 %v906
    %v908 = vpop.xlane.xlu0 %907
    %v909 = vrcp.pop %v905
    %v910 = vrcp.pop %v908
    %v911 = vmul.f32 %v900, %v909
    %v912 = vmul.f32 %v902, %v910
    %v913 = vpack.c.bf16 %v912, %v911
    %915 = vrot.lane.b32.xlu0 %v711, 64
    %v916 = vpop.permute.xlu0 %915
    %v919 = vsel %vm503, %v913, 0
    %921 = vmatprep.subr.bf16.mxu0 0
    %922 = vmatpush1.bf16.msra.mxu0 %v916
    %923 = vmatprep.subr.bf16.mxu0 0
    %924 = vmatpush1.bf16.msra.mxu0 0
    %925 = vmatprep.subr.bf16.mxu0 0
    %926 = vmatpush1.bf16.msra.mxu0 0
    %927 = vmatprep.subr.bf16.mxu0 0
    %928 = vmatpush1.bf16.msra.mxu0 0
    %929 = vmatprep.subr.bf16.mxu0 0
    %930 = vmatpush1.bf16.msra.mxu0 0
    %931 = vmatprep.subr.bf16.mxu0 0
    %932 = vmatpush1.bf16.msra.mxu0 0
    %933 = vmatprep.subr.bf16.mxu0 0
    %934 = vmatpush1.bf16.msra.mxu0 0
    %935 = vmatprep.subr.bf16.mxu0 0
    %936 = vmatpush1.bf16.msra.mxu0 0
    %937 = vmatprep.subr.bf16.mxu0 0
    %938 = vmatpush1.bf16.msra.mxu0 0
    %939 = vmatprep.subr.bf16.mxu0 0
    %940 = vmatpush1.bf16.msra.mxu0 0
    %941 = vmatprep.subr.bf16.mxu0 0
    %942 = vmatpush1.bf16.msra.mxu0 0
    %943 = vmatprep.subr.bf16.mxu0 0
    %944 = vmatpush1.bf16.msra.mxu0 0
    %945 = vmatprep.subr.bf16.mxu0 0
    %946 = vmatpush1.bf16.msra.mxu0 0
    %947 = vmatprep.subr.bf16.mxu0 0
    %948 = vmatpush1.bf16.msra.mxu0 0
    %949 = vmatprep.subr.bf16.mxu0 0
    %950 = vmatpush1.bf16.msra.mxu0 0
    %951 = vmatprep.subr.bf16.mxu0 0
    %952 = vmatpush1.bf16.msra.mxu0 0
    %953 = vmatprep.mubr.bf16.mxu0 0
    %954 = vmatmul.mubr.bf16.gmra.mrb[0].mxu0 %v919
    %v955 = vpop.f32.mrb[0].mxu0
    %v956 = vadd.f32 0.0, %v955
    %v957 = vpop.f32.mrb[0].mxu0
    %v958 = vpop.f32.mrb[0].mxu0
    %v959 = vadd.f32 0.0, %v958
    %v960 = vpop.f32.mrb[0].mxu0
    %961 = vdwg.mxu0
    %964 = vrot.lane.b32.xlu0 %v956, 64
    %v965 = vpop.permute.xlu0 %964
    %966 = vrot.lane.b32.xlu0 %v959, 64
    %v967 = vpop.permute.xlu0 %966
    %v970 = vsel %vm447, %v828, %v965
    %v971 = vsel %vm447, %v831, %v967
    %v972 = vld [vmem:[%s4] sm:$0xf]
    %v973 = vld [vmem:[%s4 + $0x4] sm:$0xf]
    %v974 = vld [vmem:[%s4 + $0x8] sm:$0xf]
    %v975 = vld [vmem:[%s4 + $0xc] sm:$0xf]
    %v976 = vld [vmem:[%s4 + $0x10] sm:$0xf]
    %v977 = vld [vmem:[%s4 + $0x14] sm:$0xf]
    %v978 = vld [vmem:[%s4 + $0x18] sm:$0xf]
    %v979 = vld [vmem:[%s4 + $0x1c] sm:$0xf]
    %v980 = vld [vmem:[%s4 + $0x20] sm:$0xf]
    %v981 = vld [vmem:[%s4 + $0x24] sm:$0xf]
    %v982 = vld [vmem:[%s4 + $0x28] sm:$0xf]
    %v983 = vld [vmem:[%s4 + $0x2c] sm:$0xf]
    %v984 = vld [vmem:[%s4 + $0x30] sm:$0xf]
    %v985 = vld [vmem:[%s4 + $0x34] sm:$0xf]
    %v986 = vld [vmem:[%s4 + $0x38] sm:$0xf]
    %v987 = vld [vmem:[%s4 + $0x3c] sm:$0xf]
    %v988 = vld [vmem:[%s5] sm:$0x1]
    %v989 = vpack.c.bf16 %v708, %v707
    %v990 = vpack.c.bf16 %v971, %v970
    %v992 = vlaneseq
    %v993 = vshrl.u32 %v992, 7
    %v994 = vsub.s32 0, %v993
    %v995 = vrot.slane %v988, %v994
    %v1013 = vunpack.c.l.b16 %v972
    %v1014 = vunpack.c.l.b16 %v973
    %v1015 = vunpack.c.l.b16 %v974
    %v1016 = vunpack.c.l.b16 %v975
    %v1017 = vunpack.c.l.b16 %v976
    %v1018 = vunpack.c.l.b16 %v977
    %v1019 = vunpack.c.l.b16 %v978
    %v1020 = vunpack.c.l.b16 %v979
    %v1021 = vunpack.c.l.b16 %v980
    %v1022 = vunpack.c.l.b16 %v981
    %v1023 = vunpack.c.l.b16 %v982
    %v1024 = vunpack.c.l.b16 %v983
    %v1025 = vunpack.c.l.b16 %v984
    %v1026 = vunpack.c.l.b16 %v985
    %v1027 = vunpack.c.l.b16 %v986
    %v1028 = vunpack.c.l.b16 %v987
    %v1029 = vpack.c.b16 %v1014, %v1013
    %v1030 = vpack.c.b16 %v1016, %v1015
    %v1031 = vpack.c.b16 %v1018, %v1017
    %v1032 = vpack.c.b16 %v1020, %v1019
    %v1033 = vpack.c.b16 %v1022, %v1021
    %v1034 = vpack.c.b16 %v1024, %v1023
    %v1035 = vpack.c.b16 %v1026, %v1025
    %v1036 = vpack.c.b16 %v1028, %v1027
    %1045 = vmatprep.subr.bf16.mxu0 0
    %1046 = vmatpush1.bf16.msra.mxu0 %v1029
    %1047 = vmatprep.subr.bf16.mxu0 0
    %1048 = vmatpush1.bf16.msra.mxu0 %v1030
    %1049 = vmatprep.subr.bf16.mxu0 0
    %1050 = vmatpush1.bf16.msra.mxu0 %v1031
    %1051 = vmatprep.subr.bf16.mxu0 0
    %1052 = vmatpush1.bf16.msra.mxu0 %v1032
    %1053 = vmatprep.subr.bf16.mxu0 0
    %1054 = vmatpush1.bf16.msra.mxu0 %v1033
    %1055 = vmatprep.subr.bf16.mxu0 0
    %1056 = vmatpush1.bf16.msra.mxu0 %v1034
    %1057 = vmatprep.subr.bf16.mxu0 0
    %1058 = vmatpush1.bf16.msra.mxu0 %v1035
    %1059 = vmatprep.subr.bf16.mxu0 0
    %1060 = vmatpush1.bf16.msra.mxu0 %v1036
    %1061 = vmatprep.subr.bf16.mxu0 0
    %1062 = vmatpush1.bf16.msra.mxu0 0
    %1063 = vmatprep.subr.bf16.mxu0 0
    %1064 = vmatpush1.bf16.msra.mxu0 0
    %1065 = vmatprep.subr.bf16.mxu0 0
    %1066 = vmatpush1.bf16.msra.mxu0 0
    %1067 = vmatprep.subr.bf16.mxu0 0
    %1068 = vmatpush1.bf16.msra.mxu0 0
    %1069 = vmatprep.subr.bf16.mxu0 0
    %1070 = vmatpush1.bf16.msra.mxu0 0
    %1071 = vmatprep.subr.bf16.mxu0 0
    %1072 = vmatpush1.bf16.msra.mxu0 0
    %1073 = vmatprep.subr.bf16.mxu0 0
    %1074 = vmatpush1.bf16.msra.mxu0 0
    %1075 = vmatprep.subr.bf16.mxu0 0
    %1076 = vmatpush1.bf16.msra.mxu0 0
    %1077 = vmatprep.mubr.bf16.mxu0 0
    %1078 = vmatmul.mubr.bf16.gmra.mrb[0].mxu0 %v989
    %v1079 = vpop.f32.mrb[0].mxu0
    %v1080 = vadd.f32 %v995, %v1079
    %v1081 = vpop.f32.mrb[0].mxu0
    %v1082 = vpop.f32.mrb[0].mxu0
    %v1083 = vadd.f32 %v995, %v1082
    %v1084 = vpop.f32.mrb[0].mxu0
    %1085 = vmatprep.mubr.bf16.mxu0 0
    %1086 = vmatmul.mubr.bf16.gmra.mrb[0].mxu0 %v990
    %v1087 = vpop.f32.mrb[0].mxu0
    %v1088 = vadd.f32 %v995, %v1087
    %v1089 = vpop.f32.mrb[0].mxu0
    %v1090 = vpop.f32.mrb[0].mxu0
    %v1091 = vadd.f32 %v995, %v1090
    %v1092 = vpop.f32.mrb[0].mxu0
    %1093 = vdwg.mxu0
    %v1094 = vadd.f32 %v1080, %v156
    %v1095 = vadd.f32 %v1083, %v157
    %v1096 = vadd.f32 %v1088, %v158
    %v1097 = vadd.f32 %v1091, %v159
    %v1098 = vld [vmem:[%s6] sm:$0x1]
    %v1099 = vld [vmem:[%s7] sm:$0x1]
    %1100 = vadd.xlane.f32.xlu0 %v1094
    %v1101 = vpop.xlane.xlu0 %1100
    %1102 = vadd.xlane.f32.xlu0 %v1095
    %v1103 = vpop.xlane.xlu0 %1102
    %1104 = vadd.xlane.f32.xlu0 %v1096
    %v1105 = vpop.xlane.xlu0 %1104
    %1106 = vadd.xlane.f32.xlu0 %v1097
    %v1107 = vpop.xlane.xlu0 %1106
    %v1108 = vmul.f32 %v1101, %v103
    %v1109 = vmul.f32 %v1103, %v103
    %v1110 = vmul.f32 %v1105, %v103
    %v1111 = vmul.f32 %v1107, %v103
    %v1112 = vsub.f32 %v1094, %v1108
    %v1113 = vsub.f32 %v1095, %v1109
    %v1114 = vsub.f32 %v1096, %v1110
    %v1115 = vsub.f32 %v1097, %v1111
    %v1116 = vmul.f32 %v1112, %v1112
    %v1117 = vmul.f32 %v1113, %v1113
    %v1118 = vmul.f32 %v1114, %v1114
    %v1119 = vmul.f32 %v1115, %v1115
    %1120 = vadd.xlane.f32.xlu0 %v1116
    %v1121 = vpop.xlane.xlu0 %1120
    %1122 = vadd.xlane.f32.xlu0 %v1117
    %v1123 = vpop.xlane.xlu0 %1122
    %1124 = vadd.xlane.f32.xlu0 %v1118
    %v1125 = vpop.xlane.xlu0 %1124
    %1126 = vadd.xlane.f32.xlu0 %v1119
    %v1127 = vpop.xlane.xlu0 %1126
    %v1128 = vmul.f32 %v1121, %v103
    %v1129 = vmul.f32 %v1123, %v103
    %v1130 = vmul.f32 %v1125, %v103
    %v1131 = vmul.f32 %v1127, %v103
    %v1132 = vadd.f32 %v1128, 1e-12
    %v1133 = vadd.f32 %v1129, 1e-12
    %v1134 = vadd.f32 %v1130, 1e-12
    %v1135 = vadd.f32 %v1131, 1e-12
    %v1136 = vrsqrt.pop %v1132
    %v1137 = vrsqrt.pop %v1133
    %v1138 = vrsqrt.pop %v1134
    %v1139 = vrsqrt.pop %v1135
    %v1140 = vmul.f32 %v1112, %v1136
    %v1141 = vmul.f32 %v1113, %v1137
    %v1142 = vmul.f32 %v1114, %v1138
    %v1143 = vmul.f32 %v1115, %v1139
    %v1145 = vlaneseq
    %v1146 = vshrl.u32 %v1145, 7
    %v1147 = vsub.s32 0, %v1146
    %v1148 = vrot.slane %v1098, %v1147
    %v1150 = vmul.f32 %v1140, %v1148
    %v1151 = vmul.f32 %v1141, %v1148
    %v1152 = vmul.f32 %v1142, %v1148
    %v1153 = vmul.f32 %v1143, %v1148
    %v1155 = vlaneseq
    %v1156 = vshrl.u32 %v1155, 7
    %v1157 = vsub.s32 0, %v1156
    %v1158 = vrot.slane %v1099, %v1157
    %v1160 = vadd.f32 %v1150, %v1158
    %v1161 = vadd.f32 %v1151, %v1158
    %v1162 = vadd.f32 %v1152, %v1158
    %v1163 = vadd.f32 %v1153, %v1158
    %v1164 = vld [vmem:[%s8] sm:$0xff]
    %v1165 = vld [vmem:[%s8 + $0x8] sm:$0xff]
    %v1166 = vld [vmem:[%s8 + $0x10] sm:$0xff]
    %v1167 = vld [vmem:[%s8 + $0x18] sm:$0xff]
    %v1168 = vld [vmem:[%s8 + $0x20] sm:$0xff]
    %v1169 = vld [vmem:[%s8 + $0x28] sm:$0xff]
    %v1170 = vld [vmem:[%s8 + $0x30] sm:$0xff]
    %v1171 = vld [vmem:[%s8 + $0x38] sm:$0xff]
    %v1172 = vld [vmem:[%s8 + $0x40] sm:$0xff]
    %v1173 = vld [vmem:[%s8 + $0x48] sm:$0xff]
    %v1174 = vld [vmem:[%s8 + $0x50] sm:$0xff]
    %v1175 = vld [vmem:[%s8 + $0x58] sm:$0xff]
    %v1176 = vld [vmem:[%s8 + $0x60] sm:$0xff]
    %v1177 = vld [vmem:[%s8 + $0x68] sm:$0xff]
    %v1178 = vld [vmem:[%s8 + $0x70] sm:$0xff]
    %v1179 = vld [vmem:[%s8 + $0x78] sm:$0xff]
    %v1180 = vld [vmem:[%s9] sm:$0x3]
    %v1181 = vpack.c.bf16 %v1161, %v1160
    %v1182 = vpack.c.bf16 %v1163, %v1162
    %v1184 = vlaneseq
    %v1185 = vshrl.u32 %v1184, 7
    %v1186 = vsub.s32 0, %v1185
    %v1187 = vrot.slane %v1180, %v1186
    %v1188 = vlaneseq
    %v1189 = vshrl.u32 %v1188, 7
    %v1190 = vsub.s32 1, %v1189
    %v1191 = vrot.slane %v1180, %v1190
    %v1210 = vunpack.c.l.b16 %v1164
    %v1211 = vunpack.c.h.b16 %v1164
    %v1212 = vunpack.c.l.b16 %v1165
    %v1213 = vunpack.c.h.b16 %v1165
    %v1214 = vunpack.c.l.b16 %v1166
    %v1215 = vunpack.c.h.b16 %v1166
    %v1216 = vunpack.c.l.b16 %v1167
    %v1217 = vunpack.c.h.b16 %v1167
    %v1218 = vunpack.c.l.b16 %v1168
    %v1219 = vunpack.c.h.b16 %v1168
    %v1220 = vunpack.c.l.b16 %v1169
    %v1221 = vunpack.c.h.b16 %v1169
    %v1222 = vunpack.c.l.b16 %v1170
    %v1223 = vunpack.c.h.b16 %v1170
    %v1224 = vunpack.c.l.b16 %v1171
    %v1225 = vunpack.c.h.b16 %v1171
    %v1226 = vunpack.c.l.b16 %v1172
    %v1227 = vunpack.c.h.b16 %v1172
    %v1228 = vunpack.c.l.b16 %v1173
    %v1229 = vunpack.c.h.b16 %v1173
    %v1230 = vunpack.c.l.b16 %v1174
    %v1231 = vunpack.c.h.b16 %v1174
    %v1232 = vunpack.c.l.b16 %v1175
    %v1233 = vunpack.c.h.b16 %v1175
    %v1234 = vunpack.c.l.b16 %v1176
    %v1235 = vunpack.c.h.b16 %v1176
    %v1236 = vunpack.c.l.b16 %v1177
    %v1237 = vunpack.c.h.b16 %v1177
    %v1238 = vunpack.c.l.b16 %v1178
    %v1239 = vunpack.c.h.b16 %v1178
    %v1240 = vunpack.c.l.b16 %v1179
    %v1241 = vunpack.c.h.b16 %v1179
    %v1242 = vpack.c.b16 %v1212, %v1210
    %v1243 = vpack.c.b16 %v1213, %v1211
    %v1244 = vpack.c.b16 %v1216, %v1214
    %v1245 = vpack.c.b16 %v1217, %v1215
    %v1246 = vpack.c.b16 %v1220, %v1218
    %v1247 = vpack.c.b16 %v1221, %v1219
    %v1248 = vpack.c.b16 %v1224, %v1222
    %v1249 = vpack.c.b16 %v1225, %v1223
    %v1250 = vpack.c.b16 %v1228, %v1226
    %v1251 = vpack.c.b16 %v1229, %v1227
    %v1252 = vpack.c.b16 %v1232, %v1230
    %v1253 = vpack.c.b16 %v1233, %v1231
    %v1254 = vpack.c.b16 %v1236, %v1234
    %v1255 = vpack.c.b16 %v1237, %v1235
    %v1256 = vpack.c.b16 %v1240, %v1238
    %v1257 = vpack.c.b16 %v1241, %v1239
    %1274 = vmatprep.subr.bf16.mxu0 %v1243
    %1275 = vmatpush1.bf16.msra.mxu0 %v1242
    %1276 = vmatprep.subr.bf16.mxu0 %v1245
    %1277 = vmatpush1.bf16.msra.mxu0 %v1244
    %1278 = vmatprep.subr.bf16.mxu0 %v1247
    %1279 = vmatpush1.bf16.msra.mxu0 %v1246
    %1280 = vmatprep.subr.bf16.mxu0 %v1249
    %1281 = vmatpush1.bf16.msra.mxu0 %v1248
    %1282 = vmatprep.subr.bf16.mxu0 %v1251
    %1283 = vmatpush1.bf16.msra.mxu0 %v1250
    %1284 = vmatprep.subr.bf16.mxu0 %v1253
    %1285 = vmatpush1.bf16.msra.mxu0 %v1252
    %1286 = vmatprep.subr.bf16.mxu0 %v1255
    %1287 = vmatpush1.bf16.msra.mxu0 %v1254
    %1288 = vmatprep.subr.bf16.mxu0 %v1257
    %1289 = vmatpush1.bf16.msra.mxu0 %v1256
    %1290 = vmatprep.subr.bf16.mxu0 0
    %1291 = vmatpush1.bf16.msra.mxu0 0
    %1292 = vmatprep.subr.bf16.mxu0 0
    %1293 = vmatpush1.bf16.msra.mxu0 0
    %1294 = vmatprep.subr.bf16.mxu0 0
    %1295 = vmatpush1.bf16.msra.mxu0 0
    %1296 = vmatprep.subr.bf16.mxu0 0
    %1297 = vmatpush1.bf16.msra.mxu0 0
    %1298 = vmatprep.subr.bf16.mxu0 0
    %1299 = vmatpush1.bf16.msra.mxu0 0
    %1300 = vmatprep.subr.bf16.mxu0 0
    %1301 = vmatpush1.bf16.msra.mxu0 0
    %1302 = vmatprep.subr.bf16.mxu0 0
    %1303 = vmatpush1.bf16.msra.mxu0 0
    %1304 = vmatprep.subr.bf16.mxu0 0
    %1305 = vmatpush1.bf16.msra.mxu0 0
    %1306 = vmatprep.mubr.bf16.mxu0 0
    %1307 = vmatmul.mubr.bf16.gmra.mrb[0].mxu0 %v1181
    %v1308 = vpop.f32.mrb[0].mxu0
    %v1309 = vadd.f32 %v1187, %v1308
    %v1310 = vpop.f32.mrb[0].mxu0
    %v1311 = vadd.f32 %v1191, %v1310
    %v1312 = vpop.f32.mrb[0].mxu0
    %v1313 = vadd.f32 %v1187, %v1312
    %v1314 = vpop.f32.mrb[0].mxu0
    %v1315 = vadd.f32 %v1191, %v1314
    %1316 = vmatprep.mubr.bf16.mxu0 0
    %1317 = vmatmul.mubr.bf16.gmra.mrb[0].mxu0 %v1182
    %v1318 = vpop.f32.mrb[0].mxu0
    %v1319 = vadd.f32 %v1187, %v1318
    %v1320 = vpop.f32.mrb[0].mxu0
    %v1321 = vadd.f32 %v1191, %v1320
    %v1322 = vpop.f32.mrb[0].mxu0
    %v1323 = vadd.f32 %v1187, %v1322
    %v1324 = vpop.f32.mrb[0].mxu0
    %v1325 = vadd.f32 %v1191, %v1324
    %1326 = vdwg.mxu0
    %v1327 = vmul.f32 %v1309, 0.5
    %v1328 = vmul.f32 %v1311, 0.5
    %v1329 = vmul.f32 %v1313, 0.5
    %v1330 = vmul.f32 %v1315, 0.5
    %v1331 = vmul.f32 %v1319, 0.5
    %v1332 = vmul.f32 %v1321, 0.5
    %v1333 = vmul.f32 %v1323, 0.5
    %v1334 = vmul.f32 %v1325, 0.5
    %v1335 = vmul.f32 %v1309, 0.70710677
    %v1336 = vmul.f32 %v1311, 0.70710677
    %v1337 = vmul.f32 %v1313, 0.70710677
    %v1338 = vmul.f32 %v1315, 0.70710677
    %v1339 = vmul.f32 %v1319, 0.70710677
    %v1340 = vmul.f32 %v1321, 0.70710677
    %v1341 = vmul.f32 %v1323, 0.70710677
    %v1342 = vmul.f32 %v1325, 0.70710677
    %v1343 = verf.f32.pop %v1335
    %v1344 = verf.f32.pop %v1336
    %v1345 = verf.f32.pop %v1337
    %v1346 = verf.f32.pop %v1338
    %v1347 = verf.f32.pop %v1339
    %v1348 = verf.f32.pop %v1340
    %v1349 = verf.f32.pop %v1341
    %v1350 = verf.f32.pop %v1342
    %v1351 = vadd.f32 %v1343, 1.0
    %v1352 = vadd.f32 %v1344, 1.0
    %v1353 = vadd.f32 %v1345, 1.0
    %v1354 = vadd.f32 %v1346, 1.0
    %v1355 = vadd.f32 %v1347, 1.0
    %v1356 = vadd.f32 %v1348, 1.0
    %v1357 = vadd.f32 %v1349, 1.0
    %v1358 = vadd.f32 %v1350, 1.0
    %v1359 = vmul.f32 %v1327, %v1351
    %v1360 = vmul.f32 %v1328, %v1352
    %v1361 = vmul.f32 %v1329, %v1353
    %v1362 = vmul.f32 %v1330, %v1354
    %v1363 = vmul.f32 %v1331, %v1355
    %v1364 = vmul.f32 %v1332, %v1356
    %v1365 = vmul.f32 %v1333, %v1357
    %v1366 = vmul.f32 %v1334, %v1358
    %v1367 = vld [vmem:[#allocation2] sm:$0xf]
    %v1368 = vld [vmem:[#allocation2 + $0x4] sm:$0xf]
    %v1369 = vld [vmem:[#allocation2 + $0x8] sm:$0xf]
    %v1370 = vld [vmem:[#allocation2 + $0xc] sm:$0xf]
    %v1371 = vld [vmem:[#allocation2 + $0x10] sm:$0xf]
    %v1372 = vld [vmem:[#allocation2 + $0x14] sm:$0xf]
    %v1373 = vld [vmem:[#allocation2 + $0x18] sm:$0xf]
    %v1374 = vld [vmem:[#allocation2 + $0x1c] sm:$0xf]
    %v1375 = vld [vmem:[#allocation2 + $0x20] sm:$0xf]
    %v1376 = vld [vmem:[#allocation2 + $0x24] sm:$0xf]
    %v1377 = vld [vmem:[#allocation2 + $0x28] sm:$0xf]
    %v1378 = vld [vmem:[#allocation2 + $0x2c] sm:$0xf]
    %v1379 = vld [vmem:[#allocation2 + $0x30] sm:$0xf]
    %v1380 = vld [vmem:[#allocation2 + $0x34] sm:$0xf]
    %v1381 = vld [vmem:[#allocation2 + $0x38] sm:$0xf]
    %v1382 = vld [vmem:[#allocation2 + $0x3c] sm:$0xf]
    %v1383 = vld [vmem:[#allocation2 + $0x40] sm:$0xf]
    %v1384 = vld [vmem:[#allocation2 + $0x44] sm:$0xf]
    %v1385 = vld [vmem:[#allocation2 + $0x48] sm:$0xf]
    %v1386 = vld [vmem:[#allocation2 + $0x4c] sm:$0xf]
    %v1387 = vld [vmem:[#allocation2 + $0x50] sm:$0xf]
    %v1388 = vld [vmem:[#allocation2 + $0x54] sm:$0xf]
    %v1389 = vld [vmem:[#allocation2 + $0x58] sm:$0xf]
    %v1390 = vld [vmem:[#allocation2 + $0x5c] sm:$0xf]
    %v1391 = vld [vmem:[#allocation2 + $0x60] sm:$0xf]
    %v1392 = vld [vmem:[#allocation2 + $0x64] sm:$0xf]
    %v1393 = vld [vmem:[#allocation2 + $0x68] sm:$0xf]
    %v1394 = vld [vmem:[#allocation2 + $0x6c] sm:$0xf]
    %v1395 = vld [vmem:[#allocation2 + $0x70] sm:$0xf]
    %v1396 = vld [vmem:[#allocation2 + $0x74] sm:$0xf]
    %v1397 = vld [vmem:[#allocation2 + $0x78] sm:$0xf]
    %v1398 = vld [vmem:[#allocation2 + $0x7c] sm:$0xf]
    %v1399 = vld [vmem:[%s11] sm:$0x1]
    %v1400 = vpack.c.bf16 %v1361, %v1359
    %v1401 = vpack.c.bf16 %v1362, %v1360
    %v1402 = vpack.c.bf16 %v1365, %v1363
    %v1403 = vpack.c.bf16 %v1366, %v1364
    %v1405 = vlaneseq
    %v1406 = vshrl.u32 %v1405, 7
    %v1407 = vsub.s32 0, %v1406
    %v1408 = vrot.slane %v1399, %v1407
    %v1442 = vunpack.c.l.b16 %v1367
    %v1443 = vunpack.c.l.b16 %v1368
    %v1444 = vunpack.c.l.b16 %v1369
    %v1445 = vunpack.c.l.b16 %v1370
    %v1446 = vunpack.c.l.b16 %v1371
    %v1447 = vunpack.c.l.b16 %v1372
    %v1448 = vunpack.c.l.b16 %v1373
    %v1449 = vunpack.c.l.b16 %v1374
    %v1450 = vunpack.c.l.b16 %v1375
    %v1451 = vunpack.c.l.b16 %v1376
    %v1452 = vunpack.c.l.b16 %v1377
    %v1453 = vunpack.c.l.b16 %v1378
    %v1454 = vunpack.c.l.b16 %v1379
    %v1455 = vunpack.c.l.b16 %v1380
    %v1456 = vunpack.c.l.b16 %v1381
    %v1457 = vunpack.c.l.b16 %v1382
    %v1458 = vunpack.c.l.b16 %v1383
    %v1459 = vunpack.c.l.b16 %v1384
    %v1460 = vunpack.c.l.b16 %v1385
    %v1461 = vunpack.c.l.b16 %v1386
    %v1462 = vunpack.c.l.b16 %v1387
    %v1463 = vunpack.c.l.b16 %v1388
    %v1464 = vunpack.c.l.b16 %v1389
    %v1465 = vunpack.c.l.b16 %v1390
    %v1466 = vunpack.c.l.b16 %v1391
    %v1467 = vunpack.c.l.b16 %v1392
    %v1468 = vunpack.c.l.b16 %v1393
    %v1469 = vunpack.c.l.b16 %v1394
    %v1470 = vunpack.c.l.b16 %v1395
    %v1471 = vunpack.c.l.b16 %v1396
    %v1472 = vunpack.c.l.b16 %v1397
    %v1473 = vunpack.c.l.b16 %v1398
    %v1474 = vpack.c.b16 %v1443, %v1442
    %v1475 = vpack.c.b16 %v1445, %v1444
    %v1476 = vpack.c.b16 %v1447, %v1446
    %v1477 = vpack.c.b16 %v1449, %v1448
    %v1478 = vpack.c.b16 %v1451, %v1450
    %v1479 = vpack.c.b16 %v1453, %v1452
    %v1480 = vpack.c.b16 %v1455, %v1454
    %v1481 = vpack.c.b16 %v1457, %v1456
    %v1482 = vpack.c.b16 %v1459, %v1458
    %v1483 = vpack.c.b16 %v1461, %v1460
    %v1484 = vpack.c.b16 %v1463, %v1462
    %v1485 = vpack.c.b16 %v1465, %v1464
    %v1486 = vpack.c.b16 %v1467, %v1466
    %v1487 = vpack.c.b16 %v1469, %v1468
    %v1488 = vpack.c.b16 %v1471, %v1470
    %v1489 = vpack.c.b16 %v1473, %v1472
    %1506 = vmatprep.subr.bf16.mxu0 0
    %1507 = vmatpush1.bf16.msra.mxu0 %v1474
    %1508 = vmatprep.subr.bf16.mxu0 0
    %1509 = vmatpush1.bf16.msra.mxu0 %v1475
    %1510 = vmatprep.subr.bf16.mxu0 0
    %1511 = vmatpush1.bf16.msra.mxu0 %v1476
    %1512 = vmatprep.subr.bf16.mxu0 0
    %1513 = vmatpush1.bf16.msra.mxu0 %v1477
    %1514 = vmatprep.subr.bf16.mxu0 0
    %1515 = vmatpush1.bf16.msra.mxu0 %v1478
    %1516 = vmatprep.subr.bf16.mxu0 0
    %1517 = vmatpush1.bf16.msra.mxu0 %v1479
    %1518 = vmatprep.subr.bf16.mxu0 0
    %1519 = vmatpush1.bf16.msra.mxu0 %v1480
    %1520 = vmatprep.subr.bf16.mxu0 0
    %1521 = vmatpush1.bf16.msra.mxu0 %v1481
    %1522 = vmatprep.subr.bf16.mxu0 0
    %1523 = vmatpush1.bf16.msra.mxu0 %v1482
    %1524 = vmatprep.subr.bf16.mxu0 0
    %1525 = vmatpush1.bf16.msra.mxu0 %v1483
    %1526 = vmatprep.subr.bf16.mxu0 0
    %1527 = vmatpush1.bf16.msra.mxu0 %v1484
    %1528 = vmatprep.subr.bf16.mxu0 0
    %1529 = vmatpush1.bf16.msra.mxu0 %v1485
    %1530 = vmatprep.subr.bf16.mxu0 0
    %1531 = vmatpush1.bf16.msra.mxu0 %v1486
    %1532 = vmatprep.subr.bf16.mxu0 0
    %1533 = vmatpush1.bf16.msra.mxu0 %v1487
    %1534 = vmatprep.subr.bf16.mxu0 0
    %1535 = vmatpush1.bf16.msra.mxu0 %v1488
    %1536 = vmatprep.subr.bf16.mxu0 0
    %1537 = vmatpush1.bf16.msra.mxu0 %v1489
    %1538 = vmatprep.mubr.bf16.mxu0 %v1401
    %1539 = vmatmul.mubr.bf16.gmra.mrb[0].mxu0 %v1400
    %v1540 = vpop.f32.mrb[0].mxu0
    %v1541 = vadd.f32 %v1408, %v1540
    %v1542 = vpop.f32.mrb[0].mxu0
    %v1543 = vpop.f32.mrb[0].mxu0
    %v1544 = vadd.f32 %v1408, %v1543
    %v1545 = vpop.f32.mrb[0].mxu0
    %1546 = vmatprep.mubr.bf16.mxu0 %v1403
    %1547 = vmatmul.mubr.bf16.gmra.mrb[0].mxu0 %v1402
    %v1548 = vpop.f32.mrb[0].mxu0
    %v1549 = vadd.f32 %v1408, %v1548
    %v1550 = vpop.f32.mrb[0].mxu0
    %v1551 = vpop.f32.mrb[0].mxu0
    %v1552 = vadd.f32 %v1408, %v1551
    %v1553 = vpop.f32.mrb[0].mxu0
    %1554 = vdwg.mxu0
    %v1555 = vadd.f32 %v1541, %v1160
    %v1556 = vadd.f32 %v1544, %v1161
    %v1557 = vadd.f32 %v1549, %v1162
    %v1558 = vadd.f32 %v1552, %v1163
    %v1559 = vld [vmem:[%s12] sm:$0x1]
    %v1560 = vld [vmem:[%s13] sm:$0x1]
    %1561 = vadd.xlane.f32.xlu0 %v1555
    %v1562 = vpop.xlane.xlu0 %1561
    %1563 = vadd.xlane.f32.xlu0 %v1556
    %v1564 = vpop.xlane.xlu0 %1563
    %1565 = vadd.xlane.f32.xlu0 %v1557
    %v1566 = vpop.xlane.xlu0 %1565
    %1567 = vadd.xlane.f32.xlu0 %v1558
    %v1568 = vpop.xlane.xlu0 %1567
    %v1569 = vmul.f32 %v1562, %v103
    %v1570 = vmul.f32 %v1564, %v103
    %v1571 = vmul.f32 %v1566, %v103
    %v1572 = vmul.f32 %v1568, %v103
    %v1573 = vsub.f32 %v1555, %v1569
    %v1574 = vsub.f32 %v1556, %v1570
    %v1575 = vsub.f32 %v1557, %v1571
    %v1576 = vsub.f32 %v1558, %v1572
    %v1577 = vmul.f32 %v1573, %v1573
    %v1578 = vmul.f32 %v1574, %v1574
    %v1579 = vmul.f32 %v1575, %v1575
    %v1580 = vmul.f32 %v1576, %v1576
    %1581 = vadd.xlane.f32.xlu0 %v1577
    %v1582 = vpop.xlane.xlu0 %1581
    %1583 = vadd.xlane.f32.xlu0 %v1578
    %v1584 = vpop.xlane.xlu0 %1583
    %1585 = vadd.xlane.f32.xlu0 %v1579
    %v1586 = vpop.xlane.xlu0 %1585
    %1587 = vadd.xlane.f32.xlu0 %v1580
    %v1588 = vpop.xlane.xlu0 %1587
    %v1589 = vmul.f32 %v1582, %v103
    %v1590 = vmul.f32 %v1584, %v103
    %v1591 = vmul.f32 %v1586, %v103
    %v1592 = vmul.f32 %v1588, %v103
    %v1593 = vadd.f32 %v1589, 1e-12
    %v1594 = vadd.f32 %v1590, 1e-12
    %v1595 = vadd.f32 %v1591, 1e-12
    %v1596 = vadd.f32 %v1592, 1e-12
    %v1597 = vrsqrt.pop %v1593
    %v1598 = vrsqrt.pop %v1594
    %v1599 = vrsqrt.pop %v1595
    %v1600 = vrsqrt.pop %v1596
    %v1601 = vmul.f32 %v1573, %v1597
    %v1602 = vmul.f32 %v1574, %v1598
    %v1603 = vmul.f32 %v1575, %v1599
    %v1604 = vmul.f32 %v1576, %v1600
    %v1606 = vlaneseq
    %v1607 = vshrl.u32 %v1606, 7
    %v1608 = vsub.s32 0, %v1607
    %v1609 = vrot.slane %v1559, %v1608
    %v1611 = vmul.f32 %v1601, %v1609
    %v1612 = vmul.f32 %v1602, %v1609
    %v1613 = vmul.f32 %v1603, %v1609
    %v1614 = vmul.f32 %v1604, %v1609
    %v1616 = vlaneseq
    %v1617 = vshrl.u32 %v1616, 7
    %v1618 = vsub.s32 0, %v1617
    %v1619 = vrot.slane %v1560, %v1618
    %v1621 = vadd.f32 %v1611, %v1619
    %v1622 = vadd.f32 %v1612, %v1619
    %v1623 = vadd.f32 %v1613, %v1619
    %v1624 = vadd.f32 %v1614, %v1619
    %s1625 = scalar_lea.vmem %s2, 192
    %v1626 = vld [vmem:[%s1625] sm:$0xff]
    %v1627 = vld [vmem:[%s1625 + $0x8] sm:$0xf]
    %v1628 = vld [vmem:[%s1625 + $0xc] sm:$0xff]
    %v1629 = vld [vmem:[%s1625 + $0x14] sm:$0xf]
    %v1630 = vld [vmem:[%s1625 + $0x18] sm:$0xff]
    %v1631 = vld [vmem:[%s1625 + $0x20] sm:$0xf]
    %v1632 = vld [vmem:[%s1625 + $0x24] sm:$0xff]
    %v1633 = vld [vmem:[%s1625 + $0x2c] sm:$0xf]
    %v1634 = vld [vmem:[%s1625 + $0x30] sm:$0xff]
    %v1635 = vld [vmem:[%s1625 + $0x38] sm:$0xf]
    %v1636 = vld [vmem:[%s1625 + $0x3c] sm:$0xff]
    %v1637 = vld [vmem:[%s1625 + $0x44] sm:$0xf]
    %v1638 = vld [vmem:[%s1625 + $0x48] sm:$0xff]
    %v1639 = vld [vmem:[%s1625 + $0x50] sm:$0xf]
    %v1640 = vld [vmem:[%s1625 + $0x54] sm:$0xff]
    %v1641 = vld [vmem:[%s1625 + $0x5c] sm:$0xf]
    %v1642 = vld [vmem:[%s1625 + $0x60] sm:$0xff]
    %v1643 = vld [vmem:[%s1625 + $0x68] sm:$0xf]
    %v1644 = vld [vmem:[%s1625 + $0x6c] sm:$0xff]
    %v1645 = vld [vmem:[%s1625 + $0x74] sm:$0xf]
    %v1646 = vld [vmem:[%s1625 + $0x78] sm:$0xff]
    %v1647 = vld [vmem:[%s1625 + $0x80] sm:$0xf]
    %v1648 = vld [vmem:[%s1625 + $0x84] sm:$0xff]
    %v1649 = vld [vmem:[%s1625 + $0x8c] sm:$0xf]
    %v1650 = vld [vmem:[%s1625 + $0x90] sm:$0xff]
    %v1651 = vld [vmem:[%s1625 + $0x98] sm:$0xf]
    %v1652 = vld [vmem:[%s1625 + $0x9c] sm:$0xff]
    %v1653 = vld [vmem:[%s1625 + $0xa4] sm:$0xf]
    %v1654 = vld [vmem:[%s1625 + $0xa8] sm:$0xff]
    %v1655 = vld [vmem:[%s1625 + $0xb0] sm:$0xf]
    %v1656 = vld [vmem:[%s1625 + $0xb4] sm:$0xff]
    %v1657 = vld [vmem:[%s1625 + $0xbc] sm:$0xf]
    %s1658 = scalar_lea.vmem %s3, 3
    %v1659 = vld [vmem:[%s1658] sm:$0x7]
    %v1660 = vpack.c.bf16 %v1622, %v1621
    %v1661 = vpack.c.bf16 %v1624, %v1623
    %v1663 = vlaneseq
    %v1664 = vshrl.u32 %v1663, 7
    %v1665 = vsub.s32 0, %v1664
    %v1666 = vrot.slane %v1659, %v1665
    %v1667 = vlaneseq
    %v1668 = vshrl.u32 %v1667, 7
    %v1669 = vsub.s32 1, %v1668
    %v1670 = vrot.slane %v1659, %v1669
    %v1671 = vlaneseq
    %v1672 = vshrl.u32 %v1671, 7
    %v1673 = vsub.s32 2, %v1672
    %v1674 = vrot.slane %v1659, %v1673
    %v1710 = vunpack.c.l.b16 %v1626
    %v1711 = vunpack.c.h.b16 %v1626
    %v1712 = vunpack.c.l.b16 %v1627
    %v1713 = vunpack.c.l.b16 %v1628
    %v1714 = vunpack.c.h.b16 %v1628
    %v1715 = vunpack.c.l.b16 %v1629
    %v1716 = vunpack.c.l.b16 %v1630
    %v1717 = vunpack.c.h.b16 %v1630
    %v1718 = vunpack.c.l.b16 %v1631
    %v1719 = vunpack.c.l.b16 %v1632
    %v1720 = vunpack.c.h.b16 %v1632
    %v1721 = vunpack.c.l.b16 %v1633
    %v1722 = vunpack.c.l.b16 %v1634
    %v1723 = vunpack.c.h.b16 %v1634
    %v1724 = vunpack.c.l.b16 %v1635
    %v1725 = vunpack.c.l.b16 %v1636
    %v1726 = vunpack.c.h.b16 %v1636
    %v1727 = vunpack.c.l.b16 %v1637
    %v1728 = vunpack.c.l.b16 %v1638
    %v1729 = vunpack.c.h.b16 %v1638
    %v1730 = vunpack.c.l.b16 %v1639
    %v1731 = vunpack.c.l.b16 %v1640
    %v1732 = vunpack.c.h.b16 %v1640
    %v1733 = vunpack.c.l.b16 %v1641
    %v1734 = vunpack.c.l.b16 %v1642
    %v1735 = vunpack.c.h.b16 %v1642
    %v1736 = vunpack.c.l.b16 %v1643
    %v1737 = vunpack.c.l.b16 %v1644
    %v1738 = vunpack.c.h.b16 %v1644
    %v1739 = vunpack.c.l.b16 %v1645
    %v1740 = vunpack.c.l.b16 %v1646
    %v1741 = vunpack.c.h.b16 %v1646
    %v1742 = vunpack.c.l.b16 %v1647
    %v1743 = vunpack.c.l.b16 %v1648
    %v1744 = vunpack.c.h.b16 %v1648
    %v1745 = vunpack.c.l.b16 %v1649
    %v1746 = vunpack.c.l.b16 %v1650
    %v1747 = vunpack.c.h.b16 %v1650
    %v1748 = vunpack.c.l.b16 %v1651
    %v1749 = vunpack.c.l.b16 %v1652
    %v1750 = vunpack.c.h.b16 %v1652
    %v1751 = vunpack.c.l.b16 %v1653
    %v1752 = vunpack.c.l.b16 %v1654
    %v1753 = vunpack.c.h.b16 %v1654
    %v1754 = vunpack.c.l.b16 %v1655
    %v1755 = vunpack.c.l.b16 %v1656
    %v1756 = vunpack.c.h.b16 %v1656
    %v1757 = vunpack.c.l.b16 %v1657
    %v1758 = vpack.c.b16 %v1713, %v1710
    %v1759 = vpack.c.b16 %v1714, %v1711
    %v1760 = vpack.c.b16 %v1715, %v1712
    %v1761 = vpack.c.b16 %v1719, %v1716
    %v1762 = vpack.c.b16 %v1720, %v1717
    %v1763 = vpack.c.b16 %v1721, %v1718
    %v1764 = vpack.c.b16 %v1725, %v1722
    %v1765 = vpack.c.b16 %v1726, %v1723
    %v1766 = vpack.c.b16 %v1727, %v1724
    %v1767 = vpack.c.b16 %v1731, %v1728
    %v1768 = vpack.c.b16 %v1732, %v1729
    %v1769 = vpack.c.b16 %v1733, %v1730
    %v1770 = vpack.c.b16 %v1737, %v1734
    %v1771 = vpack.c.b16 %v1738, %v1735
    %v1772 = vpack.c.b16 %v1739, %v1736
    %v1773 = vpack.c.b16 %v1743, %v1740
    %v1774 = vpack.c.b16 %v1744, %v1741
    %v1775 = vpack.c.b16 %v1745, %v1742
    %v1776 = vpack.c.b16 %v1749, %v1746
    %v1777 = vpack.c.b16 %v1750, %v1747
    %v1778 = vpack.c.b16 %v1751, %v1748
    %v1779 = vpack.c.b16 %v1755, %v1752
    %v1780 = vpack.c.b16 %v1756, %v1753
    %v1781 = vpack.c.b16 %v1757, %v1754
    %1806 = vmatprep.subr.bf16.mxu0 %v1759
    %1807 = vmatpush1.bf16.msra.mxu0 %v1758
    %1808 = vmatprep.subr.bf16.mxu0 %v1762
    %1809 = vmatpush1.bf16.msra.mxu0 %v1761
    %1810 = vmatprep.subr.bf16.mxu0 %v1765
    %1811 = vmatpush1.bf16.msra.mxu0 %v1764
    %1812 = vmatprep.subr.bf16.mxu0 %v1768
    %1813 = vmatpush1.bf16.msra.mxu0 %v1767
    %1814 = vmatprep.subr.bf16.mxu0 %v1771
    %1815 = vmatpush1.bf16.msra.mxu0 %v1770
    %1816 = vmatprep.subr.bf16.mxu0 %v1774
    %1817 = vmatpush1.bf16.msra.mxu0 %v1773
    %1818 = vmatprep.subr.bf16.mxu0 %v1777
    %1819 = vmatpush1.bf16.msra.mxu0 %v1776
    %1820 = vmatprep.subr.bf16.mxu0 %v1780
    %1821 = vmatpush1.bf16.msra.mxu0 %v1779
    %1822 = vmatprep.subr.bf16.mxu0 0
    %1823 = vmatpush1.bf16.msra.mxu0 0
    %1824 = vmatprep.subr.bf16.mxu0 0
    %1825 = vmatpush1.bf16.msra.mxu0 0
    %1826 = vmatprep.subr.bf16.mxu0 0
    %1827 = vmatpush1.bf16.msra.mxu0 0
    %1828 = vmatprep.subr.bf16.mxu0 0
    %1829 = vmatpush1.bf16.msra.mxu0 0
    %1830 = vmatprep.subr.bf16.mxu0 0
    %1831 = vmatpush1.bf16.msra.mxu0 0
    %1832 = vmatprep.subr.bf16.mxu0 0
    %1833 = vmatpush1.bf16.msra.mxu0 0
    %1834 = vmatprep.subr.bf16.mxu0 0
    %1835 = vmatpush1.bf16.msra.mxu0 0
    %1836 = vmatprep.subr.bf16.mxu0 0
    %1837 = vmatpush1.bf16.msra.mxu0 0
    %1838 = vmatprep.mubr.bf16.mxu0 0
    %1839 = vmatmul.mubr.bf16.gmra.mrb[0].mxu0 %v1660
    %v1840 = vpop.f32.mrb[0].mxu0
    %v1841 = vadd.f32 %v1666, %v1840
    %v1842 = vpop.f32.mrb[0].mxu0
    %v1843 = vadd.f32 %v1670, %v1842
    %v1844 = vpop.f32.mrb[0].mxu0
    %v1845 = vadd.f32 %v1666, %v1844
    %v1846 = vpop.f32.mrb[0].mxu0
    %v1847 = vadd.f32 %v1670, %v1846
    %1848 = vmatprep.mubr.bf16.mxu0 0
    %1849 = vmatmul.mubr.bf16.gmra.mrb[0].mxu0 %v1661
    %v1850 = vpop.f32.mrb[0].mxu0
    %v1851 = vadd.f32 %v1666, %v1850
    %v1852 = vpop.f32.mrb[0].mxu0
    %v1853 = vadd.f32 %v1670, %v1852
    %v1854 = vpop.f32.mrb[0].mxu0
    %v1855 = vadd.f32 %v1666, %v1854
    %v1856 = vpop.f32.mrb[0].mxu0
    %v1857 = vadd.f32 %v1670, %v1856
    %1858 = vdwg.mxu0
    %1859 = vmatprep.subr.bf16.mxu0 0
    %1860 = vmatpush1.bf16.msra.mxu0 %v1760
    %1861 = vmatprep.subr.bf16.mxu0 0
    %1862 = vmatpush1.bf16.msra.mxu0 %v1763
    %1863 = vmatprep.subr.bf16.mxu0 0
    %1864 = vmatpush1.bf16.msra.mxu0 %v1766
    %1865 = vmatprep.subr.bf16.mxu0 0
    %1866 = vmatpush1.bf16.msra.mxu0 %v1769
    %1867 = vmatprep.subr.bf16.mxu0 0
    %1868 = vmatpush1.bf16.msra.mxu0 %v1772
    %1869 = vmatprep.subr.bf16.mxu0 0
    %1870 = vmatpush1.bf16.msra.mxu0 %v1775
    %1871 = vmatprep.subr.bf16.mxu0 0
    %1872 = vmatpush1.bf16.msra.mxu0 %v1778
    %1873 = vmatprep.subr.bf16.mxu0 0
    %1874 = vmatpush1.bf16.msra.mxu0 %v1781
    %1875 = vmatprep.subr.bf16.mxu0 0
    %1876 = vmatpush1.bf16.msra.mxu0 0
    %1877 = vmatprep.subr.bf16.mxu0 0
    %1878 = vmatpush1.bf16.msra.mxu0 0
    %1879 = vmatprep.subr.bf16.mxu0 0
    %1880 = vmatpush1.bf16.msra.mxu0 0
    %1881 = vmatprep.subr.bf16.mxu0 0
    %1882 = vmatpush1.bf16.msra.mxu0 0
    %1883 = vmatprep.subr.bf16.mxu0 0
    %1884 = vmatpush1.bf16.msra.mxu0 0
    %1885 = vmatprep.subr.bf16.mxu0 0
    %1886 = vmatpush1.bf16.msra.mxu0 0
    %1887 = vmatprep.subr.bf16.mxu0 0
    %1888 = vmatpush1.bf16.msra.mxu0 0
    %1889 = vmatprep.subr.bf16.mxu0 0
    %1890 = vmatpush1.bf16.msra.mxu0 0
    %1891 = vmatprep.mubr.bf16.mxu0 0
    %1892 = vmatmul.mubr.bf16.gmra.mrb[0].mxu0 %v1660
    %v1893 = vpop.f32.mrb[0].mxu0
    %v1894 = vadd.f32 %v1674, %v1893
    %v1895 = vpop.f32.mrb[0].mxu0
    %v1896 = vpop.f32.mrb[0].mxu0
    %v1897 = vadd.f32 %v1674, %v1896
    %v1898 = vpop.f32.mrb[0].mxu0
    %1899 = vmatprep.mubr.bf16.mxu0 0
    %1900 = vmatmul.mubr.bf16.gmra.mrb[0].mxu0 %v1661
    %v1901 = vpop.f32.mrb[0].mxu0
    %v1902 = vadd.f32 %v1674, %v1901
    %v1903 = vpop.f32.mrb[0].mxu0
    %v1904 = vpop.f32.mrb[0].mxu0
    %v1905 = vadd.f32 %v1674, %v1904
    %v1906 = vpop.f32.mrb[0].mxu0
    %1907 = vdwg.mxu0
    %v1908 = vpack.c.bf16 %v1845, %v1841
    %v1909 = vpack.c.bf16 %v1847, %v1843
    %v1910 = vpack.c.bf16 %v1897, %v1894
    %v1912 = vsel %vm447, %v1908, 0
    %v1915 = vsel %vm447, %v1909, 0
    %1917 = vmatprep.subr.bf16.mxu0 0
    %1918 = vmatpush1.bf16.xpose.msra.mxu0 %v1915
    %1919 = vmatprep.subr.bf16.mxu0 0
    %1920 = vmatpush1.bf16.xpose.msra.mxu0 0
    %1921 = vmatprep.subr.bf16.mxu0 0
    %1922 = vmatpush1.bf16.xpose.msra.mxu0 0
    %1923 = vmatprep.subr.bf16.mxu0 0
    %1924 = vmatpush1.bf16.xpose.msra.mxu0 0
    %1925 = vmatprep.subr.bf16.mxu0 0
    %1926 = vmatpush1.bf16.xpose.msra.mxu0 0
    %1927 = vmatprep.subr.bf16.mxu0 0
    %1928 = vmatpush1.bf16.xpose.msra.mxu0 0
    %1929 = vmatprep.subr.bf16.mxu0 0
    %1930 = vmatpush1.bf16.xpose.msra.mxu0 0
    %1931 = vmatprep.subr.bf16.mxu0 0
    %1932 = vmatpush1.bf16.xpose.msra.mxu0 0
    %1933 = vmatprep.subr.bf16.mxu0 0
    %1934 = vmatpush1.bf16.xpose.msra.mxu0 0
    %1935 = vmatprep.subr.bf16.mxu0 0
    %1936 = vmatpush1.bf16.xpose.msra.mxu0 0
    %1937 = vmatprep.subr.bf16.mxu0 0
    %1938 = vmatpush1.bf16.xpose.msra.mxu0 0
    %1939 = vmatprep.subr.bf16.mxu0 0
    %1940 = vmatpush1.bf16.xpose.msra.mxu0 0
    %1941 = vmatprep.subr.bf16.mxu0 0
    %1942 = vmatpush1.bf16.xpose.msra.mxu0 0
    %1943 = vmatprep.subr.bf16.mxu0 0
    %1944 = vmatpush1.bf16.xpose.msra.mxu0 0
    %1945 = vmatprep.subr.bf16.mxu0 0
    %1946 = vmatpush1.bf16.xpose.msra.mxu0 0
    %1947 = vmatprep.subr.bf16.mxu0 0
    %1948 = vmatpush1.bf16.xpose.msra.mxu0 0
    %1949 = vmatprep.mubr.bf16.mxu0 0
    %1950 = vmatmul.mubr.bf16.gmra.mrb[0].mxu0 %v1912
    %v1951 = vpop.f32.mrb[0].mxu0
    %v1952 = vadd.f32 0.0, %v1951
    %v1953 = vpop.f32.mrb[0].mxu0
    %v1954 = vpop.f32.mrb[0].mxu0
    %v1955 = vadd.f32 0.0, %v1954
    %v1956 = vpop.f32.mrb[0].mxu0
    %1957 = vdwg.mxu0
    %v1958 = vmul.f32 %v1952, 0.125
    %v1959 = vmul.f32 %v1955, 0.125
    %v1960 = vadd.f32 %v1958, %v500
    %v1961 = vadd.f32 %v1959, %v500
    %v1962 = vsel %vm503, %v1960, -inf
    %1963 = vmax.xlane.f32.xlu0 %v1962
    %v1964 = vpop.xlane.xlu0 %1963
    %v1965 = vsel %vm503, %v1961, -inf
    %1966 = vmax.xlane.f32.xlu0 %v1965
    %v1967 = vpop.xlane.xlu0 %1966
    %v1968 = vsub.f32 %v1960, %v1964
    %v1969 = vsub.f32 %v1961, %v1967
    %v1970 = vmul.f32 %v1968, 1.442695
    %v1971 = vpow.pop %v1970
    %v1972 = vmul.f32 %v1969, 1.442695
    %v1973 = vpow.pop %v1972
    %v1974 = vsel %vm503, %v1971, 0.0
    %1975 = vadd.xlane.f32.xlu0 %v1974
    %v1976 = vpop.xlane.xlu0 %1975
    %v1977 = vsel %vm503, %v1973, 0.0
    %1978 = vadd.xlane.f32.xlu0 %v1977
    %v1979 = vpop.xlane.xlu0 %1978
    %v1980 = vrcp.pop %v1976
    %v1981 = vrcp.pop %v1979
    %v1982 = vmul.f32 %v1971, %v1980
    %v1983 = vmul.f32 %v1973, %v1981
    %v1984 = vpack.c.bf16 %v1983, %v1982
    %v1986 = vsel %vm503, %v1984, 0
    %1988 = vmatprep.subr.bf16.mxu0 0
    %1989 = vmatpush1.bf16.msra.mxu0 %v1910
    %1990 = vmatprep.subr.bf16.mxu0 0
    %1991 = vmatpush1.bf16.msra.mxu0 0
    %1992 = vmatprep.subr.bf16.mxu0 0
    %1993 = vmatpush1.bf16.msra.mxu0 0
    %1994 = vmatprep.subr.bf16.mxu0 0
    %1995 = vmatpush1.bf16.msra.mxu0 0
    %1996 = vmatprep.subr.bf16.mxu0 0
    %1997 = vmatpush1.bf16.msra.mxu0 0
    %1998 = vmatprep.subr.bf16.mxu0 0
    %1999 = vmatpush1.bf16.msra.mxu0 0
    %2000 = vmatprep.subr.bf16.mxu0 0
    %2001 = vmatpush1.bf16.msra.mxu0 0
    %2002 = vmatprep.subr.bf16.mxu0 0
    %2003 = vmatpush1.bf16.msra.mxu0 0
    %2004 = vmatprep.subr.bf16.mxu0 0
    %2005 = vmatpush1.bf16.msra.mxu0 0
    %2006 = vmatprep.subr.bf16.mxu0 0
    %2007 = vmatpush1.bf16.msra.mxu0 0
    %2008 = vmatprep.subr.bf16.mxu0 0
    %2009 = vmatpush1.bf16.msra.mxu0 0
    %2010 = vmatprep.subr.bf16.mxu0 0
    %2011 = vmatpush1.bf16.msra.mxu0 0
    %2012 = vmatprep.subr.bf16.mxu0 0
    %2013 = vmatpush1.bf16.msra.mxu0 0
    %2014 = vmatprep.subr.bf16.mxu0 0
    %2015 = vmatpush1.bf16.msra.mxu0 0
    %2016 = vmatprep.subr.bf16.mxu0 0
    %2017 = vmatpush1.bf16.msra.mxu0 0
    %2018 = vmatprep.subr.bf16.mxu0 0
    %2019 = vmatpush1.bf16.msra.mxu0 0
    %2020 = vmatprep.mubr.bf16.mxu0 0
    %2021 = vmatmul.mubr.bf16.gmra.mrb[0].mxu0 %v1986
    %v2022 = vpop.f32.mrb[0].mxu0
    %v2023 = vadd.f32 0.0, %v2022
    %v2024 = vpop.f32.mrb[0].mxu0
    %v2025 = vpop.f32.mrb[0].mxu0
    %v2026 = vadd.f32 0.0, %v2025
    %v2027 = vpop.f32.mrb[0].mxu0
    %2028 = vdwg.mxu0
    %2030 = vrot.lane.b32.xlu0 %v1908, 64
    %v2031 = vpop.permute.xlu0 %2030
    %2033 = vrot.lane.b32.xlu0 %v1909, 64
    %v2034 = vpop.permute.xlu0 %2033
    %v2036 = vsel %vm447, %v2031, 0
    %v2039 = vsel %vm447, %v2034, 0
    %2041 = vmatprep.subr.bf16.mxu0 0
    %2042 = vmatpush1.bf16.xpose.msra.mxu0 %v2039
    %2043 = vmatprep.subr.bf16.mxu0 0
    %2044 = vmatpush1.bf16.xpose.msra.mxu0 0
    %2045 = vmatprep.subr.bf16.mxu0 0
    %2046 = vmatpush1.bf16.xpose.msra.mxu0 0
    %2047 = vmatprep.subr.bf16.mxu0 0
    %2048 = vmatpush1.bf16.xpose.msra.mxu0 0
    %2049 = vmatprep.subr.bf16.mxu0 0
    %2050 = vmatpush1.bf16.xpose.msra.mxu0 0
    %2051 = vmatprep.subr.bf16.mxu0 0
    %2052 = vmatpush1.bf16.xpose.msra.mxu0 0
    %2053 = vmatprep.subr.bf16.mxu0 0
    %2054 = vmatpush1.bf16.xpose.msra.mxu0 0
    %2055 = vmatprep.subr.bf16.mxu0 0
    %2056 = vmatpush1.bf16.xpose.msra.mxu0 0
    %2057 = vmatprep.subr.bf16.mxu0 0
    %2058 = vmatpush1.bf16.xpose.msra.mxu0 0
    %2059 = vmatprep.subr.bf16.mxu0 0
    %2060 = vmatpush1.bf16.xpose.msra.mxu0 0
    %2061 = vmatprep.subr.bf16.mxu0 0
    %2062 = vmatpush1.bf16.xpose.msra.mxu0 0
    %2063 = vmatprep.subr.bf16.mxu0 0
    %2064 = vmatpush1.bf16.xpose.msra.mxu0 0
    %2065 = vmatprep.subr.bf16.mxu0 0
    %2066 = vmatpush1.bf16.xpose.msra.mxu0 0
    %2067 = vmatprep.subr.bf16.mxu0 0
    %2068 = vmatpush1.bf16.xpose.msra.mxu0 0
    %2069 = vmatprep.subr.bf16.mxu0 0
    %2070 = vmatpush1.bf16.xpose.msra.mxu0 0
    %2071 = vmatprep.subr.bf16.mxu0 0
    %2072 = vmatpush1.bf16.xpose.msra.mxu0 0
    %2073 = vmatprep.mubr.bf16.mxu0 0
    %2074 = vmatmul.mubr.bf16.gmra.mrb[0].mxu0 %v2036
    %v2075 = vpop.f32.mrb[0].mxu0
    %v2076 = vadd.f32 0.0, %v2075
    %v2077 = vpop.f32.mrb[0].mxu0
    %v2078 = vpop.f32.mrb[0].mxu0
    %v2079 = vadd.f32 0.0, %v2078
    %v2080 = vpop.f32.mrb[0].mxu0
    %2081 = vdwg.mxu0
    %v2082 = vmul.f32 %v2076, 0.125
    %v2083 = vmul.f32 %v2079, 0.125
    %v2084 = vadd.f32 %v2082, %v500
    %v2085 = vadd.f32 %v2083, %v500
    %v2086 = vsel %vm503, %v2084, -inf
    %2087 = vmax.xlane.f32.xlu0 %v2086
    %v2088 = vpop.xlane.xlu0 %2087
    %v2089 = vsel %vm503, %v2085, -inf
    %2090 = vmax.xlane.f32.xlu0 %v2089
    %v2091 = vpop.xlane.xlu0 %2090
    %v2092 = vsub.f32 %v2084, %v2088
    %v2093 = vsub.f32 %v2085, %v2091
    %v2094 = vmul.f32 %v2092, 1.442695
    %v2095 = vpow.pop %v2094
    %v2096 = vmul.f32 %v2093, 1.442695
    %v2097 = vpow.pop %v2096
    %v2098 = vsel %vm503, %v2095, 0.0
    %2099 = vadd.xlane.f32.xlu0 %v2098
    %v2100 = vpop.xlane.xlu0 %2099
    %v2101 = vsel %vm503, %v2097, 0.0
    %2102 = vadd.xlane.f32.xlu0 %v2101
    %v2103 = vpop.xlane.xlu0 %2102
    %v2104 = vrcp.pop %v2100
    %v2105 = vrcp.pop %v2103
    %v2106 = vmul.f32 %v2095, %v2104
    %v2107 = vmul.f32 %v2097, %v2105
    %v2108 = vpack.c.bf16 %v2107, %v2106
    %2110 = vrot.lane.b32.xlu0 %v1910, 64
    %v2111 = vpop.permute.xlu0 %2110
    %v2114 = vsel %vm503, %v2108, 0
    %2116 = vmatprep.subr.bf16.mxu0 0
    %2117 = vmatpush1.bf16.msra.mxu0 %v2111
    %2118 = vmatprep.subr.bf16.mxu0 0
    %2119 = vmatpush1.bf16.msra.mxu0 0
    %2120 = vmatprep.subr.bf16.mxu0 0
    %2121 = vmatpush1.bf16.msra.mxu0 0
    %2122 = vmatprep.subr.bf16.mxu0 0
    %2123 = vmatpush1.bf16.msra.mxu0 0
    %2124 = vmatprep.subr.bf16.mxu0 0
    %2125 = vmatpush1.bf16.msra.mxu0 0
    %2126 = vmatprep.subr.bf16.mxu0 0
    %2127 = vmatpush1.bf16.msra.mxu0 0
    %2128 = vmatprep.subr.bf16.mxu0 0
    %2129 = vmatpush1.bf16.msra.mxu0 0
    %2130 = vmatprep.subr.bf16.mxu0 0
    %2131 = vmatpush1.bf16.msra.mxu0 0
    %2132 = vmatprep.subr.bf16.mxu0 0
    %2133 = vmatpush1.bf16.msra.mxu0 0
    %2134 = vmatprep.subr.bf16.mxu0 0
    %2135 = vmatpush1.bf16.msra.mxu0 0
    %2136 = vmatprep.subr.bf16.mxu0 0
    %2137 = vmatpush1.bf16.msra.mxu0 0
    %2138 = vmatprep.subr.bf16.mxu0 0
    %2139 = vmatpush1.bf16.msra.mxu0 0
    %2140 = vmatprep.subr.bf16.mxu0 0
    %2141 = vmatpush1.bf16.msra.mxu0 0
    %2142 = vmatprep.subr.bf16.mxu0 0
    %2143 = vmatpush1.bf16.msra.mxu0 0
    %2144 = vmatprep.subr.bf16.mxu0 0
    %2145 = vmatpush1.bf16.msra.mxu0 0
    %2146 = vmatprep.subr.bf16.mxu0 0
    %2147 = vmatpush1.bf16.msra.mxu0 0
    %2148 = vmatprep.mubr.bf16.mxu0 0
    %2149 = vmatmul.mubr.bf16.gmra.mrb[0].mxu0 %v2114
    %v2150 = vpop.f32.mrb[0].mxu0
    %v2151 = vadd.f32 0.0, %v2150
    %v2152 = vpop.f32.mrb[0].mxu0
    %v2153 = vpop.f32.mrb[0].mxu0
    %v2154 = vadd.f32 0.0, %v2153
    %v2155 = vpop.f32.mrb[0].mxu0
    %2156 = vdwg.mxu0
    %2159 = vrot.lane.b32.xlu0 %v2151, 64
    %v2160 = vpop.permute.xlu0 %2159
    %2161 = vrot.lane.b32.xlu0 %v2154, 64
    %v2162 = vpop.permute.xlu0 %2161
    %v2165 = vsel %vm447, %v2023, %v2160
    %v2166 = vsel %vm447, %v2026, %v2162
    %v2167 = vpack.c.bf16 %v1855, %v1851
    %v2168 = vpack.c.bf16 %v1857, %v1853
    %v2169 = vpack.c.bf16 %v1905, %v1902
    %v2171 = vsel %vm447, %v2167, 0
    %v2174 = vsel %vm447, %v2168, 0
    %2176 = vmatprep.subr.bf16.mxu0 0
    %2177 = vmatpush1.bf16.xpose.msra.mxu0 %v2174
    %2178 = vmatprep.subr.bf16.mxu0 0
    %2179 = vmatpush1.bf16.xpose.msra.mxu0 0
    %2180 = vmatprep.subr.bf16.mxu0 0
    %2181 = vmatpush1.bf16.xpose.msra.mxu0 0
    %2182 = vmatprep.subr.bf16.mxu0 0
    %2183 = vmatpush1.bf16.xpose.msra.mxu0 0
    %2184 = vmatprep.subr.bf16.mxu0 0
    %2185 = vmatpush1.bf16.xpose.msra.mxu0 0
    %2186 = vmatprep.subr.bf16.mxu0 0
    %2187 = vmatpush1.bf16.xpose.msra.mxu0 0
    %2188 = vmatprep.subr.bf16.mxu0 0
    %2189 = vmatpush1.bf16.xpose.msra.mxu0 0
    %2190 = vmatprep.subr.bf16.mxu0 0
    %2191 = vmatpush1.bf16.xpose.msra.mxu0 0
    %2192 = vmatprep.subr.bf16.mxu0 0
    %2193 = vmatpush1.bf16.xpose.msra.mxu0 0
    %2194 = vmatprep.subr.bf16.mxu0 0
    %2195 = vmatpush1.bf16.xpose.msra.mxu0 0
    %2196 = vmatprep.subr.bf16.mxu0 0
    %2197 = vmatpush1.bf16.xpose.msra.mxu0 0
    %2198 = vmatprep.subr.bf16.mxu0 0
    %2199 = vmatpush1.bf16.xpose.msra.mxu0 0
    %2200 = vmatprep.subr.bf16.mxu0 0
    %2201 = vmatpush1.bf16.xpose.msra.mxu0 0
    %2202 = vmatprep.subr.bf16.mxu0 0
    %2203 = vmatpush1.bf16.xpose.msra.mxu0 0
    %2204 = vmatprep.subr.bf16.mxu0 0
    %2205 = vmatpush1.bf16.xpose.msra.mxu0 0
    %2206 = vmatprep.subr.bf16.mxu0 0
    %2207 = vmatpush1.bf16.xpose.msra.mxu0 0
    %2208 = vmatprep.mubr.bf16.mxu0 0
    %2209 = vmatmul.mubr.bf16.gmra.mrb[0].mxu0 %v2171
    %v2210 = vpop.f32.mrb[0].mxu0
    %v2211 = vadd.f32 0.0, %v2210
    %v2212 = vpop.f32.mrb[0].mxu0
    %v2213 = vpop.f32.mrb[0].mxu0
    %v2214 = vadd.f32 0.0, %v2213
    %v2215 = vpop.f32.mrb[0].mxu0
    %2216 = vdwg.mxu0
    %v2217 = vmul.f32 %v2211, 0.125
    %v2218 = vmul.f32 %v2214, 0.125
    %v2219 = vadd.f32 %v2217, %v764
    %v2220 = vadd.f32 %v2218, %v764
    %v2221 = vsel %vm503, %v2219, -inf
    %2222 = vmax.xlane.f32.xlu0 %v2221
    %v2223 = vpop.xlane.xlu0 %2222
    %v2224 = vsel %vm503, %v2220, -inf
    %2225 = vmax.xlane.f32.xlu0 %v2224
    %v2226 = vpop.xlane.xlu0 %2225
    %v2227 = vsub.f32 %v2219, %v2223
    %v2228 = vsub.f32 %v2220, %v2226
    %v2229 = vmul.f32 %v2227, 1.442695
    %v2230 = vpow.pop %v2229
    %v2231 = vmul.f32 %v2228, 1.442695
    %v2232 = vpow.pop %v2231
    %v2233 = vsel %vm503, %v2230, 0.0
    %2234 = vadd.xlane.f32.xlu0 %v2233
    %v2235 = vpop.xlane.xlu0 %2234
    %v2236 = vsel %vm503, %v2232, 0.0
    %2237 = vadd.xlane.f32.xlu0 %v2236
    %v2238 = vpop.xlane.xlu0 %2237
    %v2239 = vrcp.pop %v2235
    %v2240 = vrcp.pop %v2238
    %v2241 = vmul.f32 %v2230, %v2239
    %v2242 = vmul.f32 %v2232, %v2240
    %v2243 = vpack.c.bf16 %v2242, %v2241
    %v2245 = vsel %vm503, %v2243, 0
    %2247 = vmatprep.subr.bf16.mxu0 0
    %2248 = vmatpush1.bf16.msra.mxu0 %v2169
    %2249 = vmatprep.subr.bf16.mxu0 0
    %2250 = vmatpush1.bf16.msra.mxu0 0
    %2251 = vmatprep.subr.bf16.mxu0 0
    %2252 = vmatpush1.bf16.msra.mxu0 0
    %2253 = vmatprep.subr.bf16.mxu0 0
    %2254 = vmatpush1.bf16.msra.mxu0 0
    %2255 = vmatprep.subr.bf16.mxu0 0
    %2256 = vmatpush1.bf16.msra.mxu0 0
    %2257 = vmatprep.subr.bf16.mxu0 0
    %2258 = vmatpush1.bf16.msra.mxu0 0
    %2259 = vmatprep.subr.bf16.mxu0 0
    %2260 = vmatpush1.bf16.msra.mxu0 0
    %2261 = vmatprep.subr.bf16.mxu0 0
    %2262 = vmatpush1.bf16.msra.mxu0 0
    %2263 = vmatprep.subr.bf16.mxu0 0
    %2264 = vmatpush1.bf16.msra.mxu0 0
    %2265 = vmatprep.subr.bf16.mxu0 0
    %2266 = vmatpush1.bf16.msra.mxu0 0
    %2267 = vmatprep.subr.bf16.mxu0 0
    %2268 = vmatpush1.bf16.msra.mxu0 0
    %2269 = vmatprep.subr.bf16.mxu0 0
    %2270 = vmatpush1.bf16.msra.mxu0 0
    %2271 = vmatprep.subr.bf16.mxu0 0
    %2272 = vmatpush1.bf16.msra.mxu0 0
    %2273 = vmatprep.subr.bf16.mxu0 0
    %2274 = vmatpush1.bf16.msra.mxu0 0
    %2275 = vmatprep.subr.bf16.mxu0 0
    %2276 = vmatpush1.bf16.msra.mxu0 0
    %2277 = vmatprep.subr.bf16.mxu0 0
    %2278 = vmatpush1.bf16.msra.mxu0 0
    %2279 = vmatprep.mubr.bf16.mxu0 0
    %2280 = vmatmul.mubr.bf16.gmra.mrb[0].mxu0 %v2245
    %v2281 = vpop.f32.mrb[0].mxu0
    %v2282 = vadd.f32 0.0, %v2281
    %v2283 = vpop.f32.mrb[0].mxu0
    %v2284 = vpop.f32.mrb[0].mxu0
    %v2285 = vadd.f32 0.0, %v2284
    %v2286 = vpop.f32.mrb[0].mxu0
    %2287 = vdwg.mxu0
    %2289 = vrot.lane.b32.xlu0 %v2167, 64
    %v2290 = vpop.permute.xlu0 %2289
    %2292 = vrot.lane.b32.xlu0 %v2168, 64
    %v2293 = vpop.permute.xlu0 %2292
    %v2295 = vsel %vm447, %v2290, 0
    %v2298 = vsel %vm447, %v2293, 0
    %2300 = vmatprep.subr.bf16.mxu0 0
    %2301 = vmatpush1.bf16.xpose.msra.mxu0 %v2298
    %2302 = vmatprep.subr.bf16.mxu0 0
    %2303 = vmatpush1.bf16.xpose.msra.mxu0 0
    %2304 = vmatprep.subr.bf16.mxu0 0
    %2305 = vmatpush1.bf16.xpose.msra.mxu0 0
    %2306 = vmatprep.subr.bf16.mxu0 0
    %2307 = vmatpush1.bf16.xpose.msra.mxu0 0
    %2308 = vmatprep.subr.bf16.mxu0 0
    %2309 = vmatpush1.bf16.xpose.msra.mxu0 0
    %2310 = vmatprep.subr.bf16.mxu0 0
    %2311 = vmatpush1.bf16.xpose.msra.mxu0 0
    %2312 = vmatprep.subr.bf16.mxu0 0
    %2313 = vmatpush1.bf16.xpose.msra.mxu0 0
    %2314 = vmatprep.subr.bf16.mxu0 0
    %2315 = vmatpush1.bf16.xpose.msra.mxu0 0
    %2316 = vmatprep.subr.bf16.mxu0 0
    %2317 = vmatpush1.bf16.xpose.msra.mxu0 0
    %2318 = vmatprep.subr.bf16.mxu0 0
    %2319 = vmatpush1.bf16.xpose.msra.mxu0 0
    %2320 = vmatprep.subr.bf16.mxu0 0
    %2321 = vmatpush1.bf16.xpose.msra.mxu0 0
    %2322 = vmatprep.subr.bf16.mxu0 0
    %2323 = vmatpush1.bf16.xpose.msra.mxu0 0
    %2324 = vmatprep.subr.bf16.mxu0 0
    %2325 = vmatpush1.bf16.xpose.msra.mxu0 0
    %2326 = vmatprep.subr.bf16.mxu0 0
    %2327 = vmatpush1.bf16.xpose.msra.mxu0 0
    %2328 = vmatprep.subr.bf16.mxu0 0
    %2329 = vmatpush1.bf16.xpose.msra.mxu0 0
    %2330 = vmatprep.subr.bf16.mxu0 0
    %2331 = vmatpush1.bf16.xpose.msra.mxu0 0
    %2332 = vmatprep.mubr.bf16.mxu0 0
    %2333 = vmatmul.mubr.bf16.gmra.mrb[0].mxu0 %v2295
    %v2334 = vpop.f32.mrb[0].mxu0
    %v2335 = vadd.f32 0.0, %v2334
    %v2336 = vpop.f32.mrb[0].mxu0
    %v2337 = vpop.f32.mrb[0].mxu0
    %v2338 = vadd.f32 0.0, %v2337
    %v2339 = vpop.f32.mrb[0].mxu0
    %2340 = vdwg.mxu0
    %v2341 = vmul.f32 %v2335, 0.125
    %v2342 = vmul.f32 %v2338, 0.125
    %v2343 = vadd.f32 %v2341, %v764
    %v2344 = vadd.f32 %v2342, %v764
    %v2345 = vsel %vm503, %v2343, -inf
    %2346 = vmax.xlane.f32.xlu0 %v2345
    %v2347 = vpop.xlane.xlu0 %2346
    %v2348 = vsel %vm503, %v2344, -inf
    %2349 = vmax.xlane.f32.xlu0 %v2348
    %v2350 = vpop.xlane.xlu0 %2349
    %v2351 = vsub.f32 %v2343, %v2347
    %v2352 = vsub.f32 %v2344, %v2350
    %v2353 = vmul.f32 %v2351, 1.442695
    %v2354 = vpow.pop %v2353
    %v2355 = vmul.f32 %v2352, 1.442695
    %v2356 = vpow.pop %v2355
    %v2357 = vsel %vm503, %v2354, 0.0
    %2358 = vadd.xlane.f32.xlu0 %v2357
    %v2359 = vpop.xlane.xlu0 %2358
    %v2360 = vsel %vm503, %v2356, 0.0
    %2361 = vadd.xlane.f32.xlu0 %v2360
    %v2362 = vpop.xlane.xlu0 %2361
    %v2363 = vrcp.pop %v2359
    %v2364 = vrcp.pop %v2362
    %v2365 = vmul.f32 %v2354, %v2363
    %v2366 = vmul.f32 %v2356, %v2364
    %v2367 = vpack.c.bf16 %v2366, %v2365
    %2369 = vrot.lane.b32.xlu0 %v2169, 64
    %v2370 = vpop.permute.xlu0 %2369
    %v2373 = vsel %vm503, %v2367, 0
    %2375 = vmatprep.subr.bf16.mxu0 0
    %2376 = vmatpush1.bf16.msra.mxu0 %v2370
    %2377 = vmatprep.subr.bf16.mxu0 0
    %2378 = vmatpush1.bf16.msra.mxu0 0
    %2379 = vmatprep.subr.bf16.mxu0 0
    %2380 = vmatpush1.bf16.msra.mxu0 0
    %2381 = vmatprep.subr.bf16.mxu0 0
    %2382 = vmatpush1.bf16.msra.mxu0 0
    %2383 = vmatprep.subr.bf16.mxu0 0
    %2384 = vmatpush1.bf16.msra.mxu0 0
    %2385 = vmatprep.subr.bf16.mxu0 0
    %2386 = vmatpush1.bf16.msra.mxu0 0
    %2387 = vmatprep.subr.bf16.mxu0 0
    %2388 = vmatpush1.bf16.msra.mxu0 0
    %2389 = vmatprep.subr.bf16.mxu0 0
    %2390 = vmatpush1.bf16.msra.mxu0 0
    %2391 = vmatprep.subr.bf16.mxu0 0
    %2392 = vmatpush1.bf16.msra.mxu0 0
    %2393 = vmatprep.subr.bf16.mxu0 0
    %2394 = vmatpush1.bf16.msra.mxu0 0
    %2395 = vmatprep.subr.bf16.mxu0 0
    %2396 = vmatpush1.bf16.msra.mxu0 0
    %2397 = vmatprep.subr.bf16.mxu0 0
    %2398 = vmatpush1.bf16.msra.mxu0 0
    %2399 = vmatprep.subr.bf16.mxu0 0
    %2400 = vmatpush1.bf16.msra.mxu0 0
    %2401 = vmatprep.subr.bf16.mxu0 0
    %2402 = vmatpush1.bf16.msra.mxu0 0
    %2403 = vmatprep.subr.bf16.mxu0 0
    %2404 = vmatpush1.bf16.msra.mxu0 0
    %2405 = vmatprep.subr.bf16.mxu0 0
    %2406 = vmatpush1.bf16.msra.mxu0 0
    %2407 = vmatprep.mubr.bf16.mxu0 0
    %2408 = vmatmul.mubr.bf16.gmra.mrb[0].mxu0 %v2373
    %v2409 = vpop.f32.mrb[0].mxu0
    %v2410 = vadd.f32 0.0, %v2409
    %v2411 = vpop.f32.mrb[0].mxu0
    %v2412 = vpop.f32.mrb[0].mxu0
    %v2413 = vadd.f32 0.0, %v2412
    %v2414 = vpop.f32.mrb[0].mxu0
    %2415 = vdwg.mxu0
    %2418 = vrot.lane.b32.xlu0 %v2410, 64
    %v2419 = vpop.permute.xlu0 %2418
    %2420 = vrot.lane.b32.xlu0 %v2413, 64
    %v2421 = vpop.permute.xlu0 %2420
    %v2424 = vsel %vm447, %v2282, %v2419
    %v2425 = vsel %vm447, %v2285, %v2421
    %s2426 = scalar_lea.vmem %s4, 64
    %v2427 = vld [vmem:[%s2426] sm:$0xf]
    %v2428 = vld [vmem:[%s2426 + $0x4] sm:$0xf]
    %v2429 = vld [vmem:[%s2426 + $0x8] sm:$0xf]
    %v2430 = vld [vmem:[%s2426 + $0xc] sm:$0xf]
    %v2431 = vld [vmem:[%s2426 + $0x10] sm:$0xf]
    %v2432 = vld [vmem:[%s2426 + $0x14] sm:$0xf]
    %v2433 = vld [vmem:[%s2426 + $0x18] sm:$0xf]
    %v2434 = vld [vmem:[%s2426 + $0x1c] sm:$0xf]
    %v2435 = vld [vmem:[%s2426 + $0x20] sm:$0xf]
    %v2436 = vld [vmem:[%s2426 + $0x24] sm:$0xf]
    %v2437 = vld [vmem:[%s2426 + $0x28] sm:$0xf]
    %v2438 = vld [vmem:[%s2426 + $0x2c] sm:$0xf]
    %v2439 = vld [vmem:[%s2426 + $0x30] sm:$0xf]
    %v2440 = vld [vmem:[%s2426 + $0x34] sm:$0xf]
    %v2441 = vld [vmem:[%s2426 + $0x38] sm:$0xf]
    %v2442 = vld [vmem:[%s2426 + $0x3c] sm:$0xf]
    %s2443 = scalar_lea.vmem %s5, 1
    %v2444 = vld [vmem:[%s2443] sm:$0x1]
    %v2445 = vpack.c.bf16 %v2166, %v2165
    %v2446 = vpack.c.bf16 %v2425, %v2424
    %v2448 = vlaneseq
    %v2449 = vshrl.u32 %v2448, 7
    %v2450 = vsub.s32 0, %v2449
    %v2451 = vrot.slane %v2444, %v2450
    %v2469 = vunpack.c.l.b16 %v2427
    %v2470 = vunpack.c.l.b16 %v2428
    %v2471 = vunpack.c.l.b16 %v2429
    %v2472 = vunpack.c.l.b16 %v2430
    %v2473 = vunpack.c.l.b16 %v2431
    %v2474 = vunpack.c.l.b16 %v2432
    %v2475 = vunpack.c.l.b16 %v2433
    %v2476 = vunpack.c.l.b16 %v2434
    %v2477 = vunpack.c.l.b16 %v2435
    %v2478 = vunpack.c.l.b16 %v2436
    %v2479 = vunpack.c.l.b16 %v2437
    %v2480 = vunpack.c.l.b16 %v2438
    %v2481 = vunpack.c.l.b16 %v2439
    %v2482 = vunpack.c.l.b16 %v2440
    %v2483 = vunpack.c.l.b16 %v2441
    %v2484 = vunpack.c.l.b16 %v2442
    %v2485 = vpack.c.b16 %v2470, %v2469
    %v2486 = vpack.c.b16 %v2472, %v2471
    %v2487 = vpack.c.b16 %v2474, %v2473
    %v2488 = vpack.c.b16 %v2476, %v2475
    %v2489 = vpack.c.b16 %v2478, %v2477
    %v2490 = vpack.c.b16 %v2480, %v2479
    %v2491 = vpack.c.b16 %v2482, %v2481
    %v2492 = vpack.c.b16 %v2484, %v2483
    %2501 = vmatprep.subr.bf16.mxu0 0
    %2502 = vmatpush1.bf16.msra.mxu0 %v2485
    %2503 = vmatprep.subr.bf16.mxu0 0
    %2504 = vmatpush1.bf16.msra.mxu0 %v2486
    %2505 = vmatprep.subr.bf16.mxu0 0
    %2506 = vmatpush1.bf16.msra.mxu0 %v2487
    %2507 = vmatprep.subr.bf16.mxu0 0
    %2508 = vmatpush1.bf16.msra.mxu0 %v2488
    %2509 = vmatprep.subr.bf16.mxu0 0
    %2510 = vmatpush1.bf16.msra.mxu0 %v2489
    %2511 = vmatprep.subr.bf16.mxu0 0
    %2512 = vmatpush1.bf16.msra.mxu0 %v2490
    %2513 = vmatprep.subr.bf16.mxu0 0
    %2514 = vmatpush1.bf16.msra.mxu0 %v2491
    %2515 = vmatprep.subr.bf16.mxu0 0
    %2516 = vmatpush1.bf16.msra.mxu0 %v2492
    %2517 = vmatprep.subr.bf16.mxu0 0
    %2518 = vmatpush1.bf16.msra.mxu0 0
    %2519 = vmatprep.subr.bf16.mxu0 0
    %2520 = vmatpush1.bf16.msra.mxu0 0
    %2521 = vmatprep.subr.bf16.mxu0 0
    %2522 = vmatpush1.bf16.msra.mxu0 0
    %2523 = vmatprep.subr.bf16.mxu0 0
    %2524 = vmatpush1.bf16.msra.mxu0 0
    %2525 = vmatprep.subr.bf16.mxu0 0
    %2526 = vmatpush1.bf16.msra.mxu0 0
    %2527 = vmatprep.subr.bf16.mxu0 0
    %2528 = vmatpush1.bf16.msra.mxu0 0
    %2529 = vmatprep.subr.bf16.mxu0 0
    %2530 = vmatpush1.bf16.msra.mxu0 0
    %2531 = vmatprep.subr.bf16.mxu0 0
    %2532 = vmatpush1.bf16.msra.mxu0 0
    %2533 = vmatprep.mubr.bf16.mxu0 0
    %2534 = vmatmul.mubr.bf16.gmra.mrb[0].mxu0 %v2445
    %v2535 = vpop.f32.mrb[0].mxu0
    %v2536 = vadd.f32 %v2451, %v2535
    %v2537 = vpop.f32.mrb[0].mxu0
    %v2538 = vpop.f32.mrb[0].mxu0
    %v2539 = vadd.f32 %v2451, %v2538
    %v2540 = vpop.f32.mrb[0].mxu0
    %2541 = vmatprep.mubr.bf16.mxu0 0
    %2542 = vmatmul.mubr.bf16.gmra.mrb[0].mxu0 %v2446
    %v2543 = vpop.f32.mrb[0].mxu0
    %v2544 = vadd.f32 %v2451, %v2543
    %v2545 = vpop.f32.mrb[0].mxu0
    %v2546 = vpop.f32.mrb[0].mxu0
    %v2547 = vadd.f32 %v2451, %v2546
    %v2548 = vpop.f32.mrb[0].mxu0
    %2549 = vdwg.mxu0
    %v2550 = vadd.f32 %v2536, %v1621
    %v2551 = vadd.f32 %v2539, %v1622
    %v2552 = vadd.f32 %v2544, %v1623
    %v2553 = vadd.f32 %v2547, %v1624
    %s2554 = scalar_lea.vmem %s6, 1
    %v2555 = vld [vmem:[%s2554] sm:$0x1]
    %s2556 = scalar_lea.vmem %s7, 1
    %v2557 = vld [vmem:[%s2556] sm:$0x1]
    %2558 = vadd.xlane.f32.xlu0 %v2550
    %v2559 = vpop.xlane.xlu0 %2558
    %2560 = vadd.xlane.f32.xlu0 %v2551
    %v2561 = vpop.xlane.xlu0 %2560
    %2562 = vadd.xlane.f32.xlu0 %v2552
    %v2563 = vpop.xlane.xlu0 %2562
    %2564 = vadd.xlane.f32.xlu0 %v2553
    %v2565 = vpop.xlane.xlu0 %2564
    %v2566 = vmul.f32 %v2559, %v103
    %v2567 = vmul.f32 %v2561, %v103
    %v2568 = vmul.f32 %v2563, %v103
    %v2569 = vmul.f32 %v2565, %v103
    %v2570 = vsub.f32 %v2550, %v2566
    %v2571 = vsub.f32 %v2551, %v2567
    %v2572 = vsub.f32 %v2552, %v2568
    %v2573 = vsub.f32 %v2553, %v2569
    %v2574 = vmul.f32 %v2570, %v2570
    %v2575 = vmul.f32 %v2571, %v2571
    %v2576 = vmul.f32 %v2572, %v2572
    %v2577 = vmul.f32 %v2573, %v2573
    %2578 = vadd.xlane.f32.xlu0 %v2574
    %v2579 = vpop.xlane.xlu0 %2578
    %2580 = vadd.xlane.f32.xlu0 %v2575
    %v2581 = vpop.xlane.xlu0 %2580
    %2582 = vadd.xlane.f32.xlu0 %v2576
    %v2583 = vpop.xlane.xlu0 %2582
    %2584 = vadd.xlane.f32.xlu0 %v2577
    %v2585 = vpop.xlane.xlu0 %2584
    %v2586 = vmul.f32 %v2579, %v103
    %v2587 = vmul.f32 %v2581, %v103
    %v2588 = vmul.f32 %v2583, %v103
    %v2589 = vmul.f32 %v2585, %v103
    %v2590 = vadd.f32 %v2586, 1e-12
    %v2591 = vadd.f32 %v2587, 1e-12
    %v2592 = vadd.f32 %v2588, 1e-12
    %v2593 = vadd.f32 %v2589, 1e-12
    %v2594 = vrsqrt.pop %v2590
    %v2595 = vrsqrt.pop %v2591
    %v2596 = vrsqrt.pop %v2592
    %v2597 = vrsqrt.pop %v2593
    %v2598 = vmul.f32 %v2570, %v2594
    %v2599 = vmul.f32 %v2571, %v2595
    %v2600 = vmul.f32 %v2572, %v2596
    %v2601 = vmul.f32 %v2573, %v2597
    %v2603 = vlaneseq
    %v2604 = vshrl.u32 %v2603, 7
    %v2605 = vsub.s32 0, %v2604
    %v2606 = vrot.slane %v2555, %v2605
    %v2608 = vmul.f32 %v2598, %v2606
    %v2609 = vmul.f32 %v2599, %v2606
    %v2610 = vmul.f32 %v2600, %v2606
    %v2611 = vmul.f32 %v2601, %v2606
    %v2613 = vlaneseq
    %v2614 = vshrl.u32 %v2613, 7
    %v2615 = vsub.s32 0, %v2614
    %v2616 = vrot.slane %v2557, %v2615
    %v2618 = vadd.f32 %v2608, %v2616
    %v2619 = vadd.f32 %v2609, %v2616
    %v2620 = vadd.f32 %v2610, %v2616
    %v2621 = vadd.f32 %v2611, %v2616
    %s2622 = scalar_lea.vmem %s8, 128
    %v2623 = vld [vmem:[%s2622] sm:$0xff]
    %v2624 = vld [vmem:[%s2622 + $0x8] sm:$0xff]
    %v2625 = vld [vmem:[%s2622 + $0x10] sm:$0xff]
    %v2626 = vld [vmem:[%s2622 + $0x18] sm:$0xff]
    %v2627 = vld [vmem:[%s2622 + $0x20] sm:$0xff]
    %v2628 = vld [vmem:[%s2622 + $0x28] sm:$0xff]
    %v2629 = vld [vmem:[%s2622 + $0x30] sm:$0xff]
    %v2630 = vld [vmem:[%s2622 + $0x38] sm:$0xff]
    %v2631 = vld [vmem:[%s2622 + $0x40] sm:$0xff]
    %v2632 = vld [vmem:[%s2622 + $0x48] sm:$0xff]
    %v2633 = vld [vmem:[%s2622 + $0x50] sm:$0xff]
    %v2634 = vld [vmem:[%s2622 + $0x58] sm:$0xff]
    %v2635 = vld [vmem:[%s2622 + $0x60] sm:$0xff]
    %v2636 = vld [vmem:[%s2622 + $0x68] sm:$0xff]
    %v2637 = vld [vmem:[%s2622 + $0x70] sm:$0xff]
    %v2638 = vld [vmem:[%s2622 + $0x78] sm:$0xff]
    %s2639 = scalar_lea.vmem %s9, 2
    %v2640 = vld [vmem:[%s2639] sm:$0x3]
    %v2641 = vpack.c.bf16 %v2619, %v2618
    %v2642 = vpack.c.bf16 %v2621, %v2620
    %v2644 = vlaneseq
    %v2645 = vshrl.u32 %v2644, 7
    %v2646 = vsub.s32 0, %v2645
    %v2647 = vrot.slane %v2640, %v2646
    %v2648 = vlaneseq
    %v2649 = vshrl.u32 %v2648, 7
    %v2650 = vsub.s32 1, %v2649
    %v2651 = vrot.slane %v2640, %v2650
    %v2670 = vunpack.c.l.b16 %v2623
    %v2671 = vunpack.c.h.b16 %v2623
    %v2672 = vunpack.c.l.b16 %v2624
    %v2673 = vunpack.c.h.b16 %v2624
    %v2674 = vunpack.c.l.b16 %v2625
    %v2675 = vunpack.c.h.b16 %v2625
    %v2676 = vunpack.c.l.b16 %v2626
    %v2677 = vunpack.c.h.b16 %v2626
    %v2678 = vunpack.c.l.b16 %v2627
    %v2679 = vunpack.c.h.b16 %v2627
    %v2680 = vunpack.c.l.b16 %v2628
    %v2681 = vunpack.c.h.b16 %v2628
    %v2682 = vunpack.c.l.b16 %v2629
    %v2683 = vunpack.c.h.b16 %v2629
    %v2684 = vunpack.c.l.b16 %v2630
    %v2685 = vunpack.c.h.b16 %v2630
    %v2686 = vunpack.c.l.b16 %v2631
    %v2687 = vunpack.c.h.b16 %v2631
    %v2688 = vunpack.c.l.b16 %v2632
    %v2689 = vunpack.c.h.b16 %v2632
    %v2690 = vunpack.c.l.b16 %v2633
    %v2691 = vunpack.c.h.b16 %v2633
    %v2692 = vunpack.c.l.b16 %v2634
    %v2693 = vunpack.c.h.b16 %v2634
    %v2694 = vunpack.c.l.b16 %v2635
    %v2695 = vunpack.c.h.b16 %v2635
    %v2696 = vunpack.c.l.b16 %v2636
    %v2697 = vunpack.c.h.b16 %v2636
    %v2698 = vunpack.c.l.b16 %v2637
    %v2699 = vunpack.c.h.b16 %v2637
    %v2700 = vunpack.c.l.b16 %v2638
    %v2701 = vunpack.c.h.b16 %v2638
    %v2702 = vpack.c.b16 %v2672, %v2670
    %v2703 = vpack.c.b16 %v2673, %v2671
    %v2704 = vpack.c.b16 %v2676, %v2674
    %v2705 = vpack.c.b16 %v2677, %v2675
    %v2706 = vpack.c.b16 %v2680, %v2678
    %v2707 = vpack.c.b16 %v2681, %v2679
    %v2708 = vpack.c.b16 %v2684, %v2682
    %v2709 = vpack.c.b16 %v2685, %v2683
    %v2710 = vpack.c.b16 %v2688, %v2686
    %v2711 = vpack.c.b16 %v2689, %v2687
    %v2712 = vpack.c.b16 %v2692, %v2690
    %v2713 = vpack.c.b16 %v2693, %v2691
    %v2714 = vpack.c.b16 %v2696, %v2694
    %v2715 = vpack.c.b16 %v2697, %v2695
    %v2716 = vpack.c.b16 %v2700, %v2698
    %v2717 = vpack.c.b16 %v2701, %v2699
    %2734 = vmatprep.subr.bf16.mxu0 %v2703
    %2735 = vmatpush1.bf16.msra.mxu0 %v2702
    %2736 = vmatprep.subr.bf16.mxu0 %v2705
    %2737 = vmatpush1.bf16.msra.mxu0 %v2704
    %2738 = vmatprep.subr.bf16.mxu0 %v2707
    %2739 = vmatpush1.bf16.msra.mxu0 %v2706
    %2740 = vmatprep.subr.bf16.mxu0 %v2709
    %2741 = vmatpush1.bf16.msra.mxu0 %v2708
    %2742 = vmatprep.subr.bf16.mxu0 %v2711
    %2743 = vmatpush1.bf16.msra.mxu0 %v2710
    %2744 = vmatprep.subr.bf16.mxu0 %v2713
    %2745 = vmatpush1.bf16.msra.mxu0 %v2712
    %2746 = vmatprep.subr.bf16.mxu0 %v2715
    %2747 = vmatpush1.bf16.msra.mxu0 %v2714
    %2748 = vmatprep.subr.bf16.mxu0 %v2717
    %2749 = vmatpush1.bf16.msra.mxu0 %v2716
    %2750 = vmatprep.subr.bf16.mxu0 0
    %2751 = vmatpush1.bf16.msra.mxu0 0
    %2752 = vmatprep.subr.bf16.mxu0 0
    %2753 = vmatpush1.bf16.msra.mxu0 0
    %2754 = vmatprep.subr.bf16.mxu0 0
    %2755 = vmatpush1.bf16.msra.mxu0 0
    %2756 = vmatprep.subr.bf16.mxu0 0
    %2757 = vmatpush1.bf16.msra.mxu0 0
    %2758 = vmatprep.subr.bf16.mxu0 0
    %2759 = vmatpush1.bf16.msra.mxu0 0
    %2760 = vmatprep.subr.bf16.mxu0 0
    %2761 = vmatpush1.bf16.msra.mxu0 0
    %2762 = vmatprep.subr.bf16.mxu0 0
    %2763 = vmatpush1.bf16.msra.mxu0 0
    %2764 = vmatprep.subr.bf16.mxu0 0
    %2765 = vmatpush1.bf16.msra.mxu0 0
    %2766 = vmatprep.mubr.bf16.mxu0 0
    %2767 = vmatmul.mubr.bf16.gmra.mrb[0].mxu0 %v2641
    %v2768 = vpop.f32.mrb[0].mxu0
    %v2769 = vadd.f32 %v2647, %v2768
    %v2770 = vpop.f32.mrb[0].mxu0
    %v2771 = vadd.f32 %v2651, %v2770
    %v2772 = vpop.f32.mrb[0].mxu0
    %v2773 = vadd.f32 %v2647, %v2772
    %v2774 = vpop.f32.mrb[0].mxu0
    %v2775 = vadd.f32 %v2651, %v2774
    %2776 = vmatprep.mubr.bf16.mxu0 0
    %2777 = vmatmul.mubr.bf16.gmra.mrb[0].mxu0 %v2642
    %v2778 = vpop.f32.mrb[0].mxu0
    %v2779 = vadd.f32 %v2647, %v2778
    %v2780 = vpop.f32.mrb[0].mxu0
    %v2781 = vadd.f32 %v2651, %v2780
    %v2782 = vpop.f32.mrb[0].mxu0
    %v2783 = vadd.f32 %v2647, %v2782
    %v2784 = vpop.f32.mrb[0].mxu0
    %v2785 = vadd.f32 %v2651, %v2784
    %2786 = vdwg.mxu0
    %v2787 = vmul.f32 %v2769, 0.5
    %v2788 = vmul.f32 %v2771, 0.5
    %v2789 = vmul.f32 %v2773, 0.5
    %v2790 = vmul.f32 %v2775, 0.5
    %v2791 = vmul.f32 %v2779, 0.5
    %v2792 = vmul.f32 %v2781, 0.5
    %v2793 = vmul.f32 %v2783, 0.5
    %v2794 = vmul.f32 %v2785, 0.5
    %v2795 = vmul.f32 %v2769, 0.70710677
    %v2796 = vmul.f32 %v2771, 0.70710677
    %v2797 = vmul.f32 %v2773, 0.70710677
    %v2798 = vmul.f32 %v2775, 0.70710677
    %v2799 = vmul.f32 %v2779, 0.70710677
    %v2800 = vmul.f32 %v2781, 0.70710677
    %v2801 = vmul.f32 %v2783, 0.70710677
    %v2802 = vmul.f32 %v2785, 0.70710677
    %v2803 = verf.f32.pop %v2795
    %v2804 = verf.f32.pop %v2796
    %v2805 = verf.f32.pop %v2797
    %v2806 = verf.f32.pop %v2798
    %v2807 = verf.f32.pop %v2799
    %v2808 = verf.f32.pop %v2800
    %v2809 = verf.f32.pop %v2801
    %v2810 = verf.f32.pop %v2802
    %v2811 = vadd.f32 %v2803, 1.0
    %v2812 = vadd.f32 %v2804, 1.0
    %v2813 = vadd.f32 %v2805, 1.0
    %v2814 = vadd.f32 %v2806, 1.0
    %v2815 = vadd.f32 %v2807, 1.0
    %v2816 = vadd.f32 %v2808, 1.0
    %v2817 = vadd.f32 %v2809, 1.0
    %v2818 = vadd.f32 %v2810, 1.0
    %v2819 = vmul.f32 %v2787, %v2811
    %v2820 = vmul.f32 %v2788, %v2812
    %v2821 = vmul.f32 %v2789, %v2813
    %v2822 = vmul.f32 %v2790, %v2814
    %v2823 = vmul.f32 %v2791, %v2815
    %v2824 = vmul.f32 %v2792, %v2816
    %v2825 = vmul.f32 %v2793, %v2817
    %v2826 = vmul.f32 %v2794, %v2818
    %s2827 = scalar_lea.vmem [#allocation2], 128
    %v2828 = vld [vmem:[%s2827] sm:$0xf]
    %v2829 = vld [vmem:[%s2827 + $0x4] sm:$0xf]
    %v2830 = vld [vmem:[%s2827 + $0x8] sm:$0xf]
    %v2831 = vld [vmem:[%s2827 + $0xc] sm:$0xf]
    %v2832 = vld [vmem:[%s2827 + $0x10] sm:$0xf]
    %v2833 = vld [vmem:[%s2827 + $0x14] sm:$0xf]
    %v2834 = vld [vmem:[%s2827 + $0x18] sm:$0xf]
    %v2835 = vld [vmem:[%s2827 + $0x1c] sm:$0xf]
    %v2836 = vld [vmem:[%s2827 + $0x20] sm:$0xf]
    %v2837 = vld [vmem:[%s2827 + $0x24] sm:$0xf]
    %v2838 = vld [vmem:[%s2827 + $0x28] sm:$0xf]
    %v2839 = vld [vmem:[%s2827 + $0x2c] sm:$0xf]
    %v2840 = vld [vmem:[%s2827 + $0x30] sm:$0xf]
    %v2841 = vld [vmem:[%s2827 + $0x34] sm:$0xf]
    %v2842 = vld [vmem:[%s2827 + $0x38] sm:$0xf]
    %v2843 = vld [vmem:[%s2827 + $0x3c] sm:$0xf]
    %v2844 = vld [vmem:[%s2827 + $0x40] sm:$0xf]
    %v2845 = vld [vmem:[%s2827 + $0x44] sm:$0xf]
    %v2846 = vld [vmem:[%s2827 + $0x48] sm:$0xf]
    %v2847 = vld [vmem:[%s2827 + $0x4c] sm:$0xf]
    %v2848 = vld [vmem:[%s2827 + $0x50] sm:$0xf]
    %v2849 = vld [vmem:[%s2827 + $0x54] sm:$0xf]
    %v2850 = vld [vmem:[%s2827 + $0x58] sm:$0xf]
    %v2851 = vld [vmem:[%s2827 + $0x5c] sm:$0xf]
    %v2852 = vld [vmem:[%s2827 + $0x60] sm:$0xf]
    %v2853 = vld [vmem:[%s2827 + $0x64] sm:$0xf]
    %v2854 = vld [vmem:[%s2827 + $0x68] sm:$0xf]
    %v2855 = vld [vmem:[%s2827 + $0x6c] sm:$0xf]
    %v2856 = vld [vmem:[%s2827 + $0x70] sm:$0xf]
    %v2857 = vld [vmem:[%s2827 + $0x74] sm:$0xf]
    %v2858 = vld [vmem:[%s2827 + $0x78] sm:$0xf]
    %v2859 = vld [vmem:[%s2827 + $0x7c] sm:$0xf]
    %s2860 = scalar_lea.vmem %s11, 1
    %v2861 = vld [vmem:[%s2860] sm:$0x1]
    %v2862 = vpack.c.bf16 %v2821, %v2819
    %v2863 = vpack.c.bf16 %v2822, %v2820
    %v2864 = vpack.c.bf16 %v2825, %v2823
    %v2865 = vpack.c.bf16 %v2826, %v2824
    %v2867 = vlaneseq
    %v2868 = vshrl.u32 %v2867, 7
    %v2869 = vsub.s32 0, %v2868
    %v2870 = vrot.slane %v2861, %v2869
    %v2904 = vunpack.c.l.b16 %v2828
    %v2905 = vunpack.c.l.b16 %v2829
    %v2906 = vunpack.c.l.b16 %v2830
    %v2907 = vunpack.c.l.b16 %v2831
    %v2908 = vunpack.c.l.b16 %v2832
    %v2909 = vunpack.c.l.b16 %v2833
    %v2910 = vunpack.c.l.b16 %v2834
    %v2911 = vunpack.c.l.b16 %v2835
    %v2912 = vunpack.c.l.b16 %v2836
    %v2913 = vunpack.c.l.b16 %v2837
    %v2914 = vunpack.c.l.b16 %v2838
    %v2915 = vunpack.c.l.b16 %v2839
    %v2916 = vunpack.c.l.b16 %v2840
    %v2917 = vunpack.c.l.b16 %v2841
    %v2918 = vunpack.c.l.b16 %v2842
    %v2919 = vunpack.c.l.b16 %v2843
    %v2920 = vunpack.c.l.b16 %v2844
    %v2921 = vunpack.c.l.b16 %v2845
    %v2922 = vunpack.c.l.b16 %v2846
    %v2923 = vunpack.c.l.b16 %v2847
    %v2924 = vunpack.c.l.b16 %v2848
    %v2925 = vunpack.c.l.b16 %v2849
    %v2926 = vunpack.c.l.b16 %v2850
    %v2927 = vunpack.c.l.b16 %v2851
    %v2928 = vunpack.c.l.b16 %v2852
    %v2929 = vunpack.c.l.b16 %v2853
    %v2930 = vunpack.c.l.b16 %v2854
    %v2931 = vunpack.c.l.b16 %v2855
    %v2932 = vunpack.c.l.b16 %v2856
    %v2933 = vunpack.c.l.b16 %v2857
    %v2934 = vunpack.c.l.b16 %v2858
    %v2935 = vunpack.c.l.b16 %v2859
    %v2936 = vpack.c.b16 %v2905, %v2904
    %v2937 = vpack.c.b16 %v2907, %v2906
    %v2938 = vpack.c.b16 %v2909, %v2908
    %v2939 = vpack.c.b16 %v2911, %v2910
    %v2940 = vpack.c.b16 %v2913, %v2912
    %v2941 = vpack.c.b16 %v2915, %v2914
    %v2942 = vpack.c.b16 %v2917, %v2916
    %v2943 = vpack.c.b16 %v2919, %v2918
    %v2944 = vpack.c.b16 %v2921, %v2920
    %v2945 = vpack.c.b16 %v2923, %v2922
    %v2946 = vpack.c.b16 %v2925, %v2924
    %v2947 = vpack.c.b16 %v2927, %v2926
    %v2948 = vpack.c.b16 %v2929, %v2928
    %v2949 = vpack.c.b16 %v2931, %v2930
    %v2950 = vpack.c.b16 %v2933, %v2932
    %v2951 = vpack.c.b16 %v2935, %v2934
    %2968 = vmatprep.subr.bf16.mxu0 0
    %2969 = vmatpush1.bf16.msra.mxu0 %v2936
    %2970 = vmatprep.subr.bf16.mxu0 0
    %2971 = vmatpush1.bf16.msra.mxu0 %v2937
    %2972 = vmatprep.subr.bf16.mxu0 0
    %2973 = vmatpush1.bf16.msra.mxu0 %v2938
    %2974 = vmatprep.subr.bf16.mxu0 0
    %2975 = vmatpush1.bf16.msra.mxu0 %v2939
    %2976 = vmatprep.subr.bf16.mxu0 0
    %2977 = vmatpush1.bf16.msra.mxu0 %v2940
    %2978 = vmatprep.subr.bf16.mxu0 0
    %2979 = vmatpush1.bf16.msra.mxu0 %v2941
    %2980 = vmatprep.subr.bf16.mxu0 0
    %2981 = vmatpush1.bf16.msra.mxu0 %v2942
    %2982 = vmatprep.subr.bf16.mxu0 0
    %2983 = vmatpush1.bf16.msra.mxu0 %v2943
    %2984 = vmatprep.subr.bf16.mxu0 0
    %2985 = vmatpush1.bf16.msra.mxu0 %v2944
    %2986 = vmatprep.subr.bf16.mxu0 0
    %2987 = vmatpush1.bf16.msra.mxu0 %v2945
    %2988 = vmatprep.subr.bf16.mxu0 0
    %2989 = vmatpush1.bf16.msra.mxu0 %v2946
    %2990 = vmatprep.subr.bf16.mxu0 0
    %2991 = vmatpush1.bf16.msra.mxu0 %v2947
    %2992 = vmatprep.subr.bf16.mxu0 0
    %2993 = vmatpush1.bf16.msra.mxu0 %v2948
    %2994 = vmatprep.subr.bf16.mxu0 0
    %2995 = vmatpush1.bf16.msra.mxu0 %v2949
    %2996 = vmatprep.subr.bf16.mxu0 0
    %2997 = vmatpush1.bf16.msra.mxu0 %v2950
    %2998 = vmatprep.subr.bf16.mxu0 0
    %2999 = vmatpush1.bf16.msra.mxu0 %v2951
    %3000 = vmatprep.mubr.bf16.mxu0 %v2863
    %3001 = vmatmul.mubr.bf16.gmra.mrb[0].mxu0 %v2862
    %v3002 = vpop.f32.mrb[0].mxu0
    %v3003 = vadd.f32 %v2870, %v3002
    %v3004 = vpop.f32.mrb[0].mxu0
    %v3005 = vpop.f32.mrb[0].mxu0
    %v3006 = vpop.f32.mrb[0].mxu0
    %3007 = vmatprep.mubr.bf16.mxu0 %v2865
    %3008 = vmatmul.mubr.bf16.gmra.mrb[0].mxu0 %v2864
    %v3009 = vpop.f32.mrb[0].mxu0
    %v3010 = vadd.f32 %v2870, %v3009
    %v3011 = vpop.f32.mrb[0].mxu0
    %v3012 = vpop.f32.mrb[0].mxu0
    %v3013 = vpop.f32.mrb[0].mxu0
    %3014 = vdwg.mxu0
    %v3015 = vadd.f32 %v3003, %v2618
    %v3016 = vadd.f32 %v3010, %v2620
    %s3017 = scalar_lea.vmem %s12, 1
    %v3018 = vld [vmem:[%s3017] sm:$0x1]
    %s3019 = scalar_lea.vmem %s13, 1
    %v3020 = vld [vmem:[%s3019] sm:$0x1]
    %3021 = vadd.xlane.f32.xlu0 %v3015
    %v3022 = vpop.xlane.xlu0 %3021
    %3023 = vadd.xlane.f32.xlu0 %v3016
    %v3024 = vpop.xlane.xlu0 %3023
    %v3025 = vmul.f32 %v3022, %v103
    %v3026 = vmul.f32 %v3024, %v103
    %v3027 = vsub.f32 %v3015, %v3025
    %v3028 = vsub.f32 %v3016, %v3026
    %v3029 = vmul.f32 %v3027, %v3027
    %v3030 = vmul.f32 %v3028, %v3028
    %3031 = vadd.xlane.f32.xlu0 %v3029
    %v3032 = vpop.xlane.xlu0 %3031
    %3033 = vadd.xlane.f32.xlu0 %v3030
    %v3034 = vpop.xlane.xlu0 %3033
    %v3035 = vmul.f32 %v3032, %v103
    %v3036 = vmul.f32 %v3034, %v103
    %v3037 = vadd.f32 %v3035, 1e-12
    %v3038 = vadd.f32 %v3036, 1e-12
    %v3039 = vrsqrt.pop %v3037
    %v3040 = vrsqrt.pop %v3038
    %v3041 = vmul.f32 %v3027, %v3039
    %v3042 = vmul.f32 %v3028, %v3040
    %v3044 = vlaneseq
    %v3045 = vshrl.u32 %v3044, 7
    %v3046 = vsub.s32 0, %v3045
    %v3047 = vrot.slane %v3018, %v3046
    %v3049 = vmul.f32 %v3041, %v3047
    %v3050 = vmul.f32 %v3042, %v3047
    %v3052 = vlaneseq
    %v3053 = vshrl.u32 %v3052, 7
    %v3054 = vsub.s32 0, %v3053
    %v3055 = vrot.slane %v3020, %v3054
    %v3057 = vadd.f32 %v3049, %v3055
    %v3058 = vadd.f32 %v3050, %v3055
    %v3060 = vrot.slane %v3058, 7
    %vm3062 = vcmask 1040384
    %v3063 = vsel %vm3062, %v3057, %v3060
    %v3064 = vld [vmem:[#allocation5] sm:$0xf]
    %v3065 = vld [vmem:[#allocation5 + $0x4] sm:$0xf]
    %v3066 = vld [vmem:[#allocation5 + $0x8] sm:$0xf]
    %v3067 = vld [vmem:[#allocation5 + $0xc] sm:$0xf]
    %v3068 = vld [vmem:[#allocation5 + $0x10] sm:$0xf]
    %v3069 = vld [vmem:[#allocation5 + $0x14] sm:$0xf]
    %v3070 = vld [vmem:[#allocation5 + $0x18] sm:$0xf]
    %v3071 = vld [vmem:[#allocation5 + $0x1c] sm:$0xf]
    %v3072 = vld [vmem:[#allocation5 + $0x20] sm:$0xf]
    %v3073 = vld [vmem:[#allocation5 + $0x24] sm:$0xf]
    %v3074 = vld [vmem:[#allocation5 + $0x28] sm:$0xf]
    %v3075 = vld [vmem:[#allocation5 + $0x2c] sm:$0xf]
    %v3076 = vld [vmem:[#allocation5 + $0x30] sm:$0xf]
    %v3077 = vld [vmem:[#allocation5 + $0x34] sm:$0xf]
    %v3078 = vld [vmem:[#allocation5 + $0x38] sm:$0xf]
    %v3079 = vld [vmem:[#allocation5 + $0x3c] sm:$0xf]
    %v3080 = vld [vmem:[%s17] sm:$0x1]
    %v3081 = vpack.c.bf16 %v3063, %v3063
    %v3083 = vlaneseq
    %v3084 = vshrl.u32 %v3083, 7
    %v3085 = vsub.s32 0, %v3084
    %v3086 = vrot.slane %v3080, %v3085
    %v3104 = vunpack.c.l.b16 %v3064
    %v3105 = vunpack.c.l.b16 %v3065
    %v3106 = vunpack.c.l.b16 %v3066
    %v3107 = vunpack.c.l.b16 %v3067
    %v3108 = vunpack.c.l.b16 %v3068
    %v3109 = vunpack.c.l.b16 %v3069
    %v3110 = vunpack.c.l.b16 %v3070
    %v3111 = vunpack.c.l.b16 %v3071
    %v3112 = vunpack.c.l.b16 %v3072
    %v3113 = vunpack.c.l.b16 %v3073
    %v3114 = vunpack.c.l.b16 %v3074
    %v3115 = vunpack.c.l.b16 %v3075
    %v3116 = vunpack.c.l.b16 %v3076
    %v3117 = vunpack.c.l.b16 %v3077
    %v3118 = vunpack.c.l.b16 %v3078
    %v3119 = vunpack.c.l.b16 %v3079
    %v3120 = vpack.c.b16 %v3105, %v3104
    %v3121 = vpack.c.b16 %v3107, %v3106
    %v3122 = vpack.c.b16 %v3109, %v3108
    %v3123 = vpack.c.b16 %v3111, %v3110
    %v3124 = vpack.c.b16 %v3113, %v3112
    %v3125 = vpack.c.b16 %v3115, %v3114
    %v3126 = vpack.c.b16 %v3117, %v3116
    %v3127 = vpack.c.b16 %v3119, %v3118
    %3136 = vmatprep.subr.bf16.mxu0 0
    %3137 = vmatpush1.bf16.msra.mxu0 %v3120
    %3138 = vmatprep.subr.bf16.mxu0 0
    %3139 = vmatpush1.bf16.msra.mxu0 %v3121
    %3140 = vmatprep.subr.bf16.mxu0 0
    %3141 = vmatpush1.bf16.msra.mxu0 %v3122
    %3142 = vmatprep.subr.bf16.mxu0 0
    %3143 = vmatpush1.bf16.msra.mxu0 %v3123
    %3144 = vmatprep.subr.bf16.mxu0 0
    %3145 = vmatpush1.bf16.msra.mxu0 %v3124
    %3146 = vmatprep.subr.bf16.mxu0 0
    %3147 = vmatpush1.bf16.msra.mxu0 %v3125
    %3148 = vmatprep.subr.bf16.mxu0 0
    %3149 = vmatpush1.bf16.msra.mxu0 %v3126
    %3150 = vmatprep.subr.bf16.mxu0 0
    %3151 = vmatpush1.bf16.msra.mxu0 %v3127
    %3152 = vmatprep.subr.bf16.mxu0 0
    %3153 = vmatpush1.bf16.msra.mxu0 0
    %3154 = vmatprep.subr.bf16.mxu0 0
    %3155 = vmatpush1.bf16.msra.mxu0 0
    %3156 = vmatprep.subr.bf16.mxu0 0
    %3157 = vmatpush1.bf16.msra.mxu0 0
    %3158 = vmatprep.subr.bf16.mxu0 0
    %3159 = vmatpush1.bf16.msra.mxu0 0
    %3160 = vmatprep.subr.bf16.mxu0 0
    %3161 = vmatpush1.bf16.msra.mxu0 0
    %3162 = vmatprep.subr.bf16.mxu0 0
    %3163 = vmatpush1.bf16.msra.mxu0 0
    %3164 = vmatprep.subr.bf16.mxu0 0
    %3165 = vmatpush1.bf16.msra.mxu0 0
    %3166 = vmatprep.subr.bf16.mxu0 0
    %3167 = vmatpush1.bf16.msra.mxu0 0
    %3168 = vmatprep.mubr.bf16.mxu0 0
    %3169 = vmatmul.mubr.bf16.gmra.mrb[0].mxu0 %v3081
    %v3170 = vpop.f32.mrb[0].mxu0
    %v3171 = vadd.f32 %v3086, %v3170
    %v3172 = vpop.f32.mrb[0].mxu0
    %v3173 = vpop.f32.mrb[0].mxu0
    %v3174 = vpop.f32.mrb[0].mxu0
    %3175 = vdwg.mxu0
    %3176 = vst [vmem:[#allocation7] sm:$0x3] %v3171
    // Predicated region
    $region82: #{forward.1} parent=1 // pred_check
      _
    $region83: #{forward.1} parent=1 // pred_check_branch
      %3178 = sbr.rel (0) target = $region85
    $region84: #{forward.1} parent=1 // pred_region
      %s3180 = ssub.s32 32, 32
      %3181 = vsyncadd [#allocation4], %s3180
      %s3183 = sshll.u32 [#allocation7], 4
      %s3184 = int_to_ptr.vmem [resolvable:$true] %s3183
      %3186 = dma.vmem_to_hbm [thread:$0]  %s3184, 32, %s18, [#allocation4]
    $region85: #{forward.1} parent=1 // pred_fallthru
      _
    // Predicated region
    $region86: #{forward.1} parent=1 // pred_check
      _
    $region87: #{forward.1} parent=1 // pred_check_branch
      %3188 = sbr.rel (0) target = $region89
    $region88: #{forward.1} parent=1 // pred_region
      %3189 = dma.done [#allocation4], 32
    $region89: #{forward.1} parent=1 // pred_fallthru
      _
    %3190 = vsyncpa [#allocation3], 1
    %3191 = vsyncpa [#allocation6], 1
    %3192 = vsyncpa [#allocation4], 1

</llo_original>
